<compile_context>
chip_gen: v7x
topology: tpu7x:2x2x1
jax: 0.10.0
libtpu: 0.0.40
codegen_flags: <defaults>
</compile_context>

<pallas_src>
import functools

import jax
import jax.numpy as jnp
from jax.experimental import pallas as pl
from jax.experimental.pallas import tpu as pltpu


def _att_layer_kernel(x_ref, wp_ref, bp_ref, wv_ref, out_ref, alpha_ref,
                      *, total_rows, tail_mask, lane_chunk):
    # x_ref    : (rows, D)  batch-major rows [b0s0, b0s1, b0s2, b1s0, ...]
    # wp_ref   : (D, O)     P_linear weight, (in, out) layout
    # bp_ref   : (1, O)     P_linear bias
    # wv_ref   : (O, 3)     V_linear weight, (in, out) layout
    # out_ref  : (rows, D)
    # alpha_ref: (rows, 3)  float32
    rows, d = x_ref.shape

    # --- per-row metadata, generated in-kernel (no HBM aux stream) -----------
    ridx = jax.lax.broadcasted_iota(jnp.int32, (rows, 1), 0)
    r_f = ridx.astype(jnp.float32)

    def split3(v_f):
        # (group id, seq position) of a row index; float math avoids relying on
        # vector integer div/mod lowering and is exact for indices < 2**22.
        g_f = jnp.floor(v_f * (1.0 / 3.0))
        p = (v_f - 3.0 * g_f).astype(jnp.int32)
        return g_f.astype(jnp.int32), p

    gid, pos = split3(r_f)

    if tail_mask:
        base = pl.program_id(0) * rows
        in_range = (ridx + base) < total_rows            # (rows, 1) bool
    else:
        in_range = None

    # --- P projection + tanh: one sublane-dense MXU matmul -------------------
    x = x_ref[...]
    if in_range is not None:
        # Zero the (undefined) pad rows of the ragged last block before any math.
        x = jnp.where(in_range, x, jnp.zeros((), x.dtype))
    p = jnp.dot(x, wp_ref[...], preferred_element_type=jnp.float32)
    p = p + bp_ref[...].astype(jnp.float32)
    feature = jnp.tanh(p)                                # f32, EUP
    # TODO(synk): if the EUP ever binds at very large O, run tanh in bf16 on v6e/v7x.

    # --- attention logits + softmax over the 3 keys (f32) ---------------------
    logits = jnp.dot(feature, wv_ref[...].astype(jnp.float32),
                     preferred_element_type=jnp.float32)  # (rows, 3)
    m = jnp.max(logits, axis=-1, keepdims=True)
    e = jnp.exp(logits - m)
    denom = jnp.sum(e, axis=-1, keepdims=True)
    inv = pl.reciprocal(denom, approx=True)               # EUP slot
    inv = inv * (2.0 - denom * inv)                       # one Newton step -> ~f32
    alpha = e * inv                                       # (rows, 3), kept in f32
    alpha_ref[...] = alpha

    # --- out[r] = sum_k alpha[r, k] * x[3*gid(r) + k] --------------------------
    # Broadcast FMAs against sublane-rolled copies of x.  Metadata is rolled by
    # the same amount, so `src` is the row each roll brought to row r regardless
    # of the roll direction convention; the shift set {1, 2, rows-2, rows-1}
    # covers offsets {+-1, +-2} exactly once (rows >= 6), and the group-id gate
    # kills the cyclic wrap-around and any cross-group contribution.
    a0, a1, a2 = alpha[:, 0:1], alpha[:, 1:2], alpha[:, 2:3]

    def pick(p_idx):                                     # alpha[r, p_idx[r]]
        return jnp.where(p_idx == 0, a0, jnp.where(p_idx == 1, a1, a2))

    shifts = (1, 2, rows - 1, rows - 2)
    coeffs = []
    for s in shifts:
        src_f = pltpu.roll(r_f, shift=s, axis=0)          # (rows, 1) source row idx
        gid_s, pos_s = split3(src_f)
        coeffs.append(jnp.where(gid_s == gid, pick(pos_s), 0.0))   # (rows, 1)
    c_self = pick(pos)

    # Lane-chunked combine: each chunk only keeps {x chunk, rolled copy, acc}
    # live and stores straight to out_ref, bounding vreg pressure / spills.
    for start in range(0, d, lane_chunk):
        width = min(lane_chunk, d - start)
        xc = x_ref[:, start:start + width].astype(jnp.float32)
        if in_range is not None:
            xc = jnp.where(in_range, xc, 0.0)
        acc = c_self * xc
        for s, c in zip(shifts, coeffs):
            acc = acc + c * pltpu.roll(xc, shift=s, axis=0)
        out_ref[:, start:start + width] = acc.astype(out_ref.dtype)


def prepare_params(wp, bp, wv):
    """One-time layout prep (hoisted out of the per-call path).

    PyTorch stores Linear weights as (out_features, in_features); the kernel
    wants (in, out) so it can do plain row-major MXU matmuls.  Weights may be
    cast to bf16 here to halve DMA/VMEM; matmuls accumulate in f32 regardless.
    """
    return wp.T, bp.reshape(1, -1), wv.T


def _select_tb(B, D, itemsize):
    """Batches per grid step.

    Small B: one full-extent block.  Otherwise a multiple-of-8 tile sized so the
    double-buffered x/out streams fit a conservative VMEM budget, with >= 2 grid
    steps so v7x's two TensorCores both get work (harmless on v5e/v6e).
    """
    budget = 24 * 1024 * 1024                    # x + out, double-buffered
    per_batch = 2 * 2 * 3 * D * itemsize
    fit = max(8, min(1024, (budget // per_batch) // 8 * 8))
    if B <= 16:
        return B                                 # single block == full array dims
    if B <= fit:
        return min(fit, ((-(-B // 2) + 7) // 8) * 8)   # ~2 tiles, multiple of 8
    return fit


@jax.jit
def att_layer_pallas(att_input, wp_t, bp_2d, wv_t):
    """att_input: (B, 3, D); wp_t: (D, O); bp_2d: (1, O); wv_t: (O, 3)."""
    B, S, D = att_input.shape
    assert S == 3, "torch.matmul(alpha, att_input) requires seq dim == 3"
    assert B >= 2, "combine uses row offsets {+-1,+-2}; needs rows >= 6"
    O = wp_t.shape[1]
    assert wp_t.shape == (D, O)
    assert bp_2d.shape == (1, O)
    assert wv_t.shape == (O, 3), "V_linear consumes feature -> module implies O == D"

    x2 = att_input.reshape(B * 3, D)             # free view: no pad, no copy
    total_rows = B * 3

    tb = _select_tb(B, D, att_input.dtype.itemsize)
    rows = 3 * tb
    assert rows >= 6
    grid = (pl.cdiv(B, tb),)
    tail_mask = (B % tb) != 0                    # last block is ragged

    kernel = functools.partial(
        _att_layer_kernel,
        total_rows=total_rows,
        tail_mask=tail_mask,
        lane_chunk=min(128, D),
    )

    # Constant-index weight blocks: single-buffer them when they are big enough
    # for double-buffering to hurt (they are DMA'd once and never change).
    # TODO(synk): for very large D*O (e.g. 4096^2) also tile the O axis of Wp.
    w_bytes = (D * O + O + O * 3) * wp_t.dtype.itemsize
    const_kwargs = {}
    if w_bytes > (2 << 20):
        const_kwargs = dict(pipeline_mode=pl.Buffered(buffer_count=1))
    w_buffers = 1 if const_kwargs else 2

    # VMEM budget: x/out/alpha tiles double-buffered + weight buffers + headroom,
    # capped below v7x's 64 MiB physical VMEM.
    x_item = att_input.dtype.itemsize
    need = 2 * (2 * rows * D * x_item + rows * 3 * 4) + w_buffers * w_bytes
    vmem_limit = max(16 * 1024 * 1024,
                     min(48 * 1024 * 1024, int(need * 1.25) + (2 << 20)))

    grid_spec = pltpu.PrefetchScalarGridSpec(
        num_scalar_prefetch=0,
        grid=grid,
        in_specs=[
            pl.BlockSpec((rows, D), lambda b: (b, 0)),                 # x tile
            pl.BlockSpec((D, O), lambda b: (0, 0), **const_kwargs),    # Wp
            pl.BlockSpec((1, O), lambda b: (0, 0), **const_kwargs),    # bias
            pl.BlockSpec((O, 3), lambda b: (0, 0), **const_kwargs),    # Wv
        ],
        out_specs=[
            pl.BlockSpec((rows, D), lambda b: (b, 0)),
            # alpha stays (rows, 3): only ~2% of output bytes; do NOT pad lanes.
            pl.BlockSpec((rows, 3), lambda b: (b, 0)),
        ],
    )

    out2, alpha2 = pl.pallas_call(
        kernel,
        out_shape=(jax.ShapeDtypeStruct((total_rows, D), att_input.dtype),
                   jax.ShapeDtypeStruct((total_rows, 3), jnp.float32)),
        grid_spec=grid_spec,
        compiler_params=pltpu.CompilerParams(
            dimension_semantics=("parallel",),   # shard batch tiles over TCs
            vmem_limit_bytes=vmem_limit,
        ),
    )(x2, wp_t, bp_2d, wv_t)

    return out2.reshape(B, 3, D), alpha2.reshape(B, 3, 3)


def att_layer_reference(att_input, wp, bp, wv):
    """Pure-JAX reference mirroring the PyTorch forward."""
    p = jnp.einsum("bsd,od->bso", att_input, wp) + bp
    feature = jnp.tanh(p)
    logits = jnp.einsum("bso,vo->bsv", feature, wv)
    alpha = jax.nn.softmax(logits, axis=2)
    out = jnp.einsum("bsv,bvd->bsd", alpha, att_input)
    return out, alpha


if __name__ == "__main__":
    key = jax.random.PRNGKey(0)
    D = 128                        # lane-dense feature dim; module's V_linear implies O == D
    O = D
    k_x1, k_x2, k_wp, k_bp, k_wv = jax.random.split(key, 5)

    bound = float(D) ** -0.5       # PyTorch-like uniform fan-in init
    wp = jax.random.uniform(k_wp, (O, D), jnp.float32, -bound, bound)
    bp = jax.random.uniform(k_bp, (O,), jnp.float32, -bound, bound)
    wv = jax.random.uniform(k_wv, (3, O), jnp.float32, -bound, bound)
    wp_t, bp_2d, wv_t = prepare_params(wp, bp, wv)   # one-time layout prep

    # B=100: two tiles with a ragged tail (no wrapper pad).  B=64: two exact tiles.
    for B, kx in ((100, k_x1), (64, k_x2)):
        att_input = jax.random.normal(kx, (B, 3, D), dtype=jnp.float32)

        out, alpha = att_layer_pallas(att_input, wp_t, bp_2d, wv_t)
        jax.block_until_ready((out, alpha))

        out_ref, alpha_ref = att_layer_reference(att_input, wp, bp, wv)
        assert jnp.allclose(out, out_ref, atol=1e-3, rtol=1e-3), (
            B, float(jnp.max(jnp.abs(out - out_ref))))
        assert jnp.allclose(alpha, alpha_ref, atol=1e-3, rtol=1e-3), (
            B, float(jnp.max(jnp.abs(alpha - alpha_ref))))

    print("KERNEL_OK")
</pallas_src>

<mosaic_0001>
module attributes {stable_mosaic.version = 11 : i64} {
  func.func @_att_layer_kernel(%arg0: i32, %arg1: memref<168x128xf32, #tpu.memory_space<vmem>>, %arg2: memref<128x128xf32, #tpu.memory_space<vmem>>, %arg3: memref<1x128xf32, #tpu.memory_space<vmem>>, %arg4: memref<128x3xf32, #tpu.memory_space<vmem>>, %arg5: memref<168x128xf32, #tpu.memory_space<vmem>>, %arg6: memref<168x3xf32, #tpu.memory_space<vmem>>) attributes {dimension_semantics = [#tpu.dimension_semantics<parallel>], iteration_bounds = array<i64: 2>, scalar_prefetch = 0 : i64, scratch_operands = 0 : i64, tpu.core_type = #tpu.core_type<tc>, window_params = [{transform_indices = @transform_0, window_bounds = array<i64: 168, 128>}, {pipeline_mode = #tpu.pipeline_mode<synchronous>, transform_indices = @transform_1, window_bounds = array<i64: 128, 128>}, {pipeline_mode = #tpu.pipeline_mode<synchronous>, transform_indices = @transform_2, window_bounds = array<i64: 1, 128>}, {pipeline_mode = #tpu.pipeline_mode<synchronous>, transform_indices = @transform_3, window_bounds = array<i64: 128, 3>}, {transform_indices = @transform_4, window_bounds = array<i64: 168, 128>}, {transform_indices = @transform_5, window_bounds = array<i64: 168, 3>}]} {
    %0 = tpu.iota {dimensions = array<i32: 0>} : vector<168x1xi32>
    %1 = arith.sitofp %0 : vector<168x1xi32> to vector<168x1xf32>
    %cst = arith.constant 0.333333343 : f32
    %2 = vector.broadcast %cst : f32 to vector<168x1xf32>
    %3 = arith.mulf %1, %2 : vector<168x1xf32>
    %4 = math.floor %3 : vector<168x1xf32>
    %cst_0 = arith.constant 3.000000e+00 : f32
    %5 = vector.broadcast %cst_0 : f32 to vector<168x1xf32>
    %6 = arith.mulf %5, %4 : vector<168x1xf32>
    %7 = arith.subf %1, %6 : vector<168x1xf32>
    %8 = arith.fptosi %7 : vector<168x1xf32> to vector<168x1xi32>
    %9 = arith.fptosi %4 : vector<168x1xf32> to vector<168x1xi32>
    %c168_i32 = arith.constant 168 : i32
    %10 = arith.muli %arg0, %c168_i32 : i32
    %11 = vector.broadcast %10 : i32 to vector<168x1xi32>
    %12 = arith.addi %0, %11 : vector<168x1xi32>
    %c300_i32 = arith.constant 300 : i32
    %13 = vector.broadcast %c300_i32 : i32 to vector<168x1xi32>
    %14 = arith.cmpi slt, %12, %13 : vector<168x1xi32>
    %c0 = arith.constant 0 : index
    %c0_1 = arith.constant 0 : index
    %15 = vector.load %arg1[%c0, %c0_1] : memref<168x128xf32, #tpu.memory_space<vmem>>, vector<168x128xf32>
    %cst_2 = arith.constant 0.000000e+00 : f32
    %16 = vector.shape_cast %14 : vector<168x1xi1> to vector<168x1xi1>
    %17 = vector.broadcast %16 : vector<168x1xi1> to vector<168x128xi1>
    %18 = vector.broadcast %cst_2 : f32 to vector<168x128xf32>
    %19 = arith.select %17, %15, %18 : vector<168x128xi1>, vector<168x128xf32>
    %c0_3 = arith.constant 0 : index
    %c0_4 = arith.constant 0 : index
    %20 = vector.load %arg2[%c0_3, %c0_4] : memref<128x128xf32, #tpu.memory_space<vmem>>, vector<128x128xf32>
    %cst_5 = arith.constant dense<0.000000e+00> : vector<168x128xf32>
    %21 = tpu.matmul %19, %20, %cst_5 {dimension_numbers = #tpu.dot_dimension_numbers<[1], [0], [0], [1], [0, 0, 1, 1], [], []>} : vector<168x128xf32>, vector<128x128xf32>, vector<168x128xf32> -> vector<168x128xf32>
    %c0_6 = arith.constant 0 : index
    %c0_7 = arith.constant 0 : index
    %22 = vector.load %arg3[%c0_6, %c0_7] : memref<1x128xf32, #tpu.memory_space<vmem>>, vector<1x128xf32>
    %23 = vector.broadcast %22 : vector<1x128xf32> to vector<168x128xf32>
    %24 = arith.addf %21, %23 : vector<168x128xf32>
    %25 = math.tanh %24 : vector<168x128xf32>
    %c0_8 = arith.constant 0 : index
    %c0_9 = arith.constant 0 : index
    %26 = vector.load %arg4[%c0_8, %c0_9] : memref<128x3xf32, #tpu.memory_space<vmem>>, vector<128x3xf32>
    %cst_10 = arith.constant dense<0.000000e+00> : vector<168x3xf32>
    %27 = tpu.matmul %25, %26, %cst_10 {dimension_numbers = #tpu.dot_dimension_numbers<[1], [0], [0], [1], [0, 0, 1, 1], [], []>} : vector<168x128xf32>, vector<128x3xf32>, vector<168x3xf32> -> vector<168x3xf32>
    %cst_11 = arith.constant dense<0xFF800000> : vector<168xf32>
    %28 = vector.multi_reduction <maximumf>, %27, %cst_11 [1] : vector<168x3xf32> to vector<168xf32>
    %29 = vector.shape_cast %28 : vector<168xf32> to vector<168x1xf32>
    %30 = vector.broadcast %29 : vector<168x1xf32> to vector<168x3xf32>
    %31 = arith.subf %27, %30 : vector<168x3xf32>
    %32 = math.exp %31 : vector<168x3xf32>
    %cst_12 = arith.constant dense<0.000000e+00> : vector<168xf32>
    %33 = vector.multi_reduction <add>, %32, %cst_12 [1] : vector<168x3xf32> to vector<168xf32>
    %34 = vector.shape_cast %33 : vector<168xf32> to vector<168x1xf32>
    %35 = tpu.reciprocal %34 {approx = true} : vector<168x1xf32> -> vector<168x1xf32>
    %36 = arith.mulf %34, %35 : vector<168x1xf32>
    %cst_13 = arith.constant 2.000000e+00 : f32
    %37 = vector.broadcast %cst_13 : f32 to vector<168x1xf32>
    %38 = arith.subf %37, %36 : vector<168x1xf32>
    %39 = arith.mulf %35, %38 : vector<168x1xf32>
    %40 = vector.broadcast %39 : vector<168x1xf32> to vector<168x3xf32>
    %41 = arith.mulf %32, %40 : vector<168x3xf32>
    %c0_14 = arith.constant 0 : index
    %c0_15 = arith.constant 0 : index
    %42 = vector.load %arg6[%c0_14, %c0_15] : memref<168x3xf32, #tpu.memory_space<vmem>>, vector<168x3xf32>
    tpu.vector_store %arg6[%c0_14, %c0_15], %41 {strides = array<i32>} : memref<168x3xf32, #tpu.memory_space<vmem>>, vector<168x3xf32>,
    %43 = vector.extract_strided_slice %41 {offsets = [0, 0], sizes = [168, 1], strides = [1, 1]} : vector<168x3xf32> to vector<168x1xf32>
    %44 = vector.extract_strided_slice %41 {offsets = [0, 1], sizes = [168, 1], strides = [1, 1]} : vector<168x3xf32> to vector<168x1xf32>
    %45 = vector.extract_strided_slice %41 {offsets = [0, 2], sizes = [168, 1], strides = [1, 1]} : vector<168x3xf32> to vector<168x1xf32>
    %c1_i32 = arith.constant 1 : i32
    %46 = tpu.dynamic_rotate %1 by %c1_i32 dim 0 : vector<168x1xf32>, i32 -> vector<168x1xf32>
    %cst_16 = arith.constant 0.333333343 : f32
    %47 = vector.broadcast %cst_16 : f32 to vector<168x1xf32>
    %48 = arith.mulf %46, %47 : vector<168x1xf32>
    %49 = math.floor %48 : vector<168x1xf32>
    %cst_17 = arith.constant 3.000000e+00 : f32
    %50 = vector.broadcast %cst_17 : f32 to vector<168x1xf32>
    %51 = arith.mulf %50, %49 : vector<168x1xf32>
    %52 = arith.subf %46, %51 : vector<168x1xf32>
    %53 = arith.fptosi %52 : vector<168x1xf32> to vector<168x1xi32>
    %54 = arith.fptosi %49 : vector<168x1xf32> to vector<168x1xi32>
    %55 = arith.cmpi eq, %54, %9 : vector<168x1xi32>
    %c0_i32 = arith.constant 0 : i32
    %56 = vector.broadcast %c0_i32 : i32 to vector<168x1xi32>
    %57 = arith.cmpi eq, %53, %56 : vector<168x1xi32>
    %c1_i32_18 = arith.constant 1 : i32
    %58 = vector.broadcast %c1_i32_18 : i32 to vector<168x1xi32>
    %59 = arith.cmpi eq, %53, %58 : vector<168x1xi32>
    %60 = arith.select %59, %44, %45 : vector<168x1xi1>, vector<168x1xf32>
    %61 = arith.select %57, %43, %60 : vector<168x1xi1>, vector<168x1xf32>
    %cst_19 = arith.constant 0.000000e+00 : f32
    %62 = vector.broadcast %cst_19 : f32 to vector<168x1xf32>
    %63 = arith.select %55, %61, %62 : vector<168x1xi1>, vector<168x1xf32>
    %c2_i32 = arith.constant 2 : i32
    %64 = tpu.dynamic_rotate %1 by %c2_i32 dim 0 : vector<168x1xf32>, i32 -> vector<168x1xf32>
    %cst_20 = arith.constant 0.333333343 : f32
    %65 = vector.broadcast %cst_20 : f32 to vector<168x1xf32>
    %66 = arith.mulf %64, %65 : vector<168x1xf32>
    %67 = math.floor %66 : vector<168x1xf32>
    %cst_21 = arith.constant 3.000000e+00 : f32
    %68 = vector.broadcast %cst_21 : f32 to vector<168x1xf32>
    %69 = arith.mulf %68, %67 : vector<168x1xf32>
    %70 = arith.subf %64, %69 : vector<168x1xf32>
    %71 = arith.fptosi %70 : vector<168x1xf32> to vector<168x1xi32>
    %72 = arith.fptosi %67 : vector<168x1xf32> to vector<168x1xi32>
    %73 = arith.cmpi eq, %72, %9 : vector<168x1xi32>
    %c0_i32_22 = arith.constant 0 : i32
    %74 = vector.broadcast %c0_i32_22 : i32 to vector<168x1xi32>
    %75 = arith.cmpi eq, %71, %74 : vector<168x1xi32>
    %c1_i32_23 = arith.constant 1 : i32
    %76 = vector.broadcast %c1_i32_23 : i32 to vector<168x1xi32>
    %77 = arith.cmpi eq, %71, %76 : vector<168x1xi32>
    %78 = arith.select %77, %44, %45 : vector<168x1xi1>, vector<168x1xf32>
    %79 = arith.select %75, %43, %78 : vector<168x1xi1>, vector<168x1xf32>
    %cst_24 = arith.constant 0.000000e+00 : f32
    %80 = vector.broadcast %cst_24 : f32 to vector<168x1xf32>
    %81 = arith.select %73, %79, %80 : vector<168x1xi1>, vector<168x1xf32>
    %c167_i32 = arith.constant 167 : i32
    %82 = tpu.dynamic_rotate %1 by %c167_i32 dim 0 : vector<168x1xf32>, i32 -> vector<168x1xf32>
    %cst_25 = arith.constant 0.333333343 : f32
    %83 = vector.broadcast %cst_25 : f32 to vector<168x1xf32>
    %84 = arith.mulf %82, %83 : vector<168x1xf32>
    %85 = math.floor %84 : vector<168x1xf32>
    %cst_26 = arith.constant 3.000000e+00 : f32
    %86 = vector.broadcast %cst_26 : f32 to vector<168x1xf32>
    %87 = arith.mulf %86, %85 : vector<168x1xf32>
    %88 = arith.subf %82, %87 : vector<168x1xf32>
    %89 = arith.fptosi %88 : vector<168x1xf32> to vector<168x1xi32>
    %90 = arith.fptosi %85 : vector<168x1xf32> to vector<168x1xi32>
    %91 = arith.cmpi eq, %90, %9 : vector<168x1xi32>
    %c0_i32_27 = arith.constant 0 : i32
    %92 = vector.broadcast %c0_i32_27 : i32 to vector<168x1xi32>
    %93 = arith.cmpi eq, %89, %92 : vector<168x1xi32>
    %c1_i32_28 = arith.constant 1 : i32
    %94 = vector.broadcast %c1_i32_28 : i32 to vector<168x1xi32>
    %95 = arith.cmpi eq, %89, %94 : vector<168x1xi32>
    %96 = arith.select %95, %44, %45 : vector<168x1xi1>, vector<168x1xf32>
    %97 = arith.select %93, %43, %96 : vector<168x1xi1>, vector<168x1xf32>
    %cst_29 = arith.constant 0.000000e+00 : f32
    %98 = vector.broadcast %cst_29 : f32 to vector<168x1xf32>
    %99 = arith.select %91, %97, %98 : vector<168x1xi1>, vector<168x1xf32>
    %c166_i32 = arith.constant 166 : i32
    %100 = tpu.dynamic_rotate %1 by %c166_i32 dim 0 : vector<168x1xf32>, i32 -> vector<168x1xf32>
    %cst_30 = arith.constant 0.333333343 : f32
    %101 = vector.broadcast %cst_30 : f32 to vector<168x1xf32>
    %102 = arith.mulf %100, %101 : vector<168x1xf32>
    %103 = math.floor %102 : vector<168x1xf32>
    %cst_31 = arith.constant 3.000000e+00 : f32
    %104 = vector.broadcast %cst_31 : f32 to vector<168x1xf32>
    %105 = arith.mulf %104, %103 : vector<168x1xf32>
    %106 = arith.subf %100, %105 : vector<168x1xf32>
    %107 = arith.fptosi %106 : vector<168x1xf32> to vector<168x1xi32>
    %108 = arith.fptosi %103 : vector<168x1xf32> to vector<168x1xi32>
    %109 = arith.cmpi eq, %108, %9 : vector<168x1xi32>
    %c0_i32_32 = arith.constant 0 : i32
    %110 = vector.broadcast %c0_i32_32 : i32 to vector<168x1xi32>
    %111 = arith.cmpi eq, %107, %110 : vector<168x1xi32>
    %c1_i32_33 = arith.constant 1 : i32
    %112 = vector.broadcast %c1_i32_33 : i32 to vector<168x1xi32>
    %113 = arith.cmpi eq, %107, %112 : vector<168x1xi32>
    %114 = arith.select %113, %44, %45 : vector<168x1xi1>, vector<168x1xf32>
    %115 = arith.select %111, %43, %114 : vector<168x1xi1>, vector<168x1xf32>
    %cst_34 = arith.constant 0.000000e+00 : f32
    %116 = vector.broadcast %cst_34 : f32 to vector<168x1xf32>
    %117 = arith.select %109, %115, %116 : vector<168x1xi1>, vector<168x1xf32>
    %c0_i32_35 = arith.constant 0 : i32
    %118 = vector.broadcast %c0_i32_35 : i32 to vector<168x1xi32>
    %119 = arith.cmpi eq, %8, %118 : vector<168x1xi32>
    %c1_i32_36 = arith.constant 1 : i32
    %120 = vector.broadcast %c1_i32_36 : i32 to vector<168x1xi32>
    %121 = arith.cmpi eq, %8, %120 : vector<168x1xi32>
    %122 = arith.select %121, %44, %45 : vector<168x1xi1>, vector<168x1xf32>
    %123 = arith.select %119, %43, %122 : vector<168x1xi1>, vector<168x1xf32>
    %c0_37 = arith.constant 0 : index
    %c0_38 = arith.constant 0 : index
    %124 = vector.load %arg1[%c0_37, %c0_38] : memref<168x128xf32, #tpu.memory_space<vmem>>, vector<168x128xf32>
    %cst_39 = arith.constant 0.000000e+00 : f32
    %125 = vector.shape_cast %14 : vector<168x1xi1> to vector<168x1xi1>
    %126 = vector.broadcast %125 : vector<168x1xi1> to vector<168x128xi1>
    %127 = vector.broadcast %cst_39 : f32 to vector<168x128xf32>
    %128 = arith.select %126, %124, %127 : vector<168x128xi1>, vector<168x128xf32>
    %129 = vector.broadcast %123 : vector<168x1xf32> to vector<168x128xf32>
    %130 = arith.mulf %129, %128 : vector<168x128xf32>
    %c1_i32_40 = arith.constant 1 : i32
    %131 = tpu.dynamic_rotate %128 by %c1_i32_40 dim 0 : vector<168x128xf32>, i32 -> vector<168x128xf32>
    %132 = vector.broadcast %63 : vector<168x1xf32> to vector<168x128xf32>
    %133 = arith.mulf %132, %131 : vector<168x128xf32>
    %134 = arith.addf %130, %133 : vector<168x128xf32>
    %c2_i32_41 = arith.constant 2 : i32
    %135 = tpu.dynamic_rotate %128 by %c2_i32_41 dim 0 : vector<168x128xf32>, i32 -> vector<168x128xf32>
    %136 = vector.broadcast %81 : vector<168x1xf32> to vector<168x128xf32>
    %137 = arith.mulf %136, %135 : vector<168x128xf32>
    %138 = arith.addf %134, %137 : vector<168x128xf32>
    %c167_i32_42 = arith.constant 167 : i32
    %139 = tpu.dynamic_rotate %128 by %c167_i32_42 dim 0 : vector<168x128xf32>, i32 -> vector<168x128xf32>
    %140 = vector.broadcast %99 : vector<168x1xf32> to vector<168x128xf32>
    %141 = arith.mulf %140, %139 : vector<168x128xf32>
    %142 = arith.addf %138, %141 : vector<168x128xf32>
    %c166_i32_43 = arith.constant 166 : i32
    %143 = tpu.dynamic_rotate %128 by %c166_i32_43 dim 0 : vector<168x128xf32>, i32 -> vector<168x128xf32>
    %144 = vector.broadcast %117 : vector<168x1xf32> to vector<168x128xf32>
    %145 = arith.mulf %144, %143 : vector<168x128xf32>
    %146 = arith.addf %142, %145 : vector<168x128xf32>
    %c0_44 = arith.constant 0 : index
    %c0_45 = arith.constant 0 : index
    %147 = vector.load %arg5[%c0_44, %c0_45] : memref<168x128xf32, #tpu.memory_space<vmem>>, vector<168x128xf32>
    tpu.vector_store %arg5[%c0_44, %c0_45], %146 {strides = array<i32>} : memref<168x128xf32, #tpu.memory_space<vmem>>, vector<168x128xf32>,
    return
  }
  func.func @transform_0(%arg0: i32) -> (i32, i32) {
    %c0_i32 = arith.constant 0 : i32
    %c0_i32_0 = arith.constant 0 : i32
    return %arg0, %c0_i32 : i32, i32
  }
  func.func @transform_1(%arg0: i32) -> (i32, i32) {
    %c0_i32 = arith.constant 0 : i32
    %c0_i32_0 = arith.constant 0 : i32
    %c0_i32_1 = arith.constant 0 : i32
    return %c0_i32, %c0_i32_0 : i32, i32
  }
  func.func @transform_2(%arg0: i32) -> (i32, i32) {
    %c0_i32 = arith.constant 0 : i32
    %c0_i32_0 = arith.constant 0 : i32
    %c0_i32_1 = arith.constant 0 : i32
    return %c0_i32, %c0_i32_0 : i32, i32
  }
  func.func @transform_3(%arg0: i32) -> (i32, i32) {
    %c0_i32 = arith.constant 0 : i32
    %c0_i32_0 = arith.constant 0 : i32
    %c0_i32_1 = arith.constant 0 : i32
    return %c0_i32, %c0_i32_0 : i32, i32
  }
  func.func @transform_4(%arg0: i32) -> (i32, i32) {
    %c0_i32 = arith.constant 0 : i32
    %c0_i32_0 = arith.constant 0 : i32
    return %arg0, %c0_i32 : i32, i32
  }
  func.func @transform_5(%arg0: i32) -> (i32, i32) {
    %c0_i32 = arith.constant 0 : i32
    %c0_i32_0 = arith.constant 0 : i32
    return %arg0, %c0_i32 : i32, i32
  }
}

</mosaic_0001>

<llo_original>
// kernel: att_layer_pallas.1
$region0: #{att_layer_pallas.1}
  #allocation0 [shape = 'u32[]', space=smem, size = 0x4, offset = 0x4, fixed_abs, tag = 'smem constant byte address 0x4 - core index']
  #allocation1 [shape = 'u32[144,128]{1,0:T(1,128)}', space=vmem, size = 0x12000, scoped, tag = 'internal scratch']
  %s0 = inlined_call_operand.vmem [shape: f32[300,128], index: 0, kind: input, shape index: {}]
  %s1 = inlined_call_operand.vmem [shape: f32[128,128], index: 1, kind: input, shape index: {}]
  %s2 = inlined_call_operand.vmem [shape: f32[1,128], index: 2, kind: input, shape index: {}]
  %s3 = inlined_call_operand.vmem [shape: f32[128,3], index: 3, kind: input, shape index: {}]
  %s4 = inlined_call_operand.vmem [shape: f32[300,128], index: 4, kind: output, shape index: {0}]
  %s5 = inlined_call_operand.vmem [shape: f32[300,3], index: 5, kind: output, shape index: {1}]
  %6 = xla_tuple %s4, %s5
  %s7 = sld [smem:[#allocation0]]
  $region153: #{att_layer_pallas.1} parent=0
    _
  %s9 = ssub.s32 1, %s7
  %s10 = scalar_select 0, %s9, %s7
  $region1: #{att_layer_pallas.1} parent=0
    #allocation2 [shape = 'u8[172032]{0}', space=vmem, size = 0x2a000, scoped, tag = 'output window, operand 0']
    #allocation3 [shape = 'u8[172032]{0}', space=vmem, size = 0x2a000, scoped, tag = 'output window, operand 1']
    loop: start=0, step=1, limit=4
    $region2: #{att_layer_pallas.1} parent=1 // loop_pre_header
      _
    $region3: #{att_layer_pallas.1} parent=1 // loop_header
      %s12 = sphi 0, %s16
      %p13 = scmp.ge.s32.totalorder %s12, 4
      %s22 = sphi 0, %s24
      %s25 = sphi 0, %s22
      %s26 = sphi 0, %s25
      %s42 = sphi 0, %s26
      %s46 = sphi 0, %s46
      %s48 = sphi 0, %s46
      %s49 = sphi 0, %s48
      %s63 = sphi 0, %s49
      %s67 = sphi 0, %s67
      %s69 = sphi 0, %s67
      %s70 = sphi 0, %s69
      %s84 = sphi 0, %s70
      %s88 = sphi 0, %s88
      %s90 = sphi 0, %s88
      %s91 = sphi 0, %s90
      %s105 = sphi 0, %s91
      %s111 = sphi 0, %s113
      %s114 = sphi 0, %s111
      %s115 = sphi 0, %s114
      %s131 = sphi 0, %s115
      %s137 = sphi 0, %s139
      %s140 = sphi 0, %s137
      %s141 = sphi 0, %s140
      %s157 = sphi 0, %s141
    $region4: #{att_layer_pallas.1} parent=1 // loop_header_branch
      %15 = sbr.rel (%p13) target = $region8
    $region5: #{att_layer_pallas.1} parent=1 // loop_body
      %s17 = ssub.s32 %s12, 1
      %s18 = ssub.s32 %s12, 2
      %s19 = sadd.s32 %s12, 1
      %s20 = ssub.s32 %s12, %s19
      %p21 = scmp.eq.s32.totalorder %s20, 0
      %s23 = sadd.s32 %s22, 1
      %s24 = scalar_select %p21, %s22, %s23
      %p27 = pneg %p21
      %p28 = scmp.eq.s32.totalorder %s12, 1
      %p29 = por %p27, %p28
      %p30 = scmp.ne.s32.totalorder %s22, %s25
      %p31 = scmp.eq.s32.totalorder %s12, 0
      %p32 = por %p30, %p31
      %p33 = scmp.ne.s32.totalorder %s22, %s25
      %p34 = scmp.eq.s32.totalorder %s17, 1
      %p35 = por %p33, %p34
      %p36 = scmp.ne.s32.totalorder %s25, %s26
      %p37 = scmp.eq.s32.totalorder %s17, 0
      %p38 = por %p36, %p37
      %p39 = scmp.ne.s32.totalorder %s25, %s26
      %p40 = scmp.eq.s32.totalorder %s18, 1
      %p41 = por %p39, %p40
      %p43 = scmp.ne.s32.totalorder %s26, %s42
      %p44 = scmp.eq.s32.totalorder %s18, 0
      %p45 = por %p43, %p44
      %s47 = sadd.s32 %s46, 1
      %p50 = scmp.eq.s32.totalorder %s12, 1
      %p51 = scmp.ne.s32.totalorder %s46, %s48
      %p52 = scmp.eq.s32.totalorder %s12, 0
      %p53 = por %p51, %p52
      %p54 = scmp.ne.s32.totalorder %s46, %s48
      %p55 = scmp.eq.s32.totalorder %s17, 1
      %p56 = por %p54, %p55
      %p57 = scmp.ne.s32.totalorder %s48, %s49
      %p58 = scmp.eq.s32.totalorder %s17, 0
      %p59 = por %p57, %p58
      %p60 = scmp.ne.s32.totalorder %s48, %s49
      %p61 = scmp.eq.s32.totalorder %s18, 1
      %p62 = por %p60, %p61
      %p64 = scmp.ne.s32.totalorder %s49, %s63
      %p65 = scmp.eq.s32.totalorder %s18, 0
      %p66 = por %p64, %p65
      %s68 = sadd.s32 %s67, 1
      %p71 = scmp.eq.s32.totalorder %s12, 1
      %p72 = scmp.ne.s32.totalorder %s67, %s69
      %p73 = scmp.eq.s32.totalorder %s12, 0
      %p74 = por %p72, %p73
      %p75 = scmp.ne.s32.totalorder %s67, %s69
      %p76 = scmp.eq.s32.totalorder %s17, 1
      %p77 = por %p75, %p76
      %p78 = scmp.ne.s32.totalorder %s69, %s70
      %p79 = scmp.eq.s32.totalorder %s17, 0
      %p80 = por %p78, %p79
      %p81 = scmp.ne.s32.totalorder %s69, %s70
      %p82 = scmp.eq.s32.totalorder %s18, 1
      %p83 = por %p81, %p82
      %p85 = scmp.ne.s32.totalorder %s70, %s84
      %p86 = scmp.eq.s32.totalorder %s18, 0
      %p87 = por %p85, %p86
      %s89 = sadd.s32 %s88, 1
      %p92 = scmp.eq.s32.totalorder %s12, 1
      %p93 = scmp.ne.s32.totalorder %s88, %s90
      %p94 = scmp.eq.s32.totalorder %s12, 0
      %p95 = por %p93, %p94
      %p96 = scmp.ne.s32.totalorder %s88, %s90
      %p97 = scmp.eq.s32.totalorder %s17, 1
      %p98 = por %p96, %p97
      %p99 = scmp.ne.s32.totalorder %s90, %s91
      %p100 = scmp.eq.s32.totalorder %s17, 0
      %p101 = por %p99, %p100
      %p102 = scmp.ne.s32.totalorder %s90, %s91
      %p103 = scmp.eq.s32.totalorder %s18, 1
      %p104 = por %p102, %p103
      %p106 = scmp.ne.s32.totalorder %s91, %s105
      %p107 = scmp.eq.s32.totalorder %s18, 0
      %p108 = por %p106, %p107
      %s109 = ssub.s32 %s12, %s19
      %p110 = scmp.eq.s32.totalorder %s109, 0
      %s112 = sadd.s32 %s111, 1
      %s113 = scalar_select %p110, %s111, %s112
      %p116 = pneg %p110
      %p117 = scmp.eq.s32.totalorder %s12, 1
      %p118 = por %p116, %p117
      %p119 = scmp.ne.s32.totalorder %s111, %s114
      %p120 = scmp.eq.s32.totalorder %s12, 0
      %p121 = por %p119, %p120
      %p122 = scmp.ne.s32.totalorder %s111, %s114
      %p123 = scmp.eq.s32.totalorder %s17, 1
      %p124 = por %p122, %p123
      %p125 = scmp.ne.s32.totalorder %s114, %s115
      %p126 = scmp.eq.s32.totalorder %s17, 0
      %p127 = por %p125, %p126
      %p128 = scmp.ne.s32.totalorder %s114, %s115
      %p129 = scmp.eq.s32.totalorder %s18, 1
      %p130 = por %p128, %p129
      %p132 = scmp.ne.s32.totalorder %s115, %s131
      %p133 = scmp.eq.s32.totalorder %s18, 0
      %p134 = por %p132, %p133
      %s135 = ssub.s32 %s12, %s19
      %p136 = scmp.eq.s32.totalorder %s135, 0
      %s138 = sadd.s32 %s137, 1
      %s139 = scalar_select %p136, %s137, %s138
      %p142 = pneg %p136
      %p143 = scmp.eq.s32.totalorder %s12, 1
      %p144 = por %p142, %p143
      %p145 = scmp.ne.s32.totalorder %s137, %s140
      %p146 = scmp.eq.s32.totalorder %s12, 0
      %p147 = por %p145, %p146
      %p148 = scmp.ne.s32.totalorder %s137, %s140
      %p149 = scmp.eq.s32.totalorder %s17, 1
      %p150 = por %p148, %p149
      %p151 = scmp.ne.s32.totalorder %s140, %s141
      %p152 = scmp.eq.s32.totalorder %s17, 0
      %p153 = por %p151, %p152
      %p154 = scmp.ne.s32.totalorder %s140, %s141
      %p155 = scmp.eq.s32.totalorder %s18, 1
      %p156 = por %p154, %p155
      %p158 = scmp.ne.s32.totalorder %s141, %s157
      %p159 = scmp.eq.s32.totalorder %s18, 0
      %p160 = por %p158, %p159
      %p161 = scmp.le.s32.totalorder 1, %s12
      %p162 = scmp.lt.s32.totalorder %s12, 3
      %p163 = pnand %p161, %p162
      %p164 = pneg %p163
      // Predicated region
      $region9: #{att_layer_pallas.1} parent=5 // pred_check
        _
      $region10: #{att_layer_pallas.1} parent=5 // pred_check_branch
        %166 = sbr.rel (%p163) target = $region12
      $region11: #{att_layer_pallas.1} parent=5 // pred_region
        %s167 = ssub.s32 %s12, 1
        // Predicated region
        $region13: #{att_layer_pallas.1} parent=11 // pred_check
          %p168 = pneg %p59
        $region14: #{att_layer_pallas.1} parent=11 // pred_check_branch
          %170 = sbr.rel (%p168) target = $region16
        $region15: #{att_layer_pallas.1} parent=11 // pred_region
          _
        $region16: #{att_layer_pallas.1} parent=11 // pred_fallthru
          _
        // Predicated region
        $region17: #{att_layer_pallas.1} parent=11 // pred_check
          %p171 = pneg %p80
        $region18: #{att_layer_pallas.1} parent=11 // pred_check_branch
          %173 = sbr.rel (%p171) target = $region20
        $region19: #{att_layer_pallas.1} parent=11 // pred_region
          _
        $region20: #{att_layer_pallas.1} parent=11 // pred_fallthru
          _
        // Predicated region
        $region21: #{att_layer_pallas.1} parent=11 // pred_check
          %p174 = pneg %p101
        $region22: #{att_layer_pallas.1} parent=11 // pred_check_branch
          %176 = sbr.rel (%p174) target = $region24
        $region23: #{att_layer_pallas.1} parent=11 // pred_region
          _
        $region24: #{att_layer_pallas.1} parent=11 // pred_fallthru
          _
      $region12: #{att_layer_pallas.1} parent=5 // pred_fallthru
        _
      %p177 = scmp.lt.s32.totalorder %s12, 2
      // Predicated region
      $region25: #{att_layer_pallas.1} parent=5 // pred_check
        %p178 = pneg %p177
      $region26: #{att_layer_pallas.1} parent=5 // pred_check_branch
        %180 = sbr.rel (%p178) target = $region28
      $region27: #{att_layer_pallas.1} parent=5 // pred_region
        // Predicated region
        $region29: #{att_layer_pallas.1} parent=27 // pred_check
          %p181 = pneg %p32
        $region30: #{att_layer_pallas.1} parent=27 // pred_check_branch
          %183 = sbr.rel (%p181) target = $region32
        $region31: #{att_layer_pallas.1} parent=27 // pred_region
          %s184 = smul.u32 21, %s12
          %s185 = ssub.s32 38, %s184
          %p186 = scmp.lt.s32.totalorder %s185, 21
          %s187 = scalar_select %p186, %s185, 21
          %s188 = smul.u32 128, %s187
          %p189 = scmp.lt.s32.totalorder %s184, 37
          %s190 = scalar_select %p189, %s184, 37
          %s191 = smul.addr %s190, 8
          %s192 = scalar_lea.vmem %s0, %s191
          %s193 = smul.u32 21, %s12
          %s194 = ssub.s32 38, %s193
          %p195 = scmp.lt.s32.totalorder %s194, 21
          %s196 = scalar_select %p195, %s194, 21
          %s197 = smul.u32 128, %s196
        $region32: #{att_layer_pallas.1} parent=27 // pred_fallthru
          _
      $region28: #{att_layer_pallas.1} parent=5 // pred_fallthru
        _
      %p198 = scmp.le.s32.totalorder 1, %s12
      %p199 = scmp.lt.s32.totalorder %s12, 3
      %p200 = pnand %p198, %p199
      %p201 = pneg %p200
      // Predicated region
      $region33: #{att_layer_pallas.1} parent=5 // pred_check
        _
      $region34: #{att_layer_pallas.1} parent=5 // pred_check_branch
        %203 = sbr.rel (%p200) target = $region36
      $region35: #{att_layer_pallas.1} parent=5 // pred_region
        %s204 = ssub.s32 %s12, 1
        %s205 = smul.u32 21, %s17
        %s206 = ssub.s32 38, %s205
        %p207 = scmp.lt.s32.totalorder %s206, 21
        %s208 = scalar_select %p207, %s206, 21
        %s209 = smul.u32 128, %s208
        %p210 = scmp.lt.s32.totalorder %s205, 37
        %s211 = scalar_select %p210, %s205, 37
        %s212 = smul.addr %s211, 8
        %s213 = scalar_lea.vmem %s0, %s212
        %p214 = pneg %p38
        %p215 = pneg %p35
        %p216 = pneg %p59
        %p217 = pneg %p56
        %p218 = pneg %p80
        %p219 = pneg %p77
        %p220 = pneg %p101
        %p221 = pneg %p98
        %p222 = pneg %p127
        %p223 = pneg %p124
        %s224 = sand.u32 %s114, 1
        %s225 = sand.u32 %s114, 1
        %s226 = smul.addr %s225, 168
        %s227 = scalar_lea.vmem [#allocation2], %s226
        %p228 = pneg %p153
        %p229 = pneg %p150
        %s230 = sand.u32 %s140, 1
        %s231 = sand.u32 %s140, 1
        %s232 = smul.addr %s231, 168
        %s233 = scalar_lea.vmem [#allocation3], %s232
        %s234 = smul.u32 21, %s17
        %s235 = ssub.s32 38, %s234
        %p236 = scmp.lt.s32.totalorder %s235, 21
        %s237 = scalar_select %p236, %s235, 21
        %s238 = smul.u32 128, %s237
        %p239 = scmp.lt.s32.totalorder %s234, 37
        %s240 = scalar_select %p239, %s234, 37
        %s241 = smul.addr %s240, 8
        %s242 = scalar_lea.vmem %s0, %s241
        %s243 = smul.u32 21, %s17
        %s244 = ssub.s32 38, %s243
        %p245 = scmp.lt.s32.totalorder %s244, 21
        %s246 = scalar_select %p245, %s244, 21
        %s247 = smul.u32 128, %s246
        %s248 = smul.u32 21, %s17
        %s249 = ssub.s32 38, %s248
        %p250 = scmp.lt.s32.totalorder %s249, 21
        %s251 = scalar_select %p250, %s249, 21
        %s252 = smul.u32 128, %s251
        %s253 = smul.u32 21, %s17
        %s254 = ssub.s32 38, %s253
        %p255 = scmp.lt.s32.totalorder %s254, 21
        %s256 = scalar_select %p255, %s254, 21
        %s257 = smul.u32 128, %s256
        %v258 = vlaneseq
        %v259 = vshrl.u32 %v258, 7
        %v260 = vadd.s32 %v259, 8
        %v261 = vadd.s32 %v259, 16
        %v262 = vadd.s32 %v259, 24
        %v263 = vadd.s32 %v259, 32
        %v264 = vadd.s32 %v259, 40
        %v265 = vadd.s32 %v259, 48
        %v266 = vadd.s32 %v259, 56
        %v267 = vadd.s32 %v259, 64
        %v268 = vadd.s32 %v259, 72
        %v269 = vadd.s32 %v259, 80
        %v270 = vadd.s32 %v259, 88
        %v271 = vadd.s32 %v259, 96
        %v272 = vadd.s32 %v259, 104
        %v273 = vadd.s32 %v259, 112
        %v274 = vadd.s32 %v259, 120
        %v275 = vadd.s32 %v259, 128
        %v276 = vadd.s32 %v259, 136
        %v277 = vadd.s32 %v259, 144
        %v278 = vadd.s32 %v259, 152
        %v279 = vadd.s32 %v259, 160
        %v280 = vcvt.s32.f32 %v259
        %v281 = vcvt.s32.f32 %v260
        %v282 = vcvt.s32.f32 %v261
        %v283 = vcvt.s32.f32 %v262
        %v284 = vcvt.s32.f32 %v263
        %v285 = vcvt.s32.f32 %v264
        %v286 = vcvt.s32.f32 %v265
        %v287 = vcvt.s32.f32 %v266
        %v288 = vcvt.s32.f32 %v267
        %v289 = vcvt.s32.f32 %v268
        %v290 = vcvt.s32.f32 %v269
        %v291 = vcvt.s32.f32 %v270
        %v292 = vcvt.s32.f32 %v271
        %v293 = vcvt.s32.f32 %v272
        %v294 = vcvt.s32.f32 %v273
        %v295 = vcvt.s32.f32 %v274
        %v296 = vcvt.s32.f32 %v275
        %v297 = vcvt.s32.f32 %v276
        %v298 = vcvt.s32.f32 %v277
        %v299 = vcvt.s32.f32 %v278
        %v300 = vcvt.s32.f32 %v279
        %v301 = vmul.f32 %v280, 0.33333334
        %v302 = vmul.f32 %v281, 0.33333334
        %v303 = vmul.f32 %v282, 0.33333334
        %v304 = vmul.f32 %v283, 0.33333334
        %v305 = vmul.f32 %v284, 0.33333334
        %v306 = vmul.f32 %v285, 0.33333334
        %v307 = vmul.f32 %v286, 0.33333334
        %v308 = vmul.f32 %v287, 0.33333334
        %v309 = vmul.f32 %v288, 0.33333334
        %v310 = vmul.f32 %v289, 0.33333334
        %v311 = vmul.f32 %v290, 0.33333334
        %v312 = vmul.f32 %v291, 0.33333334
        %v313 = vmul.f32 %v292, 0.33333334
        %v314 = vmul.f32 %v293, 0.33333334
        %v315 = vmul.f32 %v294, 0.33333334
        %v316 = vmul.f32 %v295, 0.33333334
        %v317 = vmul.f32 %v296, 0.33333334
        %v318 = vmul.f32 %v297, 0.33333334
        %v319 = vmul.f32 %v298, 0.33333334
        %v320 = vmul.f32 %v299, 0.33333334
        %v321 = vmul.f32 %v300, 0.33333334
        %v322 = vfloor.f32 %v301
        %v323 = vfloor.f32 %v302
        %v324 = vfloor.f32 %v303
        %v325 = vfloor.f32 %v304
        %v326 = vfloor.f32 %v305
        %v327 = vfloor.f32 %v306
        %v328 = vfloor.f32 %v307
        %v329 = vfloor.f32 %v308
        %v330 = vfloor.f32 %v309
        %v331 = vfloor.f32 %v310
        %v332 = vfloor.f32 %v311
        %v333 = vfloor.f32 %v312
        %v334 = vfloor.f32 %v313
        %v335 = vfloor.f32 %v314
        %v336 = vfloor.f32 %v315
        %v337 = vfloor.f32 %v316
        %v338 = vfloor.f32 %v317
        %v339 = vfloor.f32 %v318
        %v340 = vfloor.f32 %v319
        %v341 = vfloor.f32 %v320
        %v342 = vfloor.f32 %v321
        %v343 = vmul.f32 %v322, 3.0
        %v344 = vmul.f32 %v323, 3.0
        %v345 = vmul.f32 %v324, 3.0
        %v346 = vmul.f32 %v325, 3.0
        %v347 = vmul.f32 %v326, 3.0
        %v348 = vmul.f32 %v327, 3.0
        %v349 = vmul.f32 %v328, 3.0
        %v350 = vmul.f32 %v329, 3.0
        %v351 = vmul.f32 %v330, 3.0
        %v352 = vmul.f32 %v331, 3.0
        %v353 = vmul.f32 %v332, 3.0
        %v354 = vmul.f32 %v333, 3.0
        %v355 = vmul.f32 %v334, 3.0
        %v356 = vmul.f32 %v335, 3.0
        %v357 = vmul.f32 %v336, 3.0
        %v358 = vmul.f32 %v337, 3.0
        %v359 = vmul.f32 %v338, 3.0
        %v360 = vmul.f32 %v339, 3.0
        %v361 = vmul.f32 %v340, 3.0
        %v362 = vmul.f32 %v341, 3.0
        %v363 = vmul.f32 %v342, 3.0
        %v364 = vsub.f32 %v280, %v343
        %v365 = vsub.f32 %v281, %v344
        %v366 = vsub.f32 %v282, %v345
        %v367 = vsub.f32 %v283, %v346
        %v368 = vsub.f32 %v284, %v347
        %v369 = vsub.f32 %v285, %v348
        %v370 = vsub.f32 %v286, %v349
        %v371 = vsub.f32 %v287, %v350
        %v372 = vsub.f32 %v288, %v351
        %v373 = vsub.f32 %v289, %v352
        %v374 = vsub.f32 %v290, %v353
        %v375 = vsub.f32 %v291, %v354
        %v376 = vsub.f32 %v292, %v355
        %v377 = vsub.f32 %v293, %v356
        %v378 = vsub.f32 %v294, %v357
        %v379 = vsub.f32 %v295, %v358
        %v380 = vsub.f32 %v296, %v359
        %v381 = vsub.f32 %v297, %v360
        %v382 = vsub.f32 %v298, %v361
        %v383 = vsub.f32 %v299, %v362
        %v384 = vsub.f32 %v300, %v363
        %v385 = vcvt.f32.s32.to.zero.pseudo %v364
        %v386 = vcvt.f32.s32.to.zero.pseudo %v365
        %v387 = vcvt.f32.s32.to.zero.pseudo %v366
        %v388 = vcvt.f32.s32.to.zero.pseudo %v367
        %v389 = vcvt.f32.s32.to.zero.pseudo %v368
        %v390 = vcvt.f32.s32.to.zero.pseudo %v369
        %v391 = vcvt.f32.s32.to.zero.pseudo %v370
        %v392 = vcvt.f32.s32.to.zero.pseudo %v371
        %v393 = vcvt.f32.s32.to.zero.pseudo %v372
        %v394 = vcvt.f32.s32.to.zero.pseudo %v373
        %v395 = vcvt.f32.s32.to.zero.pseudo %v374
        %v396 = vcvt.f32.s32.to.zero.pseudo %v375
        %v397 = vcvt.f32.s32.to.zero.pseudo %v376
        %v398 = vcvt.f32.s32.to.zero.pseudo %v377
        %v399 = vcvt.f32.s32.to.zero.pseudo %v378
        %v400 = vcvt.f32.s32.to.zero.pseudo %v379
        %v401 = vcvt.f32.s32.to.zero.pseudo %v380
        %v402 = vcvt.f32.s32.to.zero.pseudo %v381
        %v403 = vcvt.f32.s32.to.zero.pseudo %v382
        %v404 = vcvt.f32.s32.to.zero.pseudo %v383
        %v405 = vcvt.f32.s32.to.zero.pseudo %v384
        %v406 = vcvt.f32.s32.to.zero.pseudo %v322
        %v407 = vcvt.f32.s32.to.zero.pseudo %v323
        %v408 = vcvt.f32.s32.to.zero.pseudo %v324
        %v409 = vcvt.f32.s32.to.zero.pseudo %v325
        %v410 = vcvt.f32.s32.to.zero.pseudo %v326
        %v411 = vcvt.f32.s32.to.zero.pseudo %v327
        %v412 = vcvt.f32.s32.to.zero.pseudo %v328
        %v413 = vcvt.f32.s32.to.zero.pseudo %v329
        %v414 = vcvt.f32.s32.to.zero.pseudo %v330
        %v415 = vcvt.f32.s32.to.zero.pseudo %v331
        %v416 = vcvt.f32.s32.to.zero.pseudo %v332
        %v417 = vcvt.f32.s32.to.zero.pseudo %v333
        %v418 = vcvt.f32.s32.to.zero.pseudo %v334
        %v419 = vcvt.f32.s32.to.zero.pseudo %v335
        %v420 = vcvt.f32.s32.to.zero.pseudo %v336
        %v421 = vcvt.f32.s32.to.zero.pseudo %v337
        %v422 = vcvt.f32.s32.to.zero.pseudo %v338
        %v423 = vcvt.f32.s32.to.zero.pseudo %v339
        %v424 = vcvt.f32.s32.to.zero.pseudo %v340
        %v425 = vcvt.f32.s32.to.zero.pseudo %v341
        %v426 = vcvt.f32.s32.to.zero.pseudo %v342
        %s427 = smul.u32 %s17, 168
        %v428 = vstv %s427
        %v429 = vadd.s32 %v259, %v428
        %v430 = vadd.s32 %v260, %v428
        %v431 = vadd.s32 %v261, %v428
        %v432 = vadd.s32 %v262, %v428
        %v433 = vadd.s32 %v263, %v428
        %v434 = vadd.s32 %v264, %v428
        %v435 = vadd.s32 %v265, %v428
        %v436 = vadd.s32 %v266, %v428
        %v437 = vadd.s32 %v267, %v428
        %v438 = vadd.s32 %v268, %v428
        %v439 = vadd.s32 %v269, %v428
        %v440 = vadd.s32 %v270, %v428
        %v441 = vadd.s32 %v271, %v428
        %v442 = vadd.s32 %v272, %v428
        %v443 = vadd.s32 %v273, %v428
        %v444 = vadd.s32 %v274, %v428
        %v445 = vadd.s32 %v275, %v428
        %v446 = vadd.s32 %v276, %v428
        %v447 = vadd.s32 %v277, %v428
        %v448 = vadd.s32 %v278, %v428
        %v449 = vadd.s32 %v279, %v428
        %vm450 = vcmp.lt.s32.totalorder %v429, 300
        %vm451 = vcmp.lt.s32.totalorder %v430, 300
        %vm452 = vcmp.lt.s32.totalorder %v431, 300
        %vm453 = vcmp.lt.s32.totalorder %v432, 300
        %vm454 = vcmp.lt.s32.totalorder %v433, 300
        %vm455 = vcmp.lt.s32.totalorder %v434, 300
        %vm456 = vcmp.lt.s32.totalorder %v435, 300
        %vm457 = vcmp.lt.s32.totalorder %v436, 300
        %vm458 = vcmp.lt.s32.totalorder %v437, 300
        %vm459 = vcmp.lt.s32.totalorder %v438, 300
        %vm460 = vcmp.lt.s32.totalorder %v439, 300
        %vm461 = vcmp.lt.s32.totalorder %v440, 300
        %vm462 = vcmp.lt.s32.totalorder %v441, 300
        %vm463 = vcmp.lt.s32.totalorder %v442, 300
        %vm464 = vcmp.lt.s32.totalorder %v443, 300
        %vm465 = vcmp.lt.s32.totalorder %v444, 300
        %vm466 = vcmp.lt.s32.totalorder %v445, 300
        %vm467 = vcmp.lt.s32.totalorder %v446, 300
        %vm468 = vcmp.lt.s32.totalorder %v447, 300
        %vm469 = vcmp.lt.s32.totalorder %v448, 300
        %vm470 = vcmp.lt.s32.totalorder %v449, 300
        %v471 = vld [vmem:[%s242] sm:$0xff]
        %v472 = vld [vmem:[%s242 + $0x8] sm:$0xff]
        %v473 = vld [vmem:[%s242 + $0x10] sm:$0xff]
        %v474 = vld [vmem:[%s242 + $0x18] sm:$0xff]
        %v475 = vld [vmem:[%s242 + $0x20] sm:$0xff]
        %v476 = vld [vmem:[%s242 + $0x28] sm:$0xff]
        %v477 = vld [vmem:[%s242 + $0x30] sm:$0xff]
        %v478 = vld [vmem:[%s242 + $0x38] sm:$0xff]
        %v479 = vld [vmem:[%s242 + $0x40] sm:$0xff]
        %v480 = vld [vmem:[%s242 + $0x48] sm:$0xff]
        %v481 = vld [vmem:[%s242 + $0x50] sm:$0xff]
        %v482 = vld [vmem:[%s242 + $0x58] sm:$0xff]
        %v483 = vld [vmem:[%s242 + $0x60] sm:$0xff]
        %v484 = vld [vmem:[%s242 + $0x68] sm:$0xff]
        %v485 = vld [vmem:[%s242 + $0x70] sm:$0xff]
        %v486 = vld [vmem:[%s242 + $0x78] sm:$0xff]
        %v487 = vld [vmem:[%s242 + $0x80] sm:$0xff]
        %v488 = vld [vmem:[%s242 + $0x88] sm:$0xff]
        %v489 = vld [vmem:[%s242 + $0x90] sm:$0xff]
        %v490 = vld [vmem:[%s242 + $0x98] sm:$0xff]
        %v491 = vld [vmem:[%s242 + $0xa0] sm:$0xff]
        %v492 = vsel %vm450, 1, 0
        %v493 = vsel %vm451, 1, 0
        %v494 = vsel %vm452, 1, 0
        %v495 = vsel %vm453, 1, 0
        %v496 = vsel %vm454, 1, 0
        %v497 = vsel %vm455, 1, 0
        %v498 = vsel %vm456, 1, 0
        %v499 = vsel %vm457, 1, 0
        %v500 = vsel %vm458, 1, 0
        %v501 = vsel %vm459, 1, 0
        %v502 = vsel %vm460, 1, 0
        %v503 = vsel %vm461, 1, 0
        %v504 = vsel %vm462, 1, 0
        %v505 = vsel %vm463, 1, 0
        %v506 = vsel %vm464, 1, 0
        %v507 = vsel %vm465, 1, 0
        %v508 = vsel %vm466, 1, 0
        %v509 = vsel %vm467, 1, 0
        %v510 = vsel %vm468, 1, 0
        %v511 = vsel %vm469, 1, 0
        %v512 = vsel %vm470, 1, 0
        %vm513 = vcmp.eq.s32.totalorder %v492, 1
        %vm514 = vcmp.eq.s32.totalorder %v493, 1
        %vm515 = vcmp.eq.s32.totalorder %v494, 1
        %vm516 = vcmp.eq.s32.totalorder %v495, 1
        %vm517 = vcmp.eq.s32.totalorder %v496, 1
        %vm518 = vcmp.eq.s32.totalorder %v497, 1
        %vm519 = vcmp.eq.s32.totalorder %v498, 1
        %vm520 = vcmp.eq.s32.totalorder %v499, 1
        %vm521 = vcmp.eq.s32.totalorder %v500, 1
        %vm522 = vcmp.eq.s32.totalorder %v501, 1
        %vm523 = vcmp.eq.s32.totalorder %v502, 1
        %vm524 = vcmp.eq.s32.totalorder %v503, 1
        %vm525 = vcmp.eq.s32.totalorder %v504, 1
        %vm526 = vcmp.eq.s32.totalorder %v505, 1
        %vm527 = vcmp.eq.s32.totalorder %v506, 1
        %vm528 = vcmp.eq.s32.totalorder %v507, 1
        %vm529 = vcmp.eq.s32.totalorder %v508, 1
        %vm530 = vcmp.eq.s32.totalorder %v509, 1
        %vm531 = vcmp.eq.s32.totalorder %v510, 1
        %vm532 = vcmp.eq.s32.totalorder %v511, 1
        %vm533 = vcmp.eq.s32.totalorder %v512, 1
        %v534 = vsel %vm513, %v471, 0.0
        %v535 = vsel %vm514, %v472, 0.0
        %v536 = vsel %vm515, %v473, 0.0
        %v537 = vsel %vm516, %v474, 0.0
        %v538 = vsel %vm517, %v475, 0.0
        %v539 = vsel %vm518, %v476, 0.0
        %v540 = vsel %vm519, %v477, 0.0
        %v541 = vsel %vm520, %v478, 0.0
        %v542 = vsel %vm521, %v479, 0.0
        %v543 = vsel %vm522, %v480, 0.0
        %v544 = vsel %vm523, %v481, 0.0
        %v545 = vsel %vm524, %v482, 0.0
        %v546 = vsel %vm525, %v483, 0.0
        %v547 = vsel %vm526, %v484, 0.0
        %v548 = vsel %vm527, %v485, 0.0
        %v549 = vsel %vm528, %v486, 0.0
        %v550 = vsel %vm529, %v487, 0.0
        %v551 = vsel %vm530, %v488, 0.0
        %v552 = vsel %vm531, %v489, 0.0
        %v553 = vsel %vm532, %v490, 0.0
        %v554 = vsel %vm533, %v491, 0.0
        %v555 = vld [vmem:[%s1] sm:$0xff]
        %v556 = vld [vmem:[%s1 + $0x8] sm:$0xff]
        %v557 = vld [vmem:[%s1 + $0x10] sm:$0xff]
        %v558 = vld [vmem:[%s1 + $0x18] sm:$0xff]
        %v559 = vld [vmem:[%s1 + $0x20] sm:$0xff]
        %v560 = vld [vmem:[%s1 + $0x28] sm:$0xff]
        %v561 = vld [vmem:[%s1 + $0x30] sm:$0xff]
        %v562 = vld [vmem:[%s1 + $0x38] sm:$0xff]
        %v563 = vld [vmem:[%s1 + $0x40] sm:$0xff]
        %v564 = vld [vmem:[%s1 + $0x48] sm:$0xff]
        %v565 = vld [vmem:[%s1 + $0x50] sm:$0xff]
        %v566 = vld [vmem:[%s1 + $0x58] sm:$0xff]
        %v567 = vld [vmem:[%s1 + $0x60] sm:$0xff]
        %v568 = vld [vmem:[%s1 + $0x68] sm:$0xff]
        %v569 = vld [vmem:[%s1 + $0x70] sm:$0xff]
        %v570 = vld [vmem:[%s1 + $0x78] sm:$0xff]
        %v571 = vld [vmem:[%s2] sm:$0x1]
        %v573 = vlaneseq
        %v574 = vshrl.u32 %v573, 7
        %v575 = vsub.s32 0, %v574
        %v576 = vrot.slane %v571, %v575
        %578 = vmatprep.subr.mxu0 0.0
        %579 = vmatpush1.msra.mxu0 %v555
        %580 = vmatprep.subr.mxu0 0.0
        %581 = vmatpush1.msra.mxu0 %v556
        %582 = vmatprep.subr.mxu0 0.0
        %583 = vmatpush1.msra.mxu0 %v557
        %584 = vmatprep.subr.mxu0 0.0
        %585 = vmatpush1.msra.mxu0 %v558
        %586 = vmatprep.subr.mxu0 0.0
        %587 = vmatpush1.msra.mxu0 %v559
        %588 = vmatprep.subr.mxu0 0.0
        %589 = vmatpush1.msra.mxu0 %v560
        %590 = vmatprep.subr.mxu0 0.0
        %591 = vmatpush1.msra.mxu0 %v561
        %592 = vmatprep.subr.mxu0 0.0
        %593 = vmatpush1.msra.mxu0 %v562
        %594 = vmatprep.subr.mxu0 0.0
        %595 = vmatpush1.msra.mxu0 %v563
        %596 = vmatprep.subr.mxu0 0.0
        %597 = vmatpush1.msra.mxu0 %v564
        %598 = vmatprep.subr.mxu0 0.0
        %599 = vmatpush1.msra.mxu0 %v565
        %600 = vmatprep.subr.mxu0 0.0
        %601 = vmatpush1.msra.mxu0 %v566
        %602 = vmatprep.subr.mxu0 0.0
        %603 = vmatpush1.msra.mxu0 %v567
        %604 = vmatprep.subr.mxu0 0.0
        %605 = vmatpush1.msra.mxu0 %v568
        %606 = vmatprep.subr.mxu0 0.0
        %607 = vmatpush1.msra.mxu0 %v569
        %608 = vmatprep.subr.mxu0 0.0
        %609 = vmatpush1.msra.mxu0 %v570
        %610 = vmatprep.subr.mxu0 0.0
        %611 = vmatpush1.msra.mxu0 0.0
        %612 = vmatprep.subr.mxu0 0.0
        %613 = vmatpush1.msra.mxu0 0.0
        %614 = vmatprep.subr.mxu0 0.0
        %615 = vmatpush1.msra.mxu0 0.0
        %616 = vmatprep.subr.mxu0 0.0
        %617 = vmatpush1.msra.mxu0 0.0
        %618 = vmatprep.subr.mxu0 0.0
        %619 = vmatpush1.msra.mxu0 0.0
        %620 = vmatprep.subr.mxu0 0.0
        %621 = vmatpush1.msra.mxu0 0.0
        %622 = vmatprep.subr.mxu0 0.0
        %623 = vmatpush1.msra.mxu0 0.0
        %624 = vmatprep.subr.mxu0 0.0
        %625 = vmatpush1.msra.mxu0 0.0
        %626 = vmatprep.subr.mxu0 0.0
        %627 = vmatpush1.msra.mxu0 0.0
        %628 = vmatprep.subr.mxu0 0.0
        %629 = vmatpush1.msra.mxu0 0.0
        %630 = vmatprep.subr.mxu0 0.0
        %631 = vmatpush1.msra.mxu0 0.0
        %632 = vmatprep.subr.mxu0 0.0
        %633 = vmatpush1.msra.mxu0 0.0
        %634 = vmatprep.subr.mxu0 0.0
        %635 = vmatpush1.msra.mxu0 0.0
        %636 = vmatprep.subr.mxu0 0.0
        %637 = vmatpush1.msra.mxu0 0.0
        %638 = vmatprep.subr.mxu0 0.0
        %639 = vmatpush1.msra.mxu0 0.0
        %640 = vmatprep.subr.mxu0 0.0
        %641 = vmatpush1.msra.mxu0 0.0
        %642 = vmatprep.mubr.f32.mxu0 0.0
        %643 = vmatmul.mubr.f32.gmra.mrb[0].mxu0 %v534
        %v644 = vpop.f32.mrb[0].mxu0
        %v645 = vadd.f32 %v576, %v644
        %v646 = vpop.f32.mrb[0].mxu0
        %647 = vmatprep.mubr.f32.mxu0 0.0
        %648 = vmatmul.mubr.f32.gmra.mrb[0].mxu0 %v535
        %v649 = vpop.f32.mrb[0].mxu0
        %v650 = vadd.f32 %v576, %v649
        %v651 = vpop.f32.mrb[0].mxu0
        %652 = vmatprep.mubr.f32.mxu0 0.0
        %653 = vmatmul.mubr.f32.gmra.mrb[0].mxu0 %v536
        %v654 = vpop.f32.mrb[0].mxu0
        %v655 = vadd.f32 %v576, %v654
        %v656 = vpop.f32.mrb[0].mxu0
        %657 = vmatprep.mubr.f32.mxu0 0.0
        %658 = vmatmul.mubr.f32.gmra.mrb[0].mxu0 %v537
        %v659 = vpop.f32.mrb[0].mxu0
        %v660 = vadd.f32 %v576, %v659
        %v661 = vpop.f32.mrb[0].mxu0
        %662 = vmatprep.mubr.f32.mxu0 0.0
        %663 = vmatmul.mubr.f32.gmra.mrb[0].mxu0 %v538
        %v664 = vpop.f32.mrb[0].mxu0
        %v665 = vadd.f32 %v576, %v664
        %v666 = vpop.f32.mrb[0].mxu0
        %667 = vmatprep.mubr.f32.mxu0 0.0
        %668 = vmatmul.mubr.f32.gmra.mrb[0].mxu0 %v539
        %v669 = vpop.f32.mrb[0].mxu0
        %v670 = vadd.f32 %v576, %v669
        %v671 = vpop.f32.mrb[0].mxu0
        %672 = vmatprep.mubr.f32.mxu0 0.0
        %673 = vmatmul.mubr.f32.gmra.mrb[0].mxu0 %v540
        %v674 = vpop.f32.mrb[0].mxu0
        %v675 = vadd.f32 %v576, %v674
        %v676 = vpop.f32.mrb[0].mxu0
        %677 = vmatprep.mubr.f32.mxu0 0.0
        %678 = vmatmul.mubr.f32.gmra.mrb[0].mxu0 %v541
        %v679 = vpop.f32.mrb[0].mxu0
        %v680 = vadd.f32 %v576, %v679
        %v681 = vpop.f32.mrb[0].mxu0
        %682 = vmatprep.mubr.f32.mxu0 0.0
        %683 = vmatmul.mubr.f32.gmra.mrb[0].mxu0 %v542
        %v684 = vpop.f32.mrb[0].mxu0
        %v685 = vadd.f32 %v576, %v684
        %v686 = vpop.f32.mrb[0].mxu0
        %687 = vmatprep.mubr.f32.mxu0 0.0
        %688 = vmatmul.mubr.f32.gmra.mrb[0].mxu0 %v543
        %v689 = vpop.f32.mrb[0].mxu0
        %v690 = vadd.f32 %v576, %v689
        %v691 = vpop.f32.mrb[0].mxu0
        %692 = vmatprep.mubr.f32.mxu0 0.0
        %693 = vmatmul.mubr.f32.gmra.mrb[0].mxu0 %v544
        %v694 = vpop.f32.mrb[0].mxu0
        %v695 = vadd.f32 %v576, %v694
        %v696 = vpop.f32.mrb[0].mxu0
        %697 = vmatprep.mubr.f32.mxu0 0.0
        %698 = vmatmul.mubr.f32.gmra.mrb[0].mxu0 %v545
        %v699 = vpop.f32.mrb[0].mxu0
        %v700 = vadd.f32 %v576, %v699
        %v701 = vpop.f32.mrb[0].mxu0
        %702 = vmatprep.mubr.f32.mxu0 0.0
        %703 = vmatmul.mubr.f32.gmra.mrb[0].mxu0 %v546
        %v704 = vpop.f32.mrb[0].mxu0
        %v705 = vadd.f32 %v576, %v704
        %v706 = vpop.f32.mrb[0].mxu0
        %707 = vmatprep.mubr.f32.mxu0 0.0
        %708 = vmatmul.mubr.f32.gmra.mrb[0].mxu0 %v547
        %v709 = vpop.f32.mrb[0].mxu0
        %v710 = vadd.f32 %v576, %v709
        %v711 = vpop.f32.mrb[0].mxu0
        %712 = vmatprep.mubr.f32.mxu0 0.0
        %713 = vmatmul.mubr.f32.gmra.mrb[0].mxu0 %v548
        %v714 = vpop.f32.mrb[0].mxu0
        %v715 = vadd.f32 %v576, %v714
        %v716 = vpop.f32.mrb[0].mxu0
        %717 = vmatprep.mubr.f32.mxu0 0.0
        %718 = vmatmul.mubr.f32.gmra.mrb[0].mxu0 %v549
        %v719 = vpop.f32.mrb[0].mxu0
        %v720 = vadd.f32 %v576, %v719
        %v721 = vpop.f32.mrb[0].mxu0
        %722 = vmatprep.mubr.f32.mxu0 0.0
        %723 = vmatmul.mubr.f32.gmra.mrb[0].mxu0 %v550
        %v724 = vpop.f32.mrb[0].mxu0
        %v725 = vadd.f32 %v576, %v724
        %v726 = vpop.f32.mrb[0].mxu0
        %727 = vmatprep.mubr.f32.mxu0 0.0
        %728 = vmatmul.mubr.f32.gmra.mrb[0].mxu0 %v551
        %v729 = vpop.f32.mrb[0].mxu0
        %v730 = vadd.f32 %v576, %v729
        %v731 = vpop.f32.mrb[0].mxu0
        %732 = vmatprep.mubr.f32.mxu0 0.0
        %733 = vmatmul.mubr.f32.gmra.mrb[0].mxu0 %v552
        %v734 = vpop.f32.mrb[0].mxu0
        %v735 = vadd.f32 %v576, %v734
        %v736 = vpop.f32.mrb[0].mxu0
        %737 = vmatprep.mubr.f32.mxu0 0.0
        %738 = vmatmul.mubr.f32.gmra.mrb[0].mxu0 %v553
        %v739 = vpop.f32.mrb[0].mxu0
        %v740 = vadd.f32 %v576, %v739
        %v741 = vpop.f32.mrb[0].mxu0
        %742 = vmatprep.mubr.f32.mxu0 0.0
        %743 = vmatmul.mubr.f32.gmra.mrb[0].mxu0 %v554
        %v744 = vpop.f32.mrb[0].mxu0
        %v745 = vadd.f32 %v576, %v744
        %v746 = vpop.f32.mrb[0].mxu0
        %747 = vdwg.mxu0
        %v748 = vtanh.pop %v645
        %v749 = vtanh.pop %v650
        %v750 = vtanh.pop %v655
        %v751 = vtanh.pop %v660
        %v752 = vtanh.pop %v665
        %v753 = vtanh.pop %v670
        %v754 = vtanh.pop %v675
        %v755 = vtanh.pop %v680
        %v756 = vtanh.pop %v685
        %v757 = vtanh.pop %v690
        %v758 = vtanh.pop %v695
        %v759 = vtanh.pop %v700
        %v760 = vtanh.pop %v705
        %v761 = vtanh.pop %v710
        %v762 = vtanh.pop %v715
        %v763 = vtanh.pop %v720
        %v764 = vtanh.pop %v725
        %v765 = vtanh.pop %v730
        %v766 = vtanh.pop %v735
        %v767 = vtanh.pop %v740
        %v768 = vtanh.pop %v745
        %v769 = vld [vmem:[%s3] sm:$0xff]
        %v770 = vld [vmem:[%s3 + $0x8] sm:$0xff]
        %v771 = vld [vmem:[%s3 + $0x10] sm:$0xff]
        %v772 = vld [vmem:[%s3 + $0x18] sm:$0xff]
        %v773 = vld [vmem:[%s3 + $0x20] sm:$0xff]
        %v774 = vld [vmem:[%s3 + $0x28] sm:$0xff]
        %v775 = vld [vmem:[%s3 + $0x30] sm:$0xff]
        %v776 = vld [vmem:[%s3 + $0x38] sm:$0xff]
        %v777 = vld [vmem:[%s3 + $0x40] sm:$0xff]
        %v778 = vld [vmem:[%s3 + $0x48] sm:$0xff]
        %v779 = vld [vmem:[%s3 + $0x50] sm:$0xff]
        %v780 = vld [vmem:[%s3 + $0x58] sm:$0xff]
        %v781 = vld [vmem:[%s3 + $0x60] sm:$0xff]
        %v782 = vld [vmem:[%s3 + $0x68] sm:$0xff]
        %v783 = vld [vmem:[%s3 + $0x70] sm:$0xff]
        %v784 = vld [vmem:[%s3 + $0x78] sm:$0xff]
        %785 = vmatprep.subr.mxu0 0.0
        %786 = vmatpush1.msra.mxu0 %v769
        %787 = vmatprep.subr.mxu0 0.0
        %788 = vmatpush1.msra.mxu0 %v770
        %789 = vmatprep.subr.mxu0 0.0
        %790 = vmatpush1.msra.mxu0 %v771
        %791 = vmatprep.subr.mxu0 0.0
        %792 = vmatpush1.msra.mxu0 %v772
        %793 = vmatprep.subr.mxu0 0.0
        %794 = vmatpush1.msra.mxu0 %v773
        %795 = vmatprep.subr.mxu0 0.0
        %796 = vmatpush1.msra.mxu0 %v774
        %797 = vmatprep.subr.mxu0 0.0
        %798 = vmatpush1.msra.mxu0 %v775
        %799 = vmatprep.subr.mxu0 0.0
        %800 = vmatpush1.msra.mxu0 %v776
        %801 = vmatprep.subr.mxu0 0.0
        %802 = vmatpush1.msra.mxu0 %v777
        %803 = vmatprep.subr.mxu0 0.0
        %804 = vmatpush1.msra.mxu0 %v778
        %805 = vmatprep.subr.mxu0 0.0
        %806 = vmatpush1.msra.mxu0 %v779
        %807 = vmatprep.subr.mxu0 0.0
        %808 = vmatpush1.msra.mxu0 %v780
        %809 = vmatprep.subr.mxu0 0.0
        %810 = vmatpush1.msra.mxu0 %v781
        %811 = vmatprep.subr.mxu0 0.0
        %812 = vmatpush1.msra.mxu0 %v782
        %813 = vmatprep.subr.mxu0 0.0
        %814 = vmatpush1.msra.mxu0 %v783
        %815 = vmatprep.subr.mxu0 0.0
        %816 = vmatpush1.msra.mxu0 %v784
        %817 = vmatprep.subr.mxu0 0.0
        %818 = vmatpush1.msra.mxu0 0.0
        %819 = vmatprep.subr.mxu0 0.0
        %820 = vmatpush1.msra.mxu0 0.0
        %821 = vmatprep.subr.mxu0 0.0
        %822 = vmatpush1.msra.mxu0 0.0
        %823 = vmatprep.subr.mxu0 0.0
        %824 = vmatpush1.msra.mxu0 0.0
        %825 = vmatprep.subr.mxu0 0.0
        %826 = vmatpush1.msra.mxu0 0.0
        %827 = vmatprep.subr.mxu0 0.0
        %828 = vmatpush1.msra.mxu0 0.0
        %829 = vmatprep.subr.mxu0 0.0
        %830 = vmatpush1.msra.mxu0 0.0
        %831 = vmatprep.subr.mxu0 0.0
        %832 = vmatpush1.msra.mxu0 0.0
        %833 = vmatprep.subr.mxu0 0.0
        %834 = vmatpush1.msra.mxu0 0.0
        %835 = vmatprep.subr.mxu0 0.0
        %836 = vmatpush1.msra.mxu0 0.0
        %837 = vmatprep.subr.mxu0 0.0
        %838 = vmatpush1.msra.mxu0 0.0
        %839 = vmatprep.subr.mxu0 0.0
        %840 = vmatpush1.msra.mxu0 0.0
        %841 = vmatprep.subr.mxu0 0.0
        %842 = vmatpush1.msra.mxu0 0.0
        %843 = vmatprep.subr.mxu0 0.0
        %844 = vmatpush1.msra.mxu0 0.0
        %845 = vmatprep.subr.mxu0 0.0
        %846 = vmatpush1.msra.mxu0 0.0
        %847 = vmatprep.subr.mxu0 0.0
        %848 = vmatpush1.msra.mxu0 0.0
        %849 = vmatprep.mubr.f32.mxu0 0.0
        %850 = vmatmul.mubr.f32.gmra.mrb[0].mxu0 %v748
        %v851 = vpop.f32.mrb[0].mxu0
        %v852 = vadd.f32 0.0, %v851
        %v853 = vpop.f32.mrb[0].mxu0
        %854 = vmatprep.mubr.f32.mxu0 0.0
        %855 = vmatmul.mubr.f32.gmra.mrb[0].mxu0 %v749
        %v856 = vpop.f32.mrb[0].mxu0
        %v857 = vadd.f32 0.0, %v856
        %v858 = vpop.f32.mrb[0].mxu0
        %859 = vmatprep.mubr.f32.mxu0 0.0
        %860 = vmatmul.mubr.f32.gmra.mrb[0].mxu0 %v750
        %v861 = vpop.f32.mrb[0].mxu0
        %v862 = vadd.f32 0.0, %v861
        %v863 = vpop.f32.mrb[0].mxu0
        %864 = vmatprep.mubr.f32.mxu0 0.0
        %865 = vmatmul.mubr.f32.gmra.mrb[0].mxu0 %v751
        %v866 = vpop.f32.mrb[0].mxu0
        %v867 = vadd.f32 0.0, %v866
        %v868 = vpop.f32.mrb[0].mxu0
        %869 = vmatprep.mubr.f32.mxu0 0.0
        %870 = vmatmul.mubr.f32.gmra.mrb[0].mxu0 %v752
        %v871 = vpop.f32.mrb[0].mxu0
        %v872 = vadd.f32 0.0, %v871
        %v873 = vpop.f32.mrb[0].mxu0
        %874 = vmatprep.mubr.f32.mxu0 0.0
        %875 = vmatmul.mubr.f32.gmra.mrb[0].mxu0 %v753
        %v876 = vpop.f32.mrb[0].mxu0
        %v877 = vadd.f32 0.0, %v876
        %v878 = vpop.f32.mrb[0].mxu0
        %879 = vmatprep.mubr.f32.mxu0 0.0
        %880 = vmatmul.mubr.f32.gmra.mrb[0].mxu0 %v754
        %v881 = vpop.f32.mrb[0].mxu0
        %v882 = vadd.f32 0.0, %v881
        %v883 = vpop.f32.mrb[0].mxu0
        %884 = vmatprep.mubr.f32.mxu0 0.0
        %885 = vmatmul.mubr.f32.gmra.mrb[0].mxu0 %v755
        %v886 = vpop.f32.mrb[0].mxu0
        %v887 = vadd.f32 0.0, %v886
        %v888 = vpop.f32.mrb[0].mxu0
        %889 = vmatprep.mubr.f32.mxu0 0.0
        %890 = vmatmul.mubr.f32.gmra.mrb[0].mxu0 %v756
        %v891 = vpop.f32.mrb[0].mxu0
        %v892 = vadd.f32 0.0, %v891
        %v893 = vpop.f32.mrb[0].mxu0
        %894 = vmatprep.mubr.f32.mxu0 0.0
        %895 = vmatmul.mubr.f32.gmra.mrb[0].mxu0 %v757
        %v896 = vpop.f32.mrb[0].mxu0
        %v897 = vadd.f32 0.0, %v896
        %v898 = vpop.f32.mrb[0].mxu0
        %899 = vmatprep.mubr.f32.mxu0 0.0
        %900 = vmatmul.mubr.f32.gmra.mrb[0].mxu0 %v758
        %v901 = vpop.f32.mrb[0].mxu0
        %v902 = vadd.f32 0.0, %v901
        %v903 = vpop.f32.mrb[0].mxu0
        %904 = vmatprep.mubr.f32.mxu0 0.0
        %905 = vmatmul.mubr.f32.gmra.mrb[0].mxu0 %v759
        %v906 = vpop.f32.mrb[0].mxu0
        %v907 = vadd.f32 0.0, %v906
        %v908 = vpop.f32.mrb[0].mxu0
        %909 = vmatprep.mubr.f32.mxu0 0.0
        %910 = vmatmul.mubr.f32.gmra.mrb[0].mxu0 %v760
        %v911 = vpop.f32.mrb[0].mxu0
        %v912 = vadd.f32 0.0, %v911
        %v913 = vpop.f32.mrb[0].mxu0
        %914 = vmatprep.mubr.f32.mxu0 0.0
        %915 = vmatmul.mubr.f32.gmra.mrb[0].mxu0 %v761
        %v916 = vpop.f32.mrb[0].mxu0
        %v917 = vadd.f32 0.0, %v916
        %v918 = vpop.f32.mrb[0].mxu0
        %919 = vmatprep.mubr.f32.mxu0 0.0
        %920 = vmatmul.mubr.f32.gmra.mrb[0].mxu0 %v762
        %v921 = vpop.f32.mrb[0].mxu0
        %v922 = vadd.f32 0.0, %v921
        %v923 = vpop.f32.mrb[0].mxu0
        %924 = vmatprep.mubr.f32.mxu0 0.0
        %925 = vmatmul.mubr.f32.gmra.mrb[0].mxu0 %v763
        %v926 = vpop.f32.mrb[0].mxu0
        %v927 = vadd.f32 0.0, %v926
        %v928 = vpop.f32.mrb[0].mxu0
        %929 = vmatprep.mubr.f32.mxu0 0.0
        %930 = vmatmul.mubr.f32.gmra.mrb[0].mxu0 %v764
        %v931 = vpop.f32.mrb[0].mxu0
        %v932 = vadd.f32 0.0, %v931
        %v933 = vpop.f32.mrb[0].mxu0
        %934 = vmatprep.mubr.f32.mxu0 0.0
        %935 = vmatmul.mubr.f32.gmra.mrb[0].mxu0 %v765
        %v936 = vpop.f32.mrb[0].mxu0
        %v937 = vadd.f32 0.0, %v936
        %v938 = vpop.f32.mrb[0].mxu0
        %939 = vmatprep.mubr.f32.mxu0 0.0
        %940 = vmatmul.mubr.f32.gmra.mrb[0].mxu0 %v766
        %v941 = vpop.f32.mrb[0].mxu0
        %v942 = vadd.f32 0.0, %v941
        %v943 = vpop.f32.mrb[0].mxu0
        %944 = vmatprep.mubr.f32.mxu0 0.0
        %945 = vmatmul.mubr.f32.gmra.mrb[0].mxu0 %v767
        %v946 = vpop.f32.mrb[0].mxu0
        %v947 = vadd.f32 0.0, %v946
        %v948 = vpop.f32.mrb[0].mxu0
        %949 = vmatprep.mubr.f32.mxu0 0.0
        %950 = vmatmul.mubr.f32.gmra.mrb[0].mxu0 %v768
        %v951 = vpop.f32.mrb[0].mxu0
        %v952 = vadd.f32 0.0, %v951
        %v953 = vpop.f32.mrb[0].mxu0
        %954 = vdwg.mxu0
        %vm955 = vcmask 23552
        %v956 = vsel %vm955, %v852, -inf
        %957 = vmax.xlane.f32.xlu0 %v956
        %v958 = vpop.xlane.xlu0 %957
        %v959 = vsel %vm955, %v857, -inf
        %960 = vmax.xlane.f32.xlu0 %v959
        %v961 = vpop.xlane.xlu0 %960
        %v962 = vsel %vm955, %v862, -inf
        %963 = vmax.xlane.f32.xlu0 %v962
        %v964 = vpop.xlane.xlu0 %963
        %v965 = vsel %vm955, %v867, -inf
        %966 = vmax.xlane.f32.xlu0 %v965
        %v967 = vpop.xlane.xlu0 %966
        %v968 = vsel %vm955, %v872, -inf
        %969 = vmax.xlane.f32.xlu0 %v968
        %v970 = vpop.xlane.xlu0 %969
        %v971 = vsel %vm955, %v877, -inf
        %972 = vmax.xlane.f32.xlu0 %v971
        %v973 = vpop.xlane.xlu0 %972
        %v974 = vsel %vm955, %v882, -inf
        %975 = vmax.xlane.f32.xlu0 %v974
        %v976 = vpop.xlane.xlu0 %975
        %v977 = vsel %vm955, %v887, -inf
        %978 = vmax.xlane.f32.xlu0 %v977
        %v979 = vpop.xlane.xlu0 %978
        %v980 = vsel %vm955, %v892, -inf
        %981 = vmax.xlane.f32.xlu0 %v980
        %v982 = vpop.xlane.xlu0 %981
        %v983 = vsel %vm955, %v897, -inf
        %984 = vmax.xlane.f32.xlu0 %v983
        %v985 = vpop.xlane.xlu0 %984
        %v986 = vsel %vm955, %v902, -inf
        %987 = vmax.xlane.f32.xlu0 %v986
        %v988 = vpop.xlane.xlu0 %987
        %v989 = vsel %vm955, %v907, -inf
        %990 = vmax.xlane.f32.xlu0 %v989
        %v991 = vpop.xlane.xlu0 %990
        %v992 = vsel %vm955, %v912, -inf
        %993 = vmax.xlane.f32.xlu0 %v992
        %v994 = vpop.xlane.xlu0 %993
        %v995 = vsel %vm955, %v917, -inf
        %996 = vmax.xlane.f32.xlu0 %v995
        %v997 = vpop.xlane.xlu0 %996
        %v998 = vsel %vm955, %v922, -inf
        %999 = vmax.xlane.f32.xlu0 %v998
        %v1000 = vpop.xlane.xlu0 %999
        %v1001 = vsel %vm955, %v927, -inf
        %1002 = vmax.xlane.f32.xlu0 %v1001
        %v1003 = vpop.xlane.xlu0 %1002
        %v1004 = vsel %vm955, %v932, -inf
        %1005 = vmax.xlane.f32.xlu0 %v1004
        %v1006 = vpop.xlane.xlu0 %1005
        %v1007 = vsel %vm955, %v937, -inf
        %1008 = vmax.xlane.f32.xlu0 %v1007
        %v1009 = vpop.xlane.xlu0 %1008
        %v1010 = vsel %vm955, %v942, -inf
        %1011 = vmax.xlane.f32.xlu0 %v1010
        %v1012 = vpop.xlane.xlu0 %1011
        %v1013 = vsel %vm955, %v947, -inf
        %1014 = vmax.xlane.f32.xlu0 %v1013
        %v1015 = vpop.xlane.xlu0 %1014
        %v1016 = vsel %vm955, %v952, -inf
        %1017 = vmax.xlane.f32.xlu0 %v1016
        %v1018 = vpop.xlane.xlu0 %1017
        %v1019 = vsub.f32 %v852, %v958
        %v1020 = vsub.f32 %v857, %v961
        %v1021 = vsub.f32 %v862, %v964
        %v1022 = vsub.f32 %v867, %v967
        %v1023 = vsub.f32 %v872, %v970
        %v1024 = vsub.f32 %v877, %v973
        %v1025 = vsub.f32 %v882, %v976
        %v1026 = vsub.f32 %v887, %v979
        %v1027 = vsub.f32 %v892, %v982
        %v1028 = vsub.f32 %v897, %v985
        %v1029 = vsub.f32 %v902, %v988
        %v1030 = vsub.f32 %v907, %v991
        %v1031 = vsub.f32 %v912, %v994
        %v1032 = vsub.f32 %v917, %v997
        %v1033 = vsub.f32 %v922, %v1000
        %v1034 = vsub.f32 %v927, %v1003
        %v1035 = vsub.f32 %v932, %v1006
        %v1036 = vsub.f32 %v937, %v1009
        %v1037 = vsub.f32 %v942, %v1012
        %v1038 = vsub.f32 %v947, %v1015
        %v1039 = vsub.f32 %v952, %v1018
        %v1040 = vmul.f32 %v1019, 1.442695
        %v1041 = vpow.pop %v1040
        %v1042 = vmul.f32 %v1020, 1.442695
        %v1043 = vpow.pop %v1042
        %v1044 = vmul.f32 %v1021, 1.442695
        %v1045 = vpow.pop %v1044
        %v1046 = vmul.f32 %v1022, 1.442695
        %v1047 = vpow.pop %v1046
        %v1048 = vmul.f32 %v1023, 1.442695
        %v1049 = vpow.pop %v1048
        %v1050 = vmul.f32 %v1024, 1.442695
        %v1051 = vpow.pop %v1050
        %v1052 = vmul.f32 %v1025, 1.442695
        %v1053 = vpow.pop %v1052
        %v1054 = vmul.f32 %v1026, 1.442695
        %v1055 = vpow.pop %v1054
        %v1056 = vmul.f32 %v1027, 1.442695
        %v1057 = vpow.pop %v1056
        %v1058 = vmul.f32 %v1028, 1.442695
        %v1059 = vpow.pop %v1058
        %v1060 = vmul.f32 %v1029, 1.442695
        %v1061 = vpow.pop %v1060
        %v1062 = vmul.f32 %v1030, 1.442695
        %v1063 = vpow.pop %v1062
        %v1064 = vmul.f32 %v1031, 1.442695
        %v1065 = vpow.pop %v1064
        %v1066 = vmul.f32 %v1032, 1.442695
        %v1067 = vpow.pop %v1066
        %v1068 = vmul.f32 %v1033, 1.442695
        %v1069 = vpow.pop %v1068
        %v1070 = vmul.f32 %v1034, 1.442695
        %v1071 = vpow.pop %v1070
        %v1072 = vmul.f32 %v1035, 1.442695
        %v1073 = vpow.pop %v1072
        %v1074 = vmul.f32 %v1036, 1.442695
        %v1075 = vpow.pop %v1074
        %v1076 = vmul.f32 %v1037, 1.442695
        %v1077 = vpow.pop %v1076
        %v1078 = vmul.f32 %v1038, 1.442695
        %v1079 = vpow.pop %v1078
        %v1080 = vmul.f32 %v1039, 1.442695
        %v1081 = vpow.pop %v1080
        %v1082 = vsel %vm955, %v1041, 0.0
        %1083 = vadd.xlane.f32.xlu0 %v1082
        %v1084 = vpop.xlane.xlu0 %1083
        %v1085 = vsel %vm955, %v1043, 0.0
        %1086 = vadd.xlane.f32.xlu0 %v1085
        %v1087 = vpop.xlane.xlu0 %1086
        %v1088 = vsel %vm955, %v1045, 0.0
        %1089 = vadd.xlane.f32.xlu0 %v1088
        %v1090 = vpop.xlane.xlu0 %1089
        %v1091 = vsel %vm955, %v1047, 0.0
        %1092 = vadd.xlane.f32.xlu0 %v1091
        %v1093 = vpop.xlane.xlu0 %1092
        %v1094 = vsel %vm955, %v1049, 0.0
        %1095 = vadd.xlane.f32.xlu0 %v1094
        %v1096 = vpop.xlane.xlu0 %1095
        %v1097 = vsel %vm955, %v1051, 0.0
        %1098 = vadd.xlane.f32.xlu0 %v1097
        %v1099 = vpop.xlane.xlu0 %1098
        %v1100 = vsel %vm955, %v1053, 0.0
        %1101 = vadd.xlane.f32.xlu0 %v1100
        %v1102 = vpop.xlane.xlu0 %1101
        %v1103 = vsel %vm955, %v1055, 0.0
        %1104 = vadd.xlane.f32.xlu0 %v1103
        %v1105 = vpop.xlane.xlu0 %1104
        %v1106 = vsel %vm955, %v1057, 0.0
        %1107 = vadd.xlane.f32.xlu0 %v1106
        %v1108 = vpop.xlane.xlu0 %1107
        %v1109 = vsel %vm955, %v1059, 0.0
        %1110 = vadd.xlane.f32.xlu0 %v1109
        %v1111 = vpop.xlane.xlu0 %1110
        %v1112 = vsel %vm955, %v1061, 0.0
        %1113 = vadd.xlane.f32.xlu0 %v1112
        %v1114 = vpop.xlane.xlu0 %1113
        %v1115 = vsel %vm955, %v1063, 0.0
        %1116 = vadd.xlane.f32.xlu0 %v1115
        %v1117 = vpop.xlane.xlu0 %1116
        %v1118 = vsel %vm955, %v1065, 0.0
        %1119 = vadd.xlane.f32.xlu0 %v1118
        %v1120 = vpop.xlane.xlu0 %1119
        %v1121 = vsel %vm955, %v1067, 0.0
        %1122 = vadd.xlane.f32.xlu0 %v1121
        %v1123 = vpop.xlane.xlu0 %1122
        %v1124 = vsel %vm955, %v1069, 0.0
        %1125 = vadd.xlane.f32.xlu0 %v1124
        %v1126 = vpop.xlane.xlu0 %1125
        %v1127 = vsel %vm955, %v1071, 0.0
        %1128 = vadd.xlane.f32.xlu0 %v1127
        %v1129 = vpop.xlane.xlu0 %1128
        %v1130 = vsel %vm955, %v1073, 0.0
        %1131 = vadd.xlane.f32.xlu0 %v1130
        %v1132 = vpop.xlane.xlu0 %1131
        %v1133 = vsel %vm955, %v1075, 0.0
        %1134 = vadd.xlane.f32.xlu0 %v1133
        %v1135 = vpop.xlane.xlu0 %1134
        %v1136 = vsel %vm955, %v1077, 0.0
        %1137 = vadd.xlane.f32.xlu0 %v1136
        %v1138 = vpop.xlane.xlu0 %1137
        %v1139 = vsel %vm955, %v1079, 0.0
        %1140 = vadd.xlane.f32.xlu0 %v1139
        %v1141 = vpop.xlane.xlu0 %1140
        %v1142 = vsel %vm955, %v1081, 0.0
        %1143 = vadd.xlane.f32.xlu0 %v1142
        %v1144 = vpop.xlane.xlu0 %1143
        %v1145 = vrcp.pop %v1084
        %v1146 = vrcp.pop %v1087
        %v1147 = vrcp.pop %v1090
        %v1148 = vrcp.pop %v1093
        %v1149 = vrcp.pop %v1096
        %v1150 = vrcp.pop %v1099
        %v1151 = vrcp.pop %v1102
        %v1152 = vrcp.pop %v1105
        %v1153 = vrcp.pop %v1108
        %v1154 = vrcp.pop %v1111
        %v1155 = vrcp.pop %v1114
        %v1156 = vrcp.pop %v1117
        %v1157 = vrcp.pop %v1120
        %v1158 = vrcp.pop %v1123
        %v1159 = vrcp.pop %v1126
        %v1160 = vrcp.pop %v1129
        %v1161 = vrcp.pop %v1132
        %v1162 = vrcp.pop %v1135
        %v1163 = vrcp.pop %v1138
        %v1164 = vrcp.pop %v1141
        %v1165 = vrcp.pop %v1144
        %v1166 = vmul.f32 %v1084, %v1145
        %v1167 = vmul.f32 %v1087, %v1146
        %v1168 = vmul.f32 %v1090, %v1147
        %v1169 = vmul.f32 %v1093, %v1148
        %v1170 = vmul.f32 %v1096, %v1149
        %v1171 = vmul.f32 %v1099, %v1150
        %v1172 = vmul.f32 %v1102, %v1151
        %v1173 = vmul.f32 %v1105, %v1152
        %v1174 = vmul.f32 %v1108, %v1153
        %v1175 = vmul.f32 %v1111, %v1154
        %v1176 = vmul.f32 %v1114, %v1155
        %v1177 = vmul.f32 %v1117, %v1156
        %v1178 = vmul.f32 %v1120, %v1157
        %v1179 = vmul.f32 %v1123, %v1158
        %v1180 = vmul.f32 %v1126, %v1159
        %v1181 = vmul.f32 %v1129, %v1160
        %v1182 = vmul.f32 %v1132, %v1161
        %v1183 = vmul.f32 %v1135, %v1162
        %v1184 = vmul.f32 %v1138, %v1163
        %v1185 = vmul.f32 %v1141, %v1164
        %v1186 = vmul.f32 %v1144, %v1165
        %v1187 = vsub.f32 2.0, %v1166
        %v1188 = vsub.f32 2.0, %v1167
        %v1189 = vsub.f32 2.0, %v1168
        %v1190 = vsub.f32 2.0, %v1169
        %v1191 = vsub.f32 2.0, %v1170
        %v1192 = vsub.f32 2.0, %v1171
        %v1193 = vsub.f32 2.0, %v1172
        %v1194 = vsub.f32 2.0, %v1173
        %v1195 = vsub.f32 2.0, %v1174
        %v1196 = vsub.f32 2.0, %v1175
        %v1197 = vsub.f32 2.0, %v1176
        %v1198 = vsub.f32 2.0, %v1177
        %v1199 = vsub.f32 2.0, %v1178
        %v1200 = vsub.f32 2.0, %v1179
        %v1201 = vsub.f32 2.0, %v1180
        %v1202 = vsub.f32 2.0, %v1181
        %v1203 = vsub.f32 2.0, %v1182
        %v1204 = vsub.f32 2.0, %v1183
        %v1205 = vsub.f32 2.0, %v1184
        %v1206 = vsub.f32 2.0, %v1185
        %v1207 = vsub.f32 2.0, %v1186
        %v1208 = vmul.f32 %v1145, %v1187
        %v1209 = vmul.f32 %v1146, %v1188
        %v1210 = vmul.f32 %v1147, %v1189
        %v1211 = vmul.f32 %v1148, %v1190
        %v1212 = vmul.f32 %v1149, %v1191
        %v1213 = vmul.f32 %v1150, %v1192
        %v1214 = vmul.f32 %v1151, %v1193
        %v1215 = vmul.f32 %v1152, %v1194
        %v1216 = vmul.f32 %v1153, %v1195
        %v1217 = vmul.f32 %v1154, %v1196
        %v1218 = vmul.f32 %v1155, %v1197
        %v1219 = vmul.f32 %v1156, %v1198
        %v1220 = vmul.f32 %v1157, %v1199
        %v1221 = vmul.f32 %v1158, %v1200
        %v1222 = vmul.f32 %v1159, %v1201
        %v1223 = vmul.f32 %v1160, %v1202
        %v1224 = vmul.f32 %v1161, %v1203
        %v1225 = vmul.f32 %v1162, %v1204
        %v1226 = vmul.f32 %v1163, %v1205
        %v1227 = vmul.f32 %v1164, %v1206
        %v1228 = vmul.f32 %v1165, %v1207
        %v1229 = vmul.f32 %v1041, %v1208
        %v1230 = vmul.f32 %v1043, %v1209
        %v1231 = vmul.f32 %v1045, %v1210
        %v1232 = vmul.f32 %v1047, %v1211
        %v1233 = vmul.f32 %v1049, %v1212
        %v1234 = vmul.f32 %v1051, %v1213
        %v1235 = vmul.f32 %v1053, %v1214
        %v1236 = vmul.f32 %v1055, %v1215
        %v1237 = vmul.f32 %v1057, %v1216
        %v1238 = vmul.f32 %v1059, %v1217
        %v1239 = vmul.f32 %v1061, %v1218
        %v1240 = vmul.f32 %v1063, %v1219
        %v1241 = vmul.f32 %v1065, %v1220
        %v1242 = vmul.f32 %v1067, %v1221
        %v1243 = vmul.f32 %v1069, %v1222
        %v1244 = vmul.f32 %v1071, %v1223
        %v1245 = vmul.f32 %v1073, %v1224
        %v1246 = vmul.f32 %v1075, %v1225
        %v1247 = vmul.f32 %v1077, %v1226
        %v1248 = vmul.f32 %v1079, %v1227
        %v1249 = vmul.f32 %v1081, %v1228
        %1250 = vst.msk [vmem:[%s233] sm:$0xff] %vm955, %v1229
        %1251 = vst.msk [vmem:[%s233 + $0x8] sm:$0xff] %vm955, %v1230
        %1252 = vst.msk [vmem:[%s233 + $0x10] sm:$0xff] %vm955, %v1231
        %1253 = vst.msk [vmem:[%s233 + $0x18] sm:$0xff] %vm955, %v1232
        %1254 = vst.msk [vmem:[%s233 + $0x20] sm:$0xff] %vm955, %v1233
        %1255 = vst.msk [vmem:[%s233 + $0x28] sm:$0xff] %vm955, %v1234
        %1256 = vst.msk [vmem:[%s233 + $0x30] sm:$0xff] %vm955, %v1235
        %1257 = vst.msk [vmem:[%s233 + $0x38] sm:$0xff] %vm955, %v1236
        %1258 = vst.msk [vmem:[%s233 + $0x40] sm:$0xff] %vm955, %v1237
        %1259 = vst.msk [vmem:[%s233 + $0x48] sm:$0xff] %vm955, %v1238
        %1260 = vst.msk [vmem:[%s233 + $0x50] sm:$0xff] %vm955, %v1239
        %1261 = vst.msk [vmem:[%s233 + $0x58] sm:$0xff] %vm955, %v1240
        %1262 = vst.msk [vmem:[%s233 + $0x60] sm:$0xff] %vm955, %v1241
        %1263 = vst.msk [vmem:[%s233 + $0x68] sm:$0xff] %vm955, %v1242
        %1264 = vst.msk [vmem:[%s233 + $0x70] sm:$0xff] %vm955, %v1243
        %1265 = vst.msk [vmem:[%s233 + $0x78] sm:$0xff] %vm955, %v1244
        %1266 = vst.msk [vmem:[%s233 + $0x80] sm:$0xff] %vm955, %v1245
        %1267 = vst.msk [vmem:[%s233 + $0x88] sm:$0xff] %vm955, %v1246
        %1268 = vst.msk [vmem:[%s233 + $0x90] sm:$0xff] %vm955, %v1247
        %1269 = vst.msk [vmem:[%s233 + $0x98] sm:$0xff] %vm955, %v1248
        %1270 = vst.msk [vmem:[%s233 + $0xa0] sm:$0xff] %vm955, %v1249
        %v1271 = vrot.slane %v280, 7
        %v1272 = vrot.slane %v281, 7
        %v1273 = vrot.slane %v282, 7
        %v1274 = vrot.slane %v283, 7
        %v1275 = vrot.slane %v284, 7
        %v1276 = vrot.slane %v285, 7
        %v1277 = vrot.slane %v286, 7
        %v1278 = vrot.slane %v287, 7
        %v1279 = vrot.slane %v288, 7
        %v1280 = vrot.slane %v289, 7
        %v1281 = vrot.slane %v290, 7
        %v1282 = vrot.slane %v291, 7
        %v1283 = vrot.slane %v292, 7
        %v1284 = vrot.slane %v293, 7
        %v1285 = vrot.slane %v294, 7
        %v1286 = vrot.slane %v295, 7
        %v1287 = vrot.slane %v296, 7
        %v1288 = vrot.slane %v297, 7
        %v1289 = vrot.slane %v298, 7
        %v1290 = vrot.slane %v299, 7
        %v1291 = vrot.slane %v300, 7
        %vm1292 = vcmp.lt.s32.totalorder %v259, 1
        %v1293 = vsel %vm1292, %v1290, %v1291
        %v1294 = vsel %vm1292, %v1289, %v1290
        %v1295 = vsel %vm1292, %v1288, %v1289
        %v1296 = vsel %vm1292, %v1287, %v1288
        %v1297 = vsel %vm1292, %v1286, %v1287
        %v1298 = vsel %vm1292, %v1285, %v1286
        %v1299 = vsel %vm1292, %v1284, %v1285
        %v1300 = vsel %vm1292, %v1283, %v1284
        %v1301 = vsel %vm1292, %v1282, %v1283
        %v1302 = vsel %vm1292, %v1281, %v1282
        %v1303 = vsel %vm1292, %v1280, %v1281
        %v1304 = vsel %vm1292, %v1279, %v1280
        %v1305 = vsel %vm1292, %v1278, %v1279
        %v1306 = vsel %vm1292, %v1277, %v1278
        %v1307 = vsel %vm1292, %v1276, %v1277
        %v1308 = vsel %vm1292, %v1275, %v1276
        %v1309 = vsel %vm1292, %v1274, %v1275
        %v1310 = vsel %vm1292, %v1273, %v1274
        %v1311 = vsel %vm1292, %v1272, %v1273
        %v1312 = vsel %vm1292, %v1271, %v1272
        %v1313 = vsel %vm1292, %v1291, %v1271
        %v1314 = vmul.f32 %v1313, 0.33333334
        %v1315 = vmul.f32 %v1312, 0.33333334
        %v1316 = vmul.f32 %v1311, 0.33333334
        %v1317 = vmul.f32 %v1310, 0.33333334
        %v1318 = vmul.f32 %v1309, 0.33333334
        %v1319 = vmul.f32 %v1308, 0.33333334
        %v1320 = vmul.f32 %v1307, 0.33333334
        %v1321 = vmul.f32 %v1306, 0.33333334
        %v1322 = vmul.f32 %v1305, 0.33333334
        %v1323 = vmul.f32 %v1304, 0.33333334
        %v1324 = vmul.f32 %v1303, 0.33333334
        %v1325 = vmul.f32 %v1302, 0.33333334
        %v1326 = vmul.f32 %v1301, 0.33333334
        %v1327 = vmul.f32 %v1300, 0.33333334
        %v1328 = vmul.f32 %v1299, 0.33333334
        %v1329 = vmul.f32 %v1298, 0.33333334
        %v1330 = vmul.f32 %v1297, 0.33333334
        %v1331 = vmul.f32 %v1296, 0.33333334
        %v1332 = vmul.f32 %v1295, 0.33333334
        %v1333 = vmul.f32 %v1294, 0.33333334
        %v1334 = vmul.f32 %v1293, 0.33333334
        %v1335 = vfloor.f32 %v1314
        %v1336 = vfloor.f32 %v1315
        %v1337 = vfloor.f32 %v1316
        %v1338 = vfloor.f32 %v1317
        %v1339 = vfloor.f32 %v1318
        %v1340 = vfloor.f32 %v1319
        %v1341 = vfloor.f32 %v1320
        %v1342 = vfloor.f32 %v1321
        %v1343 = vfloor.f32 %v1322
        %v1344 = vfloor.f32 %v1323
        %v1345 = vfloor.f32 %v1324
        %v1346 = vfloor.f32 %v1325
        %v1347 = vfloor.f32 %v1326
        %v1348 = vfloor.f32 %v1327
        %v1349 = vfloor.f32 %v1328
        %v1350 = vfloor.f32 %v1329
        %v1351 = vfloor.f32 %v1330
        %v1352 = vfloor.f32 %v1331
        %v1353 = vfloor.f32 %v1332
        %v1354 = vfloor.f32 %v1333
        %v1355 = vfloor.f32 %v1334
        %v1356 = vmul.f32 %v1335, 3.0
        %v1357 = vmul.f32 %v1336, 3.0
        %v1358 = vmul.f32 %v1337, 3.0
        %v1359 = vmul.f32 %v1338, 3.0
        %v1360 = vmul.f32 %v1339, 3.0
        %v1361 = vmul.f32 %v1340, 3.0
        %v1362 = vmul.f32 %v1341, 3.0
        %v1363 = vmul.f32 %v1342, 3.0
        %v1364 = vmul.f32 %v1343, 3.0
        %v1365 = vmul.f32 %v1344, 3.0
        %v1366 = vmul.f32 %v1345, 3.0
        %v1367 = vmul.f32 %v1346, 3.0
        %v1368 = vmul.f32 %v1347, 3.0
        %v1369 = vmul.f32 %v1348, 3.0
        %v1370 = vmul.f32 %v1349, 3.0
        %v1371 = vmul.f32 %v1350, 3.0
        %v1372 = vmul.f32 %v1351, 3.0
        %v1373 = vmul.f32 %v1352, 3.0
        %v1374 = vmul.f32 %v1353, 3.0
        %v1375 = vmul.f32 %v1354, 3.0
        %v1376 = vmul.f32 %v1355, 3.0
        %v1377 = vsub.f32 %v1313, %v1356
        %v1378 = vsub.f32 %v1312, %v1357
        %v1379 = vsub.f32 %v1311, %v1358
        %v1380 = vsub.f32 %v1310, %v1359
        %v1381 = vsub.f32 %v1309, %v1360
        %v1382 = vsub.f32 %v1308, %v1361
        %v1383 = vsub.f32 %v1307, %v1362
        %v1384 = vsub.f32 %v1306, %v1363
        %v1385 = vsub.f32 %v1305, %v1364
        %v1386 = vsub.f32 %v1304, %v1365
        %v1387 = vsub.f32 %v1303, %v1366
        %v1388 = vsub.f32 %v1302, %v1367
        %v1389 = vsub.f32 %v1301, %v1368
        %v1390 = vsub.f32 %v1300, %v1369
        %v1391 = vsub.f32 %v1299, %v1370
        %v1392 = vsub.f32 %v1298, %v1371
        %v1393 = vsub.f32 %v1297, %v1372
        %v1394 = vsub.f32 %v1296, %v1373
        %v1395 = vsub.f32 %v1295, %v1374
        %v1396 = vsub.f32 %v1294, %v1375
        %v1397 = vsub.f32 %v1293, %v1376
        %v1398 = vcvt.f32.s32.to.zero.pseudo %v1377
        %v1399 = vcvt.f32.s32.to.zero.pseudo %v1378
        %v1400 = vcvt.f32.s32.to.zero.pseudo %v1379
        %v1401 = vcvt.f32.s32.to.zero.pseudo %v1380
        %v1402 = vcvt.f32.s32.to.zero.pseudo %v1381
        %v1403 = vcvt.f32.s32.to.zero.pseudo %v1382
        %v1404 = vcvt.f32.s32.to.zero.pseudo %v1383
        %v1405 = vcvt.f32.s32.to.zero.pseudo %v1384
        %v1406 = vcvt.f32.s32.to.zero.pseudo %v1385
        %v1407 = vcvt.f32.s32.to.zero.pseudo %v1386
        %v1408 = vcvt.f32.s32.to.zero.pseudo %v1387
        %v1409 = vcvt.f32.s32.to.zero.pseudo %v1388
        %v1410 = vcvt.f32.s32.to.zero.pseudo %v1389
        %v1411 = vcvt.f32.s32.to.zero.pseudo %v1390
        %v1412 = vcvt.f32.s32.to.zero.pseudo %v1391
        %v1413 = vcvt.f32.s32.to.zero.pseudo %v1392
        %v1414 = vcvt.f32.s32.to.zero.pseudo %v1393
        %v1415 = vcvt.f32.s32.to.zero.pseudo %v1394
        %v1416 = vcvt.f32.s32.to.zero.pseudo %v1395
        %v1417 = vcvt.f32.s32.to.zero.pseudo %v1396
        %v1418 = vcvt.f32.s32.to.zero.pseudo %v1397
        %v1419 = vcvt.f32.s32.to.zero.pseudo %v1335
        %v1420 = vcvt.f32.s32.to.zero.pseudo %v1336
        %v1421 = vcvt.f32.s32.to.zero.pseudo %v1337
        %v1422 = vcvt.f32.s32.to.zero.pseudo %v1338
        %v1423 = vcvt.f32.s32.to.zero.pseudo %v1339
        %v1424 = vcvt.f32.s32.to.zero.pseudo %v1340
        %v1425 = vcvt.f32.s32.to.zero.pseudo %v1341
        %v1426 = vcvt.f32.s32.to.zero.pseudo %v1342
        %v1427 = vcvt.f32.s32.to.zero.pseudo %v1343
        %v1428 = vcvt.f32.s32.to.zero.pseudo %v1344
        %v1429 = vcvt.f32.s32.to.zero.pseudo %v1345
        %v1430 = vcvt.f32.s32.to.zero.pseudo %v1346
        %v1431 = vcvt.f32.s32.to.zero.pseudo %v1347
        %v1432 = vcvt.f32.s32.to.zero.pseudo %v1348
        %v1433 = vcvt.f32.s32.to.zero.pseudo %v1349
        %v1434 = vcvt.f32.s32.to.zero.pseudo %v1350
        %v1435 = vcvt.f32.s32.to.zero.pseudo %v1351
        %v1436 = vcvt.f32.s32.to.zero.pseudo %v1352
        %v1437 = vcvt.f32.s32.to.zero.pseudo %v1353
        %v1438 = vcvt.f32.s32.to.zero.pseudo %v1354
        %v1439 = vcvt.f32.s32.to.zero.pseudo %v1355
        %vm1440 = vcmp.eq.s32.totalorder %v1419, %v406
        %vm1441 = vcmp.eq.s32.totalorder %v1420, %v407
        %vm1442 = vcmp.eq.s32.totalorder %v1421, %v408
        %vm1443 = vcmp.eq.s32.totalorder %v1422, %v409
        %vm1444 = vcmp.eq.s32.totalorder %v1423, %v410
        %vm1445 = vcmp.eq.s32.totalorder %v1424, %v411
        %vm1446 = vcmp.eq.s32.totalorder %v1425, %v412
        %vm1447 = vcmp.eq.s32.totalorder %v1426, %v413
        %vm1448 = vcmp.eq.s32.totalorder %v1427, %v414
        %vm1449 = vcmp.eq.s32.totalorder %v1428, %v415
        %vm1450 = vcmp.eq.s32.totalorder %v1429, %v416
        %vm1451 = vcmp.eq.s32.totalorder %v1430, %v417
        %vm1452 = vcmp.eq.s32.totalorder %v1431, %v418
        %vm1453 = vcmp.eq.s32.totalorder %v1432, %v419
        %vm1454 = vcmp.eq.s32.totalorder %v1433, %v420
        %vm1455 = vcmp.eq.s32.totalorder %v1434, %v421
        %vm1456 = vcmp.eq.s32.totalorder %v1435, %v422
        %vm1457 = vcmp.eq.s32.totalorder %v1436, %v423
        %vm1458 = vcmp.eq.s32.totalorder %v1437, %v424
        %vm1459 = vcmp.eq.s32.totalorder %v1438, %v425
        %vm1460 = vcmp.eq.s32.totalorder %v1439, %v426
        %vm1461 = vcmp.eq.s32.totalorder %v1398, 0
        %vm1462 = vcmp.eq.s32.totalorder %v1399, 0
        %vm1463 = vcmp.eq.s32.totalorder %v1400, 0
        %vm1464 = vcmp.eq.s32.totalorder %v1401, 0
        %vm1465 = vcmp.eq.s32.totalorder %v1402, 0
        %vm1466 = vcmp.eq.s32.totalorder %v1403, 0
        %vm1467 = vcmp.eq.s32.totalorder %v1404, 0
        %vm1468 = vcmp.eq.s32.totalorder %v1405, 0
        %vm1469 = vcmp.eq.s32.totalorder %v1406, 0
        %vm1470 = vcmp.eq.s32.totalorder %v1407, 0
        %vm1471 = vcmp.eq.s32.totalorder %v1408, 0
        %vm1472 = vcmp.eq.s32.totalorder %v1409, 0
        %vm1473 = vcmp.eq.s32.totalorder %v1410, 0
        %vm1474 = vcmp.eq.s32.totalorder %v1411, 0
        %vm1475 = vcmp.eq.s32.totalorder %v1412, 0
        %vm1476 = vcmp.eq.s32.totalorder %v1413, 0
        %vm1477 = vcmp.eq.s32.totalorder %v1414, 0
        %vm1478 = vcmp.eq.s32.totalorder %v1415, 0
        %vm1479 = vcmp.eq.s32.totalorder %v1416, 0
        %vm1480 = vcmp.eq.s32.totalorder %v1417, 0
        %vm1481 = vcmp.eq.s32.totalorder %v1418, 0
        %vm1482 = vcmp.eq.s32.totalorder %v1398, 1
        %vm1483 = vcmp.eq.s32.totalorder %v1399, 1
        %vm1484 = vcmp.eq.s32.totalorder %v1400, 1
        %vm1485 = vcmp.eq.s32.totalorder %v1401, 1
        %vm1486 = vcmp.eq.s32.totalorder %v1402, 1
        %vm1487 = vcmp.eq.s32.totalorder %v1403, 1
        %vm1488 = vcmp.eq.s32.totalorder %v1404, 1
        %vm1489 = vcmp.eq.s32.totalorder %v1405, 1
        %vm1490 = vcmp.eq.s32.totalorder %v1406, 1
        %vm1491 = vcmp.eq.s32.totalorder %v1407, 1
        %vm1492 = vcmp.eq.s32.totalorder %v1408, 1
        %vm1493 = vcmp.eq.s32.totalorder %v1409, 1
        %vm1494 = vcmp.eq.s32.totalorder %v1410, 1
        %vm1495 = vcmp.eq.s32.totalorder %v1411, 1
        %vm1496 = vcmp.eq.s32.totalorder %v1412, 1
        %vm1497 = vcmp.eq.s32.totalorder %v1413, 1
        %vm1498 = vcmp.eq.s32.totalorder %v1414, 1
        %vm1499 = vcmp.eq.s32.totalorder %v1415, 1
        %vm1500 = vcmp.eq.s32.totalorder %v1416, 1
        %vm1501 = vcmp.eq.s32.totalorder %v1417, 1
        %vm1502 = vcmp.eq.s32.totalorder %v1418, 1
        %1524 = vrot.lane.b32.xlu0 %v1229, 127
        %v1525 = vpop.permute.xlu0 %1524
        %1526 = vrot.lane.b32.xlu0 %v1230, 127
        %v1527 = vpop.permute.xlu0 %1526
        %1528 = vrot.lane.b32.xlu0 %v1231, 127
        %v1529 = vpop.permute.xlu0 %1528
        %1530 = vrot.lane.b32.xlu0 %v1232, 127
        %v1531 = vpop.permute.xlu0 %1530
        %1532 = vrot.lane.b32.xlu0 %v1233, 127
        %v1533 = vpop.permute.xlu0 %1532
        %1534 = vrot.lane.b32.xlu0 %v1234, 127
        %v1535 = vpop.permute.xlu0 %1534
        %1536 = vrot.lane.b32.xlu0 %v1235, 127
        %v1537 = vpop.permute.xlu0 %1536
        %1538 = vrot.lane.b32.xlu0 %v1236, 127
        %v1539 = vpop.permute.xlu0 %1538
        %1540 = vrot.lane.b32.xlu0 %v1237, 127
        %v1541 = vpop.permute.xlu0 %1540
        %1542 = vrot.lane.b32.xlu0 %v1238, 127
        %v1543 = vpop.permute.xlu0 %1542
        %1544 = vrot.lane.b32.xlu0 %v1239, 127
        %v1545 = vpop.permute.xlu0 %1544
        %1546 = vrot.lane.b32.xlu0 %v1240, 127
        %v1547 = vpop.permute.xlu0 %1546
        %1548 = vrot.lane.b32.xlu0 %v1241, 127
        %v1549 = vpop.permute.xlu0 %1548
        %1550 = vrot.lane.b32.xlu0 %v1242, 127
        %v1551 = vpop.permute.xlu0 %1550
        %1552 = vrot.lane.b32.xlu0 %v1243, 127
        %v1553 = vpop.permute.xlu0 %1552
        %1554 = vrot.lane.b32.xlu0 %v1244, 127
        %v1555 = vpop.permute.xlu0 %1554
        %1556 = vrot.lane.b32.xlu0 %v1245, 127
        %v1557 = vpop.permute.xlu0 %1556
        %1558 = vrot.lane.b32.xlu0 %v1246, 127
        %v1559 = vpop.permute.xlu0 %1558
        %1560 = vrot.lane.b32.xlu0 %v1247, 127
        %v1561 = vpop.permute.xlu0 %1560
        %1562 = vrot.lane.b32.xlu0 %v1248, 127
        %v1563 = vpop.permute.xlu0 %1562
        %1564 = vrot.lane.b32.xlu0 %v1249, 127
        %v1565 = vpop.permute.xlu0 %1564
        %1587 = vrot.lane.b32.xlu0 %v1229, 126
        %v1588 = vpop.permute.xlu0 %1587
        %1589 = vrot.lane.b32.xlu0 %v1230, 126
        %v1590 = vpop.permute.xlu0 %1589
        %1591 = vrot.lane.b32.xlu0 %v1231, 126
        %v1592 = vpop.permute.xlu0 %1591
        %1593 = vrot.lane.b32.xlu0 %v1232, 126
        %v1594 = vpop.permute.xlu0 %1593
        %1595 = vrot.lane.b32.xlu0 %v1233, 126
        %v1596 = vpop.permute.xlu0 %1595
        %1597 = vrot.lane.b32.xlu0 %v1234, 126
        %v1598 = vpop.permute.xlu0 %1597
        %1599 = vrot.lane.b32.xlu0 %v1235, 126
        %v1600 = vpop.permute.xlu0 %1599
        %1601 = vrot.lane.b32.xlu0 %v1236, 126
        %v1602 = vpop.permute.xlu0 %1601
        %1603 = vrot.lane.b32.xlu0 %v1237, 126
        %v1604 = vpop.permute.xlu0 %1603
        %1605 = vrot.lane.b32.xlu0 %v1238, 126
        %v1606 = vpop.permute.xlu0 %1605
        %1607 = vrot.lane.b32.xlu0 %v1239, 126
        %v1608 = vpop.permute.xlu0 %1607
        %1609 = vrot.lane.b32.xlu0 %v1240, 126
        %v1610 = vpop.permute.xlu0 %1609
        %1611 = vrot.lane.b32.xlu0 %v1241, 126
        %v1612 = vpop.permute.xlu0 %1611
        %1613 = vrot.lane.b32.xlu0 %v1242, 126
        %v1614 = vpop.permute.xlu0 %1613
        %1615 = vrot.lane.b32.xlu0 %v1243, 126
        %v1616 = vpop.permute.xlu0 %1615
        %1617 = vrot.lane.b32.xlu0 %v1244, 126
        %v1618 = vpop.permute.xlu0 %1617
        %1619 = vrot.lane.b32.xlu0 %v1245, 126
        %v1620 = vpop.permute.xlu0 %1619
        %1621 = vrot.lane.b32.xlu0 %v1246, 126
        %v1622 = vpop.permute.xlu0 %1621
        %1623 = vrot.lane.b32.xlu0 %v1247, 126
        %v1624 = vpop.permute.xlu0 %1623
        %1625 = vrot.lane.b32.xlu0 %v1248, 126
        %v1626 = vpop.permute.xlu0 %1625
        %1627 = vrot.lane.b32.xlu0 %v1249, 126
        %v1628 = vpop.permute.xlu0 %1627
        %v1650 = vsel %vm1482, %v1525, %v1588
        %v1651 = vsel %vm1483, %v1527, %v1590
        %v1652 = vsel %vm1484, %v1529, %v1592
        %v1653 = vsel %vm1485, %v1531, %v1594
        %v1654 = vsel %vm1486, %v1533, %v1596
        %v1655 = vsel %vm1487, %v1535, %v1598
        %v1656 = vsel %vm1488, %v1537, %v1600
        %v1657 = vsel %vm1489, %v1539, %v1602
        %v1658 = vsel %vm1490, %v1541, %v1604
        %v1659 = vsel %vm1491, %v1543, %v1606
        %v1660 = vsel %vm1492, %v1545, %v1608
        %v1661 = vsel %vm1493, %v1547, %v1610
        %v1662 = vsel %vm1494, %v1549, %v1612
        %v1663 = vsel %vm1495, %v1551, %v1614
        %v1664 = vsel %vm1496, %v1553, %v1616
        %v1665 = vsel %vm1497, %v1555, %v1618
        %v1666 = vsel %vm1498, %v1557, %v1620
        %v1667 = vsel %vm1499, %v1559, %v1622
        %v1668 = vsel %vm1500, %v1561, %v1624
        %v1669 = vsel %vm1501, %v1563, %v1626
        %v1670 = vsel %vm1502, %v1565, %v1628
        %v1671 = vsel %vm1461, %v1229, %v1650
        %v1672 = vsel %vm1462, %v1230, %v1651
        %v1673 = vsel %vm1463, %v1231, %v1652
        %v1674 = vsel %vm1464, %v1232, %v1653
        %v1675 = vsel %vm1465, %v1233, %v1654
        %v1676 = vsel %vm1466, %v1234, %v1655
        %v1677 = vsel %vm1467, %v1235, %v1656
        %v1678 = vsel %vm1468, %v1236, %v1657
        %v1679 = vsel %vm1469, %v1237, %v1658
        %v1680 = vsel %vm1470, %v1238, %v1659
        %v1681 = vsel %vm1471, %v1239, %v1660
        %v1682 = vsel %vm1472, %v1240, %v1661
        %v1683 = vsel %vm1473, %v1241, %v1662
        %v1684 = vsel %vm1474, %v1242, %v1663
        %v1685 = vsel %vm1475, %v1243, %v1664
        %v1686 = vsel %vm1476, %v1244, %v1665
        %v1687 = vsel %vm1477, %v1245, %v1666
        %v1688 = vsel %vm1478, %v1246, %v1667
        %v1689 = vsel %vm1479, %v1247, %v1668
        %v1690 = vsel %vm1480, %v1248, %v1669
        %v1691 = vsel %vm1481, %v1249, %v1670
        %v1692 = vsel %vm1440, %v1671, 0.0
        %v1693 = vsel %vm1441, %v1672, 0.0
        %v1694 = vsel %vm1442, %v1673, 0.0
        %v1695 = vsel %vm1443, %v1674, 0.0
        %v1696 = vsel %vm1444, %v1675, 0.0
        %v1697 = vsel %vm1445, %v1676, 0.0
        %v1698 = vsel %vm1446, %v1677, 0.0
        %v1699 = vsel %vm1447, %v1678, 0.0
        %v1700 = vsel %vm1448, %v1679, 0.0
        %v1701 = vsel %vm1449, %v1680, 0.0
        %v1702 = vsel %vm1450, %v1681, 0.0
        %v1703 = vsel %vm1451, %v1682, 0.0
        %v1704 = vsel %vm1452, %v1683, 0.0
        %v1705 = vsel %vm1453, %v1684, 0.0
        %v1706 = vsel %vm1454, %v1685, 0.0
        %v1707 = vsel %vm1455, %v1686, 0.0
        %v1708 = vsel %vm1456, %v1687, 0.0
        %v1709 = vsel %vm1457, %v1688, 0.0
        %v1710 = vsel %vm1458, %v1689, 0.0
        %v1711 = vsel %vm1459, %v1690, 0.0
        %v1712 = vsel %vm1460, %v1691, 0.0
        %v1713 = vrot.slane %v280, 6
        %v1714 = vrot.slane %v281, 6
        %v1715 = vrot.slane %v282, 6
        %v1716 = vrot.slane %v283, 6
        %v1717 = vrot.slane %v284, 6
        %v1718 = vrot.slane %v285, 6
        %v1719 = vrot.slane %v286, 6
        %v1720 = vrot.slane %v287, 6
        %v1721 = vrot.slane %v288, 6
        %v1722 = vrot.slane %v289, 6
        %v1723 = vrot.slane %v290, 6
        %v1724 = vrot.slane %v291, 6
        %v1725 = vrot.slane %v292, 6
        %v1726 = vrot.slane %v293, 6
        %v1727 = vrot.slane %v294, 6
        %v1728 = vrot.slane %v295, 6
        %v1729 = vrot.slane %v296, 6
        %v1730 = vrot.slane %v297, 6
        %v1731 = vrot.slane %v298, 6
        %v1732 = vrot.slane %v299, 6
        %v1733 = vrot.slane %v300, 6
        %vm1734 = vcmp.lt.s32.totalorder %v259, 2
        %v1735 = vsel %vm1734, %v1732, %v1733
        %v1736 = vsel %vm1734, %v1731, %v1732
        %v1737 = vsel %vm1734, %v1730, %v1731
        %v1738 = vsel %vm1734, %v1729, %v1730
        %v1739 = vsel %vm1734, %v1728, %v1729
        %v1740 = vsel %vm1734, %v1727, %v1728
        %v1741 = vsel %vm1734, %v1726, %v1727
        %v1742 = vsel %vm1734, %v1725, %v1726
        %v1743 = vsel %vm1734, %v1724, %v1725
        %v1744 = vsel %vm1734, %v1723, %v1724
        %v1745 = vsel %vm1734, %v1722, %v1723
        %v1746 = vsel %vm1734, %v1721, %v1722
        %v1747 = vsel %vm1734, %v1720, %v1721
        %v1748 = vsel %vm1734, %v1719, %v1720
        %v1749 = vsel %vm1734, %v1718, %v1719
        %v1750 = vsel %vm1734, %v1717, %v1718
        %v1751 = vsel %vm1734, %v1716, %v1717
        %v1752 = vsel %vm1734, %v1715, %v1716
        %v1753 = vsel %vm1734, %v1714, %v1715
        %v1754 = vsel %vm1734, %v1713, %v1714
        %v1755 = vsel %vm1734, %v1733, %v1713
        %v1756 = vmul.f32 %v1755, 0.33333334
        %v1757 = vmul.f32 %v1754, 0.33333334
        %v1758 = vmul.f32 %v1753, 0.33333334
        %v1759 = vmul.f32 %v1752, 0.33333334
        %v1760 = vmul.f32 %v1751, 0.33333334
        %v1761 = vmul.f32 %v1750, 0.33333334
        %v1762 = vmul.f32 %v1749, 0.33333334
        %v1763 = vmul.f32 %v1748, 0.33333334
        %v1764 = vmul.f32 %v1747, 0.33333334
        %v1765 = vmul.f32 %v1746, 0.33333334
        %v1766 = vmul.f32 %v1745, 0.33333334
        %v1767 = vmul.f32 %v1744, 0.33333334
        %v1768 = vmul.f32 %v1743, 0.33333334
        %v1769 = vmul.f32 %v1742, 0.33333334
        %v1770 = vmul.f32 %v1741, 0.33333334
        %v1771 = vmul.f32 %v1740, 0.33333334
        %v1772 = vmul.f32 %v1739, 0.33333334
        %v1773 = vmul.f32 %v1738, 0.33333334
        %v1774 = vmul.f32 %v1737, 0.33333334
        %v1775 = vmul.f32 %v1736, 0.33333334
        %v1776 = vmul.f32 %v1735, 0.33333334
        %v1777 = vfloor.f32 %v1756
        %v1778 = vfloor.f32 %v1757
        %v1779 = vfloor.f32 %v1758
        %v1780 = vfloor.f32 %v1759
        %v1781 = vfloor.f32 %v1760
        %v1782 = vfloor.f32 %v1761
        %v1783 = vfloor.f32 %v1762
        %v1784 = vfloor.f32 %v1763
        %v1785 = vfloor.f32 %v1764
        %v1786 = vfloor.f32 %v1765
        %v1787 = vfloor.f32 %v1766
        %v1788 = vfloor.f32 %v1767
        %v1789 = vfloor.f32 %v1768
        %v1790 = vfloor.f32 %v1769
        %v1791 = vfloor.f32 %v1770
        %v1792 = vfloor.f32 %v1771
        %v1793 = vfloor.f32 %v1772
        %v1794 = vfloor.f32 %v1773
        %v1795 = vfloor.f32 %v1774
        %v1796 = vfloor.f32 %v1775
        %v1797 = vfloor.f32 %v1776
        %v1798 = vmul.f32 %v1777, 3.0
        %v1799 = vmul.f32 %v1778, 3.0
        %v1800 = vmul.f32 %v1779, 3.0
        %v1801 = vmul.f32 %v1780, 3.0
        %v1802 = vmul.f32 %v1781, 3.0
        %v1803 = vmul.f32 %v1782, 3.0
        %v1804 = vmul.f32 %v1783, 3.0
        %v1805 = vmul.f32 %v1784, 3.0
        %v1806 = vmul.f32 %v1785, 3.0
        %v1807 = vmul.f32 %v1786, 3.0
        %v1808 = vmul.f32 %v1787, 3.0
        %v1809 = vmul.f32 %v1788, 3.0
        %v1810 = vmul.f32 %v1789, 3.0
        %v1811 = vmul.f32 %v1790, 3.0
        %v1812 = vmul.f32 %v1791, 3.0
        %v1813 = vmul.f32 %v1792, 3.0
        %v1814 = vmul.f32 %v1793, 3.0
        %v1815 = vmul.f32 %v1794, 3.0
        %v1816 = vmul.f32 %v1795, 3.0
        %v1817 = vmul.f32 %v1796, 3.0
        %v1818 = vmul.f32 %v1797, 3.0
        %v1819 = vsub.f32 %v1755, %v1798
        %v1820 = vsub.f32 %v1754, %v1799
        %v1821 = vsub.f32 %v1753, %v1800
        %v1822 = vsub.f32 %v1752, %v1801
        %v1823 = vsub.f32 %v1751, %v1802
        %v1824 = vsub.f32 %v1750, %v1803
        %v1825 = vsub.f32 %v1749, %v1804
        %v1826 = vsub.f32 %v1748, %v1805
        %v1827 = vsub.f32 %v1747, %v1806
        %v1828 = vsub.f32 %v1746, %v1807
        %v1829 = vsub.f32 %v1745, %v1808
        %v1830 = vsub.f32 %v1744, %v1809
        %v1831 = vsub.f32 %v1743, %v1810
        %v1832 = vsub.f32 %v1742, %v1811
        %v1833 = vsub.f32 %v1741, %v1812
        %v1834 = vsub.f32 %v1740, %v1813
        %v1835 = vsub.f32 %v1739, %v1814
        %v1836 = vsub.f32 %v1738, %v1815
        %v1837 = vsub.f32 %v1737, %v1816
        %v1838 = vsub.f32 %v1736, %v1817
        %v1839 = vsub.f32 %v1735, %v1818
        %v1840 = vcvt.f32.s32.to.zero.pseudo %v1819
        %v1841 = vcvt.f32.s32.to.zero.pseudo %v1820
        %v1842 = vcvt.f32.s32.to.zero.pseudo %v1821
        %v1843 = vcvt.f32.s32.to.zero.pseudo %v1822
        %v1844 = vcvt.f32.s32.to.zero.pseudo %v1823
        %v1845 = vcvt.f32.s32.to.zero.pseudo %v1824
        %v1846 = vcvt.f32.s32.to.zero.pseudo %v1825
        %v1847 = vcvt.f32.s32.to.zero.pseudo %v1826
        %v1848 = vcvt.f32.s32.to.zero.pseudo %v1827
        %v1849 = vcvt.f32.s32.to.zero.pseudo %v1828
        %v1850 = vcvt.f32.s32.to.zero.pseudo %v1829
        %v1851 = vcvt.f32.s32.to.zero.pseudo %v1830
        %v1852 = vcvt.f32.s32.to.zero.pseudo %v1831
        %v1853 = vcvt.f32.s32.to.zero.pseudo %v1832
        %v1854 = vcvt.f32.s32.to.zero.pseudo %v1833
        %v1855 = vcvt.f32.s32.to.zero.pseudo %v1834
        %v1856 = vcvt.f32.s32.to.zero.pseudo %v1835
        %v1857 = vcvt.f32.s32.to.zero.pseudo %v1836
        %v1858 = vcvt.f32.s32.to.zero.pseudo %v1837
        %v1859 = vcvt.f32.s32.to.zero.pseudo %v1838
        %v1860 = vcvt.f32.s32.to.zero.pseudo %v1839
        %v1861 = vcvt.f32.s32.to.zero.pseudo %v1777
        %v1862 = vcvt.f32.s32.to.zero.pseudo %v1778
        %v1863 = vcvt.f32.s32.to.zero.pseudo %v1779
        %v1864 = vcvt.f32.s32.to.zero.pseudo %v1780
        %v1865 = vcvt.f32.s32.to.zero.pseudo %v1781
        %v1866 = vcvt.f32.s32.to.zero.pseudo %v1782
        %v1867 = vcvt.f32.s32.to.zero.pseudo %v1783
        %v1868 = vcvt.f32.s32.to.zero.pseudo %v1784
        %v1869 = vcvt.f32.s32.to.zero.pseudo %v1785
        %v1870 = vcvt.f32.s32.to.zero.pseudo %v1786
        %v1871 = vcvt.f32.s32.to.zero.pseudo %v1787
        %v1872 = vcvt.f32.s32.to.zero.pseudo %v1788
        %v1873 = vcvt.f32.s32.to.zero.pseudo %v1789
        %v1874 = vcvt.f32.s32.to.zero.pseudo %v1790
        %v1875 = vcvt.f32.s32.to.zero.pseudo %v1791
        %v1876 = vcvt.f32.s32.to.zero.pseudo %v1792
        %v1877 = vcvt.f32.s32.to.zero.pseudo %v1793
        %v1878 = vcvt.f32.s32.to.zero.pseudo %v1794
        %v1879 = vcvt.f32.s32.to.zero.pseudo %v1795
        %v1880 = vcvt.f32.s32.to.zero.pseudo %v1796
        %v1881 = vcvt.f32.s32.to.zero.pseudo %v1797
        %vm1882 = vcmp.eq.s32.totalorder %v1861, %v406
        %vm1883 = vcmp.eq.s32.totalorder %v1862, %v407
        %vm1884 = vcmp.eq.s32.totalorder %v1863, %v408
        %vm1885 = vcmp.eq.s32.totalorder %v1864, %v409
        %vm1886 = vcmp.eq.s32.totalorder %v1865, %v410
        %vm1887 = vcmp.eq.s32.totalorder %v1866, %v411
        %vm1888 = vcmp.eq.s32.totalorder %v1867, %v412
        %vm1889 = vcmp.eq.s32.totalorder %v1868, %v413
        %vm1890 = vcmp.eq.s32.totalorder %v1869, %v414
        %vm1891 = vcmp.eq.s32.totalorder %v1870, %v415
        %vm1892 = vcmp.eq.s32.totalorder %v1871, %v416
        %vm1893 = vcmp.eq.s32.totalorder %v1872, %v417
        %vm1894 = vcmp.eq.s32.totalorder %v1873, %v418
        %vm1895 = vcmp.eq.s32.totalorder %v1874, %v419
        %vm1896 = vcmp.eq.s32.totalorder %v1875, %v420
        %vm1897 = vcmp.eq.s32.totalorder %v1876, %v421
        %vm1898 = vcmp.eq.s32.totalorder %v1877, %v422
        %vm1899 = vcmp.eq.s32.totalorder %v1878, %v423
        %vm1900 = vcmp.eq.s32.totalorder %v1879, %v424
        %vm1901 = vcmp.eq.s32.totalorder %v1880, %v425
        %vm1902 = vcmp.eq.s32.totalorder %v1881, %v426
        %vm1903 = vcmp.eq.s32.totalorder %v1840, 0
        %vm1904 = vcmp.eq.s32.totalorder %v1841, 0
        %vm1905 = vcmp.eq.s32.totalorder %v1842, 0
        %vm1906 = vcmp.eq.s32.totalorder %v1843, 0
        %vm1907 = vcmp.eq.s32.totalorder %v1844, 0
        %vm1908 = vcmp.eq.s32.totalorder %v1845, 0
        %vm1909 = vcmp.eq.s32.totalorder %v1846, 0
        %vm1910 = vcmp.eq.s32.totalorder %v1847, 0
        %vm1911 = vcmp.eq.s32.totalorder %v1848, 0
        %vm1912 = vcmp.eq.s32.totalorder %v1849, 0
        %vm1913 = vcmp.eq.s32.totalorder %v1850, 0
        %vm1914 = vcmp.eq.s32.totalorder %v1851, 0
        %vm1915 = vcmp.eq.s32.totalorder %v1852, 0
        %vm1916 = vcmp.eq.s32.totalorder %v1853, 0
        %vm1917 = vcmp.eq.s32.totalorder %v1854, 0
        %vm1918 = vcmp.eq.s32.totalorder %v1855, 0
        %vm1919 = vcmp.eq.s32.totalorder %v1856, 0
        %vm1920 = vcmp.eq.s32.totalorder %v1857, 0
        %vm1921 = vcmp.eq.s32.totalorder %v1858, 0
        %vm1922 = vcmp.eq.s32.totalorder %v1859, 0
        %vm1923 = vcmp.eq.s32.totalorder %v1860, 0
        %vm1924 = vcmp.eq.s32.totalorder %v1840, 1
        %vm1925 = vcmp.eq.s32.totalorder %v1841, 1
        %vm1926 = vcmp.eq.s32.totalorder %v1842, 1
        %vm1927 = vcmp.eq.s32.totalorder %v1843, 1
        %vm1928 = vcmp.eq.s32.totalorder %v1844, 1
        %vm1929 = vcmp.eq.s32.totalorder %v1845, 1
        %vm1930 = vcmp.eq.s32.totalorder %v1846, 1
        %vm1931 = vcmp.eq.s32.totalorder %v1847, 1
        %vm1932 = vcmp.eq.s32.totalorder %v1848, 1
        %vm1933 = vcmp.eq.s32.totalorder %v1849, 1
        %vm1934 = vcmp.eq.s32.totalorder %v1850, 1
        %vm1935 = vcmp.eq.s32.totalorder %v1851, 1
        %vm1936 = vcmp.eq.s32.totalorder %v1852, 1
        %vm1937 = vcmp.eq.s32.totalorder %v1853, 1
        %vm1938 = vcmp.eq.s32.totalorder %v1854, 1
        %vm1939 = vcmp.eq.s32.totalorder %v1855, 1
        %vm1940 = vcmp.eq.s32.totalorder %v1856, 1
        %vm1941 = vcmp.eq.s32.totalorder %v1857, 1
        %vm1942 = vcmp.eq.s32.totalorder %v1858, 1
        %vm1943 = vcmp.eq.s32.totalorder %v1859, 1
        %vm1944 = vcmp.eq.s32.totalorder %v1860, 1
        %v1945 = vsel %vm1924, %v1525, %v1588
        %v1946 = vsel %vm1925, %v1527, %v1590
        %v1947 = vsel %vm1926, %v1529, %v1592
        %v1948 = vsel %vm1927, %v1531, %v1594
        %v1949 = vsel %vm1928, %v1533, %v1596
        %v1950 = vsel %vm1929, %v1535, %v1598
        %v1951 = vsel %vm1930, %v1537, %v1600
        %v1952 = vsel %vm1931, %v1539, %v1602
        %v1953 = vsel %vm1932, %v1541, %v1604
        %v1954 = vsel %vm1933, %v1543, %v1606
        %v1955 = vsel %vm1934, %v1545, %v1608
        %v1956 = vsel %vm1935, %v1547, %v1610
        %v1957 = vsel %vm1936, %v1549, %v1612
        %v1958 = vsel %vm1937, %v1551, %v1614
        %v1959 = vsel %vm1938, %v1553, %v1616
        %v1960 = vsel %vm1939, %v1555, %v1618
        %v1961 = vsel %vm1940, %v1557, %v1620
        %v1962 = vsel %vm1941, %v1559, %v1622
        %v1963 = vsel %vm1942, %v1561, %v1624
        %v1964 = vsel %vm1943, %v1563, %v1626
        %v1965 = vsel %vm1944, %v1565, %v1628
        %v1966 = vsel %vm1903, %v1229, %v1945
        %v1967 = vsel %vm1904, %v1230, %v1946
        %v1968 = vsel %vm1905, %v1231, %v1947
        %v1969 = vsel %vm1906, %v1232, %v1948
        %v1970 = vsel %vm1907, %v1233, %v1949
        %v1971 = vsel %vm1908, %v1234, %v1950
        %v1972 = vsel %vm1909, %v1235, %v1951
        %v1973 = vsel %vm1910, %v1236, %v1952
        %v1974 = vsel %vm1911, %v1237, %v1953
        %v1975 = vsel %vm1912, %v1238, %v1954
        %v1976 = vsel %vm1913, %v1239, %v1955
        %v1977 = vsel %vm1914, %v1240, %v1956
        %v1978 = vsel %vm1915, %v1241, %v1957
        %v1979 = vsel %vm1916, %v1242, %v1958
        %v1980 = vsel %vm1917, %v1243, %v1959
        %v1981 = vsel %vm1918, %v1244, %v1960
        %v1982 = vsel %vm1919, %v1245, %v1961
        %v1983 = vsel %vm1920, %v1246, %v1962
        %v1984 = vsel %vm1921, %v1247, %v1963
        %v1985 = vsel %vm1922, %v1248, %v1964
        %v1986 = vsel %vm1923, %v1249, %v1965
        %v1987 = vsel %vm1882, %v1966, 0.0
        %v1988 = vsel %vm1883, %v1967, 0.0
        %v1989 = vsel %vm1884, %v1968, 0.0
        %v1990 = vsel %vm1885, %v1969, 0.0
        %v1991 = vsel %vm1886, %v1970, 0.0
        %v1992 = vsel %vm1887, %v1971, 0.0
        %v1993 = vsel %vm1888, %v1972, 0.0
        %v1994 = vsel %vm1889, %v1973, 0.0
        %v1995 = vsel %vm1890, %v1974, 0.0
        %v1996 = vsel %vm1891, %v1975, 0.0
        %v1997 = vsel %vm1892, %v1976, 0.0
        %v1998 = vsel %vm1893, %v1977, 0.0
        %v1999 = vsel %vm1894, %v1978, 0.0
        %v2000 = vsel %vm1895, %v1979, 0.0
        %v2001 = vsel %vm1896, %v1980, 0.0
        %v2002 = vsel %vm1897, %v1981, 0.0
        %v2003 = vsel %vm1898, %v1982, 0.0
        %v2004 = vsel %vm1899, %v1983, 0.0
        %v2005 = vsel %vm1900, %v1984, 0.0
        %v2006 = vsel %vm1901, %v1985, 0.0
        %v2007 = vsel %vm1902, %v1986, 0.0
        %v2008 = vrot.slane %v280, 1
        %v2009 = vrot.slane %v281, 1
        %v2010 = vrot.slane %v282, 1
        %v2011 = vrot.slane %v283, 1
        %v2012 = vrot.slane %v284, 1
        %v2013 = vrot.slane %v285, 1
        %v2014 = vrot.slane %v286, 1
        %v2015 = vrot.slane %v287, 1
        %v2016 = vrot.slane %v288, 1
        %v2017 = vrot.slane %v289, 1
        %v2018 = vrot.slane %v290, 1
        %v2019 = vrot.slane %v291, 1
        %v2020 = vrot.slane %v292, 1
        %v2021 = vrot.slane %v293, 1
        %v2022 = vrot.slane %v294, 1
        %v2023 = vrot.slane %v295, 1
        %v2024 = vrot.slane %v296, 1
        %v2025 = vrot.slane %v297, 1
        %v2026 = vrot.slane %v298, 1
        %v2027 = vrot.slane %v299, 1
        %v2028 = vrot.slane %v300, 1
        %vm2029 = vcmp.lt.s32.totalorder %v259, 7
        %v2030 = vsel %vm2029, %v2027, %v2028
        %v2031 = vsel %vm2029, %v2026, %v2027
        %v2032 = vsel %vm2029, %v2025, %v2026
        %v2033 = vsel %vm2029, %v2024, %v2025
        %v2034 = vsel %vm2029, %v2023, %v2024
        %v2035 = vsel %vm2029, %v2022, %v2023
        %v2036 = vsel %vm2029, %v2021, %v2022
        %v2037 = vsel %vm2029, %v2020, %v2021
        %v2038 = vsel %vm2029, %v2019, %v2020
        %v2039 = vsel %vm2029, %v2018, %v2019
        %v2040 = vsel %vm2029, %v2017, %v2018
        %v2041 = vsel %vm2029, %v2016, %v2017
        %v2042 = vsel %vm2029, %v2015, %v2016
        %v2043 = vsel %vm2029, %v2014, %v2015
        %v2044 = vsel %vm2029, %v2013, %v2014
        %v2045 = vsel %vm2029, %v2012, %v2013
        %v2046 = vsel %vm2029, %v2011, %v2012
        %v2047 = vsel %vm2029, %v2010, %v2011
        %v2048 = vsel %vm2029, %v2009, %v2010
        %v2049 = vsel %vm2029, %v2008, %v2009
        %v2050 = vsel %vm2029, %v2028, %v2008
        %v2051 = vmul.f32 %v2049, 0.33333334
        %v2052 = vmul.f32 %v2048, 0.33333334
        %v2053 = vmul.f32 %v2047, 0.33333334
        %v2054 = vmul.f32 %v2046, 0.33333334
        %v2055 = vmul.f32 %v2045, 0.33333334
        %v2056 = vmul.f32 %v2044, 0.33333334
        %v2057 = vmul.f32 %v2043, 0.33333334
        %v2058 = vmul.f32 %v2042, 0.33333334
        %v2059 = vmul.f32 %v2041, 0.33333334
        %v2060 = vmul.f32 %v2040, 0.33333334
        %v2061 = vmul.f32 %v2039, 0.33333334
        %v2062 = vmul.f32 %v2038, 0.33333334
        %v2063 = vmul.f32 %v2037, 0.33333334
        %v2064 = vmul.f32 %v2036, 0.33333334
        %v2065 = vmul.f32 %v2035, 0.33333334
        %v2066 = vmul.f32 %v2034, 0.33333334
        %v2067 = vmul.f32 %v2033, 0.33333334
        %v2068 = vmul.f32 %v2032, 0.33333334
        %v2069 = vmul.f32 %v2031, 0.33333334
        %v2070 = vmul.f32 %v2030, 0.33333334
        %v2071 = vmul.f32 %v2050, 0.33333334
        %v2072 = vfloor.f32 %v2051
        %v2073 = vfloor.f32 %v2052
        %v2074 = vfloor.f32 %v2053
        %v2075 = vfloor.f32 %v2054
        %v2076 = vfloor.f32 %v2055
        %v2077 = vfloor.f32 %v2056
        %v2078 = vfloor.f32 %v2057
        %v2079 = vfloor.f32 %v2058
        %v2080 = vfloor.f32 %v2059
        %v2081 = vfloor.f32 %v2060
        %v2082 = vfloor.f32 %v2061
        %v2083 = vfloor.f32 %v2062
        %v2084 = vfloor.f32 %v2063
        %v2085 = vfloor.f32 %v2064
        %v2086 = vfloor.f32 %v2065
        %v2087 = vfloor.f32 %v2066
        %v2088 = vfloor.f32 %v2067
        %v2089 = vfloor.f32 %v2068
        %v2090 = vfloor.f32 %v2069
        %v2091 = vfloor.f32 %v2070
        %v2092 = vfloor.f32 %v2071
        %v2093 = vmul.f32 %v2072, 3.0
        %v2094 = vmul.f32 %v2073, 3.0
        %v2095 = vmul.f32 %v2074, 3.0
        %v2096 = vmul.f32 %v2075, 3.0
        %v2097 = vmul.f32 %v2076, 3.0
        %v2098 = vmul.f32 %v2077, 3.0
        %v2099 = vmul.f32 %v2078, 3.0
        %v2100 = vmul.f32 %v2079, 3.0
        %v2101 = vmul.f32 %v2080, 3.0
        %v2102 = vmul.f32 %v2081, 3.0
        %v2103 = vmul.f32 %v2082, 3.0
        %v2104 = vmul.f32 %v2083, 3.0
        %v2105 = vmul.f32 %v2084, 3.0
        %v2106 = vmul.f32 %v2085, 3.0
        %v2107 = vmul.f32 %v2086, 3.0
        %v2108 = vmul.f32 %v2087, 3.0
        %v2109 = vmul.f32 %v2088, 3.0
        %v2110 = vmul.f32 %v2089, 3.0
        %v2111 = vmul.f32 %v2090, 3.0
        %v2112 = vmul.f32 %v2091, 3.0
        %v2113 = vmul.f32 %v2092, 3.0
        %v2114 = vsub.f32 %v2049, %v2093
        %v2115 = vsub.f32 %v2048, %v2094
        %v2116 = vsub.f32 %v2047, %v2095
        %v2117 = vsub.f32 %v2046, %v2096
        %v2118 = vsub.f32 %v2045, %v2097
        %v2119 = vsub.f32 %v2044, %v2098
        %v2120 = vsub.f32 %v2043, %v2099
        %v2121 = vsub.f32 %v2042, %v2100
        %v2122 = vsub.f32 %v2041, %v2101
        %v2123 = vsub.f32 %v2040, %v2102
        %v2124 = vsub.f32 %v2039, %v2103
        %v2125 = vsub.f32 %v2038, %v2104
        %v2126 = vsub.f32 %v2037, %v2105
        %v2127 = vsub.f32 %v2036, %v2106
        %v2128 = vsub.f32 %v2035, %v2107
        %v2129 = vsub.f32 %v2034, %v2108
        %v2130 = vsub.f32 %v2033, %v2109
        %v2131 = vsub.f32 %v2032, %v2110
        %v2132 = vsub.f32 %v2031, %v2111
        %v2133 = vsub.f32 %v2030, %v2112
        %v2134 = vsub.f32 %v2050, %v2113
        %v2135 = vcvt.f32.s32.to.zero.pseudo %v2114
        %v2136 = vcvt.f32.s32.to.zero.pseudo %v2115
        %v2137 = vcvt.f32.s32.to.zero.pseudo %v2116
        %v2138 = vcvt.f32.s32.to.zero.pseudo %v2117
        %v2139 = vcvt.f32.s32.to.zero.pseudo %v2118
        %v2140 = vcvt.f32.s32.to.zero.pseudo %v2119
        %v2141 = vcvt.f32.s32.to.zero.pseudo %v2120
        %v2142 = vcvt.f32.s32.to.zero.pseudo %v2121
        %v2143 = vcvt.f32.s32.to.zero.pseudo %v2122
        %v2144 = vcvt.f32.s32.to.zero.pseudo %v2123
        %v2145 = vcvt.f32.s32.to.zero.pseudo %v2124
        %v2146 = vcvt.f32.s32.to.zero.pseudo %v2125
        %v2147 = vcvt.f32.s32.to.zero.pseudo %v2126
        %v2148 = vcvt.f32.s32.to.zero.pseudo %v2127
        %v2149 = vcvt.f32.s32.to.zero.pseudo %v2128
        %v2150 = vcvt.f32.s32.to.zero.pseudo %v2129
        %v2151 = vcvt.f32.s32.to.zero.pseudo %v2130
        %v2152 = vcvt.f32.s32.to.zero.pseudo %v2131
        %v2153 = vcvt.f32.s32.to.zero.pseudo %v2132
        %v2154 = vcvt.f32.s32.to.zero.pseudo %v2133
        %v2155 = vcvt.f32.s32.to.zero.pseudo %v2134
        %v2156 = vcvt.f32.s32.to.zero.pseudo %v2072
        %v2157 = vcvt.f32.s32.to.zero.pseudo %v2073
        %v2158 = vcvt.f32.s32.to.zero.pseudo %v2074
        %v2159 = vcvt.f32.s32.to.zero.pseudo %v2075
        %v2160 = vcvt.f32.s32.to.zero.pseudo %v2076
        %v2161 = vcvt.f32.s32.to.zero.pseudo %v2077
        %v2162 = vcvt.f32.s32.to.zero.pseudo %v2078
        %v2163 = vcvt.f32.s32.to.zero.pseudo %v2079
        %v2164 = vcvt.f32.s32.to.zero.pseudo %v2080
        %v2165 = vcvt.f32.s32.to.zero.pseudo %v2081
        %v2166 = vcvt.f32.s32.to.zero.pseudo %v2082
        %v2167 = vcvt.f32.s32.to.zero.pseudo %v2083
        %v2168 = vcvt.f32.s32.to.zero.pseudo %v2084
        %v2169 = vcvt.f32.s32.to.zero.pseudo %v2085
        %v2170 = vcvt.f32.s32.to.zero.pseudo %v2086
        %v2171 = vcvt.f32.s32.to.zero.pseudo %v2087
        %v2172 = vcvt.f32.s32.to.zero.pseudo %v2088
        %v2173 = vcvt.f32.s32.to.zero.pseudo %v2089
        %v2174 = vcvt.f32.s32.to.zero.pseudo %v2090
        %v2175 = vcvt.f32.s32.to.zero.pseudo %v2091
        %v2176 = vcvt.f32.s32.to.zero.pseudo %v2092
        %vm2177 = vcmp.eq.s32.totalorder %v2156, %v406
        %vm2178 = vcmp.eq.s32.totalorder %v2157, %v407
        %vm2179 = vcmp.eq.s32.totalorder %v2158, %v408
        %vm2180 = vcmp.eq.s32.totalorder %v2159, %v409
        %vm2181 = vcmp.eq.s32.totalorder %v2160, %v410
        %vm2182 = vcmp.eq.s32.totalorder %v2161, %v411
        %vm2183 = vcmp.eq.s32.totalorder %v2162, %v412
        %vm2184 = vcmp.eq.s32.totalorder %v2163, %v413
        %vm2185 = vcmp.eq.s32.totalorder %v2164, %v414
        %vm2186 = vcmp.eq.s32.totalorder %v2165, %v415
        %vm2187 = vcmp.eq.s32.totalorder %v2166, %v416
        %vm2188 = vcmp.eq.s32.totalorder %v2167, %v417
        %vm2189 = vcmp.eq.s32.totalorder %v2168, %v418
        %vm2190 = vcmp.eq.s32.totalorder %v2169, %v419
        %vm2191 = vcmp.eq.s32.totalorder %v2170, %v420
        %vm2192 = vcmp.eq.s32.totalorder %v2171, %v421
        %vm2193 = vcmp.eq.s32.totalorder %v2172, %v422
        %vm2194 = vcmp.eq.s32.totalorder %v2173, %v423
        %vm2195 = vcmp.eq.s32.totalorder %v2174, %v424
        %vm2196 = vcmp.eq.s32.totalorder %v2175, %v425
        %vm2197 = vcmp.eq.s32.totalorder %v2176, %v426
        %vm2198 = vcmp.eq.s32.totalorder %v2135, 0
        %vm2199 = vcmp.eq.s32.totalorder %v2136, 0
        %vm2200 = vcmp.eq.s32.totalorder %v2137, 0
        %vm2201 = vcmp.eq.s32.totalorder %v2138, 0
        %vm2202 = vcmp.eq.s32.totalorder %v2139, 0
        %vm2203 = vcmp.eq.s32.totalorder %v2140, 0
        %vm2204 = vcmp.eq.s32.totalorder %v2141, 0
        %vm2205 = vcmp.eq.s32.totalorder %v2142, 0
        %vm2206 = vcmp.eq.s32.totalorder %v2143, 0
        %vm2207 = vcmp.eq.s32.totalorder %v2144, 0
        %vm2208 = vcmp.eq.s32.totalorder %v2145, 0
        %vm2209 = vcmp.eq.s32.totalorder %v2146, 0
        %vm2210 = vcmp.eq.s32.totalorder %v2147, 0
        %vm2211 = vcmp.eq.s32.totalorder %v2148, 0
        %vm2212 = vcmp.eq.s32.totalorder %v2149, 0
        %vm2213 = vcmp.eq.s32.totalorder %v2150, 0
        %vm2214 = vcmp.eq.s32.totalorder %v2151, 0
        %vm2215 = vcmp.eq.s32.totalorder %v2152, 0
        %vm2216 = vcmp.eq.s32.totalorder %v2153, 0
        %vm2217 = vcmp.eq.s32.totalorder %v2154, 0
        %vm2218 = vcmp.eq.s32.totalorder %v2155, 0
        %vm2219 = vcmp.eq.s32.totalorder %v2135, 1
        %vm2220 = vcmp.eq.s32.totalorder %v2136, 1
        %vm2221 = vcmp.eq.s32.totalorder %v2137, 1
        %vm2222 = vcmp.eq.s32.totalorder %v2138, 1
        %vm2223 = vcmp.eq.s32.totalorder %v2139, 1
        %vm2224 = vcmp.eq.s32.totalorder %v2140, 1
        %vm2225 = vcmp.eq.s32.totalorder %v2141, 1
        %vm2226 = vcmp.eq.s32.totalorder %v2142, 1
        %vm2227 = vcmp.eq.s32.totalorder %v2143, 1
        %vm2228 = vcmp.eq.s32.totalorder %v2144, 1
        %vm2229 = vcmp.eq.s32.totalorder %v2145, 1
        %vm2230 = vcmp.eq.s32.totalorder %v2146, 1
        %vm2231 = vcmp.eq.s32.totalorder %v2147, 1
        %vm2232 = vcmp.eq.s32.totalorder %v2148, 1
        %vm2233 = vcmp.eq.s32.totalorder %v2149, 1
        %vm2234 = vcmp.eq.s32.totalorder %v2150, 1
        %vm2235 = vcmp.eq.s32.totalorder %v2151, 1
        %vm2236 = vcmp.eq.s32.totalorder %v2152, 1
        %vm2237 = vcmp.eq.s32.totalorder %v2153, 1
        %vm2238 = vcmp.eq.s32.totalorder %v2154, 1
        %vm2239 = vcmp.eq.s32.totalorder %v2155, 1
        %v2240 = vsel %vm2219, %v1525, %v1588
        %v2241 = vsel %vm2220, %v1527, %v1590
        %v2242 = vsel %vm2221, %v1529, %v1592
        %v2243 = vsel %vm2222, %v1531, %v1594
        %v2244 = vsel %vm2223, %v1533, %v1596
        %v2245 = vsel %vm2224, %v1535, %v1598
        %v2246 = vsel %vm2225, %v1537, %v1600
        %v2247 = vsel %vm2226, %v1539, %v1602
        %v2248 = vsel %vm2227, %v1541, %v1604
        %v2249 = vsel %vm2228, %v1543, %v1606
        %v2250 = vsel %vm2229, %v1545, %v1608
        %v2251 = vsel %vm2230, %v1547, %v1610
        %v2252 = vsel %vm2231, %v1549, %v1612
        %v2253 = vsel %vm2232, %v1551, %v1614
        %v2254 = vsel %vm2233, %v1553, %v1616
        %v2255 = vsel %vm2234, %v1555, %v1618
        %v2256 = vsel %vm2235, %v1557, %v1620
        %v2257 = vsel %vm2236, %v1559, %v1622
        %v2258 = vsel %vm2237, %v1561, %v1624
        %v2259 = vsel %vm2238, %v1563, %v1626
        %v2260 = vsel %vm2239, %v1565, %v1628
        %v2261 = vsel %vm2198, %v1229, %v2240
        %v2262 = vsel %vm2199, %v1230, %v2241
        %v2263 = vsel %vm2200, %v1231, %v2242
        %v2264 = vsel %vm2201, %v1232, %v2243
        %v2265 = vsel %vm2202, %v1233, %v2244
        %v2266 = vsel %vm2203, %v1234, %v2245
        %v2267 = vsel %vm2204, %v1235, %v2246
        %v2268 = vsel %vm2205, %v1236, %v2247
        %v2269 = vsel %vm2206, %v1237, %v2248
        %v2270 = vsel %vm2207, %v1238, %v2249
        %v2271 = vsel %vm2208, %v1239, %v2250
        %v2272 = vsel %vm2209, %v1240, %v2251
        %v2273 = vsel %vm2210, %v1241, %v2252
        %v2274 = vsel %vm2211, %v1242, %v2253
        %v2275 = vsel %vm2212, %v1243, %v2254
        %v2276 = vsel %vm2213, %v1244, %v2255
        %v2277 = vsel %vm2214, %v1245, %v2256
        %v2278 = vsel %vm2215, %v1246, %v2257
        %v2279 = vsel %vm2216, %v1247, %v2258
        %v2280 = vsel %vm2217, %v1248, %v2259
        %v2281 = vsel %vm2218, %v1249, %v2260
        %v2282 = vsel %vm2177, %v2261, 0.0
        %v2283 = vsel %vm2178, %v2262, 0.0
        %v2284 = vsel %vm2179, %v2263, 0.0
        %v2285 = vsel %vm2180, %v2264, 0.0
        %v2286 = vsel %vm2181, %v2265, 0.0
        %v2287 = vsel %vm2182, %v2266, 0.0
        %v2288 = vsel %vm2183, %v2267, 0.0
        %v2289 = vsel %vm2184, %v2268, 0.0
        %v2290 = vsel %vm2185, %v2269, 0.0
        %v2291 = vsel %vm2186, %v2270, 0.0
        %v2292 = vsel %vm2187, %v2271, 0.0
        %v2293 = vsel %vm2188, %v2272, 0.0
        %v2294 = vsel %vm2189, %v2273, 0.0
        %v2295 = vsel %vm2190, %v2274, 0.0
        %v2296 = vsel %vm2191, %v2275, 0.0
        %v2297 = vsel %vm2192, %v2276, 0.0
        %v2298 = vsel %vm2193, %v2277, 0.0
        %v2299 = vsel %vm2194, %v2278, 0.0
        %v2300 = vsel %vm2195, %v2279, 0.0
        %v2301 = vsel %vm2196, %v2280, 0.0
        %v2302 = vsel %vm2197, %v2281, 0.0
        %v2303 = vrot.slane %v280, 2
        %v2304 = vrot.slane %v281, 2
        %v2305 = vrot.slane %v282, 2
        %v2306 = vrot.slane %v283, 2
        %v2307 = vrot.slane %v284, 2
        %v2308 = vrot.slane %v285, 2
        %v2309 = vrot.slane %v286, 2
        %v2310 = vrot.slane %v287, 2
        %v2311 = vrot.slane %v288, 2
        %v2312 = vrot.slane %v289, 2
        %v2313 = vrot.slane %v290, 2
        %v2314 = vrot.slane %v291, 2
        %v2315 = vrot.slane %v292, 2
        %v2316 = vrot.slane %v293, 2
        %v2317 = vrot.slane %v294, 2
        %v2318 = vrot.slane %v295, 2
        %v2319 = vrot.slane %v296, 2
        %v2320 = vrot.slane %v297, 2
        %v2321 = vrot.slane %v298, 2
        %v2322 = vrot.slane %v299, 2
        %v2323 = vrot.slane %v300, 2
        %vm2324 = vcmp.lt.s32.totalorder %v259, 6
        %v2325 = vsel %vm2324, %v2322, %v2323
        %v2326 = vsel %vm2324, %v2321, %v2322
        %v2327 = vsel %vm2324, %v2320, %v2321
        %v2328 = vsel %vm2324, %v2319, %v2320
        %v2329 = vsel %vm2324, %v2318, %v2319
        %v2330 = vsel %vm2324, %v2317, %v2318
        %v2331 = vsel %vm2324, %v2316, %v2317
        %v2332 = vsel %vm2324, %v2315, %v2316
        %v2333 = vsel %vm2324, %v2314, %v2315
        %v2334 = vsel %vm2324, %v2313, %v2314
        %v2335 = vsel %vm2324, %v2312, %v2313
        %v2336 = vsel %vm2324, %v2311, %v2312
        %v2337 = vsel %vm2324, %v2310, %v2311
        %v2338 = vsel %vm2324, %v2309, %v2310
        %v2339 = vsel %vm2324, %v2308, %v2309
        %v2340 = vsel %vm2324, %v2307, %v2308
        %v2341 = vsel %vm2324, %v2306, %v2307
        %v2342 = vsel %vm2324, %v2305, %v2306
        %v2343 = vsel %vm2324, %v2304, %v2305
        %v2344 = vsel %vm2324, %v2303, %v2304
        %v2345 = vsel %vm2324, %v2323, %v2303
        %v2346 = vmul.f32 %v2344, 0.33333334
        %v2347 = vmul.f32 %v2343, 0.33333334
        %v2348 = vmul.f32 %v2342, 0.33333334
        %v2349 = vmul.f32 %v2341, 0.33333334
        %v2350 = vmul.f32 %v2340, 0.33333334
        %v2351 = vmul.f32 %v2339, 0.33333334
        %v2352 = vmul.f32 %v2338, 0.33333334
        %v2353 = vmul.f32 %v2337, 0.33333334
        %v2354 = vmul.f32 %v2336, 0.33333334
        %v2355 = vmul.f32 %v2335, 0.33333334
        %v2356 = vmul.f32 %v2334, 0.33333334
        %v2357 = vmul.f32 %v2333, 0.33333334
        %v2358 = vmul.f32 %v2332, 0.33333334
        %v2359 = vmul.f32 %v2331, 0.33333334
        %v2360 = vmul.f32 %v2330, 0.33333334
        %v2361 = vmul.f32 %v2329, 0.33333334
        %v2362 = vmul.f32 %v2328, 0.33333334
        %v2363 = vmul.f32 %v2327, 0.33333334
        %v2364 = vmul.f32 %v2326, 0.33333334
        %v2365 = vmul.f32 %v2325, 0.33333334
        %v2366 = vmul.f32 %v2345, 0.33333334
        %v2367 = vfloor.f32 %v2346
        %v2368 = vfloor.f32 %v2347
        %v2369 = vfloor.f32 %v2348
        %v2370 = vfloor.f32 %v2349
        %v2371 = vfloor.f32 %v2350
        %v2372 = vfloor.f32 %v2351
        %v2373 = vfloor.f32 %v2352
        %v2374 = vfloor.f32 %v2353
        %v2375 = vfloor.f32 %v2354
        %v2376 = vfloor.f32 %v2355
        %v2377 = vfloor.f32 %v2356
        %v2378 = vfloor.f32 %v2357
        %v2379 = vfloor.f32 %v2358
        %v2380 = vfloor.f32 %v2359
        %v2381 = vfloor.f32 %v2360
        %v2382 = vfloor.f32 %v2361
        %v2383 = vfloor.f32 %v2362
        %v2384 = vfloor.f32 %v2363
        %v2385 = vfloor.f32 %v2364
        %v2386 = vfloor.f32 %v2365
        %v2387 = vfloor.f32 %v2366
        %v2388 = vmul.f32 %v2367, 3.0
        %v2389 = vmul.f32 %v2368, 3.0
        %v2390 = vmul.f32 %v2369, 3.0
        %v2391 = vmul.f32 %v2370, 3.0
        %v2392 = vmul.f32 %v2371, 3.0
        %v2393 = vmul.f32 %v2372, 3.0
        %v2394 = vmul.f32 %v2373, 3.0
        %v2395 = vmul.f32 %v2374, 3.0
        %v2396 = vmul.f32 %v2375, 3.0
        %v2397 = vmul.f32 %v2376, 3.0
        %v2398 = vmul.f32 %v2377, 3.0
        %v2399 = vmul.f32 %v2378, 3.0
        %v2400 = vmul.f32 %v2379, 3.0
        %v2401 = vmul.f32 %v2380, 3.0
        %v2402 = vmul.f32 %v2381, 3.0
        %v2403 = vmul.f32 %v2382, 3.0
        %v2404 = vmul.f32 %v2383, 3.0
        %v2405 = vmul.f32 %v2384, 3.0
        %v2406 = vmul.f32 %v2385, 3.0
        %v2407 = vmul.f32 %v2386, 3.0
        %v2408 = vmul.f32 %v2387, 3.0
        %v2409 = vsub.f32 %v2344, %v2388
        %v2410 = vsub.f32 %v2343, %v2389
        %v2411 = vsub.f32 %v2342, %v2390
        %v2412 = vsub.f32 %v2341, %v2391
        %v2413 = vsub.f32 %v2340, %v2392
        %v2414 = vsub.f32 %v2339, %v2393
        %v2415 = vsub.f32 %v2338, %v2394
        %v2416 = vsub.f32 %v2337, %v2395
        %v2417 = vsub.f32 %v2336, %v2396
        %v2418 = vsub.f32 %v2335, %v2397
        %v2419 = vsub.f32 %v2334, %v2398
        %v2420 = vsub.f32 %v2333, %v2399
        %v2421 = vsub.f32 %v2332, %v2400
        %v2422 = vsub.f32 %v2331, %v2401
        %v2423 = vsub.f32 %v2330, %v2402
        %v2424 = vsub.f32 %v2329, %v2403
        %v2425 = vsub.f32 %v2328, %v2404
        %v2426 = vsub.f32 %v2327, %v2405
        %v2427 = vsub.f32 %v2326, %v2406
        %v2428 = vsub.f32 %v2325, %v2407
        %v2429 = vsub.f32 %v2345, %v2408
        %v2430 = vcvt.f32.s32.to.zero.pseudo %v2409
        %v2431 = vcvt.f32.s32.to.zero.pseudo %v2410
        %v2432 = vcvt.f32.s32.to.zero.pseudo %v2411
        %v2433 = vcvt.f32.s32.to.zero.pseudo %v2412
        %v2434 = vcvt.f32.s32.to.zero.pseudo %v2413
        %v2435 = vcvt.f32.s32.to.zero.pseudo %v2414
        %v2436 = vcvt.f32.s32.to.zero.pseudo %v2415
        %v2437 = vcvt.f32.s32.to.zero.pseudo %v2416
        %v2438 = vcvt.f32.s32.to.zero.pseudo %v2417
        %v2439 = vcvt.f32.s32.to.zero.pseudo %v2418
        %v2440 = vcvt.f32.s32.to.zero.pseudo %v2419
        %v2441 = vcvt.f32.s32.to.zero.pseudo %v2420
        %v2442 = vcvt.f32.s32.to.zero.pseudo %v2421
        %v2443 = vcvt.f32.s32.to.zero.pseudo %v2422
        %v2444 = vcvt.f32.s32.to.zero.pseudo %v2423
        %v2445 = vcvt.f32.s32.to.zero.pseudo %v2424
        %v2446 = vcvt.f32.s32.to.zero.pseudo %v2425
        %v2447 = vcvt.f32.s32.to.zero.pseudo %v2426
        %v2448 = vcvt.f32.s32.to.zero.pseudo %v2427
        %v2449 = vcvt.f32.s32.to.zero.pseudo %v2428
        %v2450 = vcvt.f32.s32.to.zero.pseudo %v2429
        %v2451 = vcvt.f32.s32.to.zero.pseudo %v2367
        %v2452 = vcvt.f32.s32.to.zero.pseudo %v2368
        %v2453 = vcvt.f32.s32.to.zero.pseudo %v2369
        %v2454 = vcvt.f32.s32.to.zero.pseudo %v2370
        %v2455 = vcvt.f32.s32.to.zero.pseudo %v2371
        %v2456 = vcvt.f32.s32.to.zero.pseudo %v2372
        %v2457 = vcvt.f32.s32.to.zero.pseudo %v2373
        %v2458 = vcvt.f32.s32.to.zero.pseudo %v2374
        %v2459 = vcvt.f32.s32.to.zero.pseudo %v2375
        %v2460 = vcvt.f32.s32.to.zero.pseudo %v2376
        %v2461 = vcvt.f32.s32.to.zero.pseudo %v2377
        %v2462 = vcvt.f32.s32.to.zero.pseudo %v2378
        %v2463 = vcvt.f32.s32.to.zero.pseudo %v2379
        %v2464 = vcvt.f32.s32.to.zero.pseudo %v2380
        %v2465 = vcvt.f32.s32.to.zero.pseudo %v2381
        %v2466 = vcvt.f32.s32.to.zero.pseudo %v2382
        %v2467 = vcvt.f32.s32.to.zero.pseudo %v2383
        %v2468 = vcvt.f32.s32.to.zero.pseudo %v2384
        %v2469 = vcvt.f32.s32.to.zero.pseudo %v2385
        %v2470 = vcvt.f32.s32.to.zero.pseudo %v2386
        %v2471 = vcvt.f32.s32.to.zero.pseudo %v2387
        %vm2472 = vcmp.eq.s32.totalorder %v2451, %v406
        %vm2473 = vcmp.eq.s32.totalorder %v2452, %v407
        %vm2474 = vcmp.eq.s32.totalorder %v2453, %v408
        %vm2475 = vcmp.eq.s32.totalorder %v2454, %v409
        %vm2476 = vcmp.eq.s32.totalorder %v2455, %v410
        %vm2477 = vcmp.eq.s32.totalorder %v2456, %v411
        %vm2478 = vcmp.eq.s32.totalorder %v2457, %v412
        %vm2479 = vcmp.eq.s32.totalorder %v2458, %v413
        %vm2480 = vcmp.eq.s32.totalorder %v2459, %v414
        %vm2481 = vcmp.eq.s32.totalorder %v2460, %v415
        %vm2482 = vcmp.eq.s32.totalorder %v2461, %v416
        %vm2483 = vcmp.eq.s32.totalorder %v2462, %v417
        %vm2484 = vcmp.eq.s32.totalorder %v2463, %v418
        %vm2485 = vcmp.eq.s32.totalorder %v2464, %v419
        %vm2486 = vcmp.eq.s32.totalorder %v2465, %v420
        %vm2487 = vcmp.eq.s32.totalorder %v2466, %v421
        %vm2488 = vcmp.eq.s32.totalorder %v2467, %v422
        %vm2489 = vcmp.eq.s32.totalorder %v2468, %v423
        %vm2490 = vcmp.eq.s32.totalorder %v2469, %v424
        %vm2491 = vcmp.eq.s32.totalorder %v2470, %v425
        %vm2492 = vcmp.eq.s32.totalorder %v2471, %v426
        %vm2493 = vcmp.eq.s32.totalorder %v2430, 0
        %vm2494 = vcmp.eq.s32.totalorder %v2431, 0
        %vm2495 = vcmp.eq.s32.totalorder %v2432, 0
        %vm2496 = vcmp.eq.s32.totalorder %v2433, 0
        %vm2497 = vcmp.eq.s32.totalorder %v2434, 0
        %vm2498 = vcmp.eq.s32.totalorder %v2435, 0
        %vm2499 = vcmp.eq.s32.totalorder %v2436, 0
        %vm2500 = vcmp.eq.s32.totalorder %v2437, 0
        %vm2501 = vcmp.eq.s32.totalorder %v2438, 0
        %vm2502 = vcmp.eq.s32.totalorder %v2439, 0
        %vm2503 = vcmp.eq.s32.totalorder %v2440, 0
        %vm2504 = vcmp.eq.s32.totalorder %v2441, 0
        %vm2505 = vcmp.eq.s32.totalorder %v2442, 0
        %vm2506 = vcmp.eq.s32.totalorder %v2443, 0
        %vm2507 = vcmp.eq.s32.totalorder %v2444, 0
        %vm2508 = vcmp.eq.s32.totalorder %v2445, 0
        %vm2509 = vcmp.eq.s32.totalorder %v2446, 0
        %vm2510 = vcmp.eq.s32.totalorder %v2447, 0
        %vm2511 = vcmp.eq.s32.totalorder %v2448, 0
        %vm2512 = vcmp.eq.s32.totalorder %v2449, 0
        %vm2513 = vcmp.eq.s32.totalorder %v2450, 0
        %vm2514 = vcmp.eq.s32.totalorder %v2430, 1
        %vm2515 = vcmp.eq.s32.totalorder %v2431, 1
        %vm2516 = vcmp.eq.s32.totalorder %v2432, 1
        %vm2517 = vcmp.eq.s32.totalorder %v2433, 1
        %vm2518 = vcmp.eq.s32.totalorder %v2434, 1
        %vm2519 = vcmp.eq.s32.totalorder %v2435, 1
        %vm2520 = vcmp.eq.s32.totalorder %v2436, 1
        %vm2521 = vcmp.eq.s32.totalorder %v2437, 1
        %vm2522 = vcmp.eq.s32.totalorder %v2438, 1
        %vm2523 = vcmp.eq.s32.totalorder %v2439, 1
        %vm2524 = vcmp.eq.s32.totalorder %v2440, 1
        %vm2525 = vcmp.eq.s32.totalorder %v2441, 1
        %vm2526 = vcmp.eq.s32.totalorder %v2442, 1
        %vm2527 = vcmp.eq.s32.totalorder %v2443, 1
        %vm2528 = vcmp.eq.s32.totalorder %v2444, 1
        %vm2529 = vcmp.eq.s32.totalorder %v2445, 1
        %vm2530 = vcmp.eq.s32.totalorder %v2446, 1
        %vm2531 = vcmp.eq.s32.totalorder %v2447, 1
        %vm2532 = vcmp.eq.s32.totalorder %v2448, 1
        %vm2533 = vcmp.eq.s32.totalorder %v2449, 1
        %vm2534 = vcmp.eq.s32.totalorder %v2450, 1
        %v2535 = vsel %vm2514, %v1525, %v1588
        %v2536 = vsel %vm2515, %v1527, %v1590
        %v2537 = vsel %vm2516, %v1529, %v1592
        %v2538 = vsel %vm2517, %v1531, %v1594
        %v2539 = vsel %vm2518, %v1533, %v1596
        %v2540 = vsel %vm2519, %v1535, %v1598
        %v2541 = vsel %vm2520, %v1537, %v1600
        %v2542 = vsel %vm2521, %v1539, %v1602
        %v2543 = vsel %vm2522, %v1541, %v1604
        %v2544 = vsel %vm2523, %v1543, %v1606
        %v2545 = vsel %vm2524, %v1545, %v1608
        %v2546 = vsel %vm2525, %v1547, %v1610
        %v2547 = vsel %vm2526, %v1549, %v1612
        %v2548 = vsel %vm2527, %v1551, %v1614
        %v2549 = vsel %vm2528, %v1553, %v1616
        %v2550 = vsel %vm2529, %v1555, %v1618
        %v2551 = vsel %vm2530, %v1557, %v1620
        %v2552 = vsel %vm2531, %v1559, %v1622
        %v2553 = vsel %vm2532, %v1561, %v1624
        %v2554 = vsel %vm2533, %v1563, %v1626
        %v2555 = vsel %vm2534, %v1565, %v1628
        %v2556 = vsel %vm2493, %v1229, %v2535
        %v2557 = vsel %vm2494, %v1230, %v2536
        %v2558 = vsel %vm2495, %v1231, %v2537
        %v2559 = vsel %vm2496, %v1232, %v2538
        %v2560 = vsel %vm2497, %v1233, %v2539
        %v2561 = vsel %vm2498, %v1234, %v2540
        %v2562 = vsel %vm2499, %v1235, %v2541
        %v2563 = vsel %vm2500, %v1236, %v2542
        %v2564 = vsel %vm2501, %v1237, %v2543
        %v2565 = vsel %vm2502, %v1238, %v2544
        %v2566 = vsel %vm2503, %v1239, %v2545
        %v2567 = vsel %vm2504, %v1240, %v2546
        %v2568 = vsel %vm2505, %v1241, %v2547
        %v2569 = vsel %vm2506, %v1242, %v2548
        %v2570 = vsel %vm2507, %v1243, %v2549
        %v2571 = vsel %vm2508, %v1244, %v2550
        %v2572 = vsel %vm2509, %v1245, %v2551
        %v2573 = vsel %vm2510, %v1246, %v2552
        %v2574 = vsel %vm2511, %v1247, %v2553
        %v2575 = vsel %vm2512, %v1248, %v2554
        %v2576 = vsel %vm2513, %v1249, %v2555
        %v2577 = vsel %vm2472, %v2556, 0.0
        %v2578 = vsel %vm2473, %v2557, 0.0
        %v2579 = vsel %vm2474, %v2558, 0.0
        %v2580 = vsel %vm2475, %v2559, 0.0
        %v2581 = vsel %vm2476, %v2560, 0.0
        %v2582 = vsel %vm2477, %v2561, 0.0
        %v2583 = vsel %vm2478, %v2562, 0.0
        %v2584 = vsel %vm2479, %v2563, 0.0
        %v2585 = vsel %vm2480, %v2564, 0.0
        %v2586 = vsel %vm2481, %v2565, 0.0
        %v2587 = vsel %vm2482, %v2566, 0.0
        %v2588 = vsel %vm2483, %v2567, 0.0
        %v2589 = vsel %vm2484, %v2568, 0.0
        %v2590 = vsel %vm2485, %v2569, 0.0
        %v2591 = vsel %vm2486, %v2570, 0.0
        %v2592 = vsel %vm2487, %v2571, 0.0
        %v2593 = vsel %vm2488, %v2572, 0.0
        %v2594 = vsel %vm2489, %v2573, 0.0
        %v2595 = vsel %vm2490, %v2574, 0.0
        %v2596 = vsel %vm2491, %v2575, 0.0
        %v2597 = vsel %vm2492, %v2576, 0.0
        %vm2598 = vcmp.eq.s32.totalorder %v385, 0
        %vm2599 = vcmp.eq.s32.totalorder %v386, 0
        %vm2600 = vcmp.eq.s32.totalorder %v387, 0
        %vm2601 = vcmp.eq.s32.totalorder %v388, 0
        %vm2602 = vcmp.eq.s32.totalorder %v389, 0
        %vm2603 = vcmp.eq.s32.totalorder %v390, 0
        %vm2604 = vcmp.eq.s32.totalorder %v391, 0
        %vm2605 = vcmp.eq.s32.totalorder %v392, 0
        %vm2606 = vcmp.eq.s32.totalorder %v393, 0
        %vm2607 = vcmp.eq.s32.totalorder %v394, 0
        %vm2608 = vcmp.eq.s32.totalorder %v395, 0
        %vm2609 = vcmp.eq.s32.totalorder %v396, 0
        %vm2610 = vcmp.eq.s32.totalorder %v397, 0
        %vm2611 = vcmp.eq.s32.totalorder %v398, 0
        %vm2612 = vcmp.eq.s32.totalorder %v399, 0
        %vm2613 = vcmp.eq.s32.totalorder %v400, 0
        %vm2614 = vcmp.eq.s32.totalorder %v401, 0
        %vm2615 = vcmp.eq.s32.totalorder %v402, 0
        %vm2616 = vcmp.eq.s32.totalorder %v403, 0
        %vm2617 = vcmp.eq.s32.totalorder %v404, 0
        %vm2618 = vcmp.eq.s32.totalorder %v405, 0
        %vm2619 = vcmp.eq.s32.totalorder %v385, 1
        %vm2620 = vcmp.eq.s32.totalorder %v386, 1
        %vm2621 = vcmp.eq.s32.totalorder %v387, 1
        %vm2622 = vcmp.eq.s32.totalorder %v388, 1
        %vm2623 = vcmp.eq.s32.totalorder %v389, 1
        %vm2624 = vcmp.eq.s32.totalorder %v390, 1
        %vm2625 = vcmp.eq.s32.totalorder %v391, 1
        %vm2626 = vcmp.eq.s32.totalorder %v392, 1
        %vm2627 = vcmp.eq.s32.totalorder %v393, 1
        %vm2628 = vcmp.eq.s32.totalorder %v394, 1
        %vm2629 = vcmp.eq.s32.totalorder %v395, 1
        %vm2630 = vcmp.eq.s32.totalorder %v396, 1
        %vm2631 = vcmp.eq.s32.totalorder %v397, 1
        %vm2632 = vcmp.eq.s32.totalorder %v398, 1
        %vm2633 = vcmp.eq.s32.totalorder %v399, 1
        %vm2634 = vcmp.eq.s32.totalorder %v400, 1
        %vm2635 = vcmp.eq.s32.totalorder %v401, 1
        %vm2636 = vcmp.eq.s32.totalorder %v402, 1
        %vm2637 = vcmp.eq.s32.totalorder %v403, 1
        %vm2638 = vcmp.eq.s32.totalorder %v404, 1
        %vm2639 = vcmp.eq.s32.totalorder %v405, 1
        %v2640 = vsel %vm2619, %v1229, %v1525
        %v2641 = vsel %vm2620, %v1230, %v1527
        %v2642 = vsel %vm2621, %v1231, %v1529
        %v2643 = vsel %vm2622, %v1232, %v1531
        %v2644 = vsel %vm2623, %v1233, %v1533
        %v2645 = vsel %vm2624, %v1234, %v1535
        %v2646 = vsel %vm2625, %v1235, %v1537
        %v2647 = vsel %vm2626, %v1236, %v1539
        %v2648 = vsel %vm2627, %v1237, %v1541
        %v2649 = vsel %vm2628, %v1238, %v1543
        %v2650 = vsel %vm2629, %v1239, %v1545
        %v2651 = vsel %vm2630, %v1240, %v1547
        %v2652 = vsel %vm2631, %v1241, %v1549
        %v2653 = vsel %vm2632, %v1242, %v1551
        %v2654 = vsel %vm2633, %v1243, %v1553
        %v2655 = vsel %vm2634, %v1244, %v1555
        %v2656 = vsel %vm2635, %v1245, %v1557
        %v2657 = vsel %vm2636, %v1246, %v1559
        %v2658 = vsel %vm2637, %v1247, %v1561
        %v2659 = vsel %vm2638, %v1248, %v1563
        %v2660 = vsel %vm2639, %v1249, %v1565
        %2682 = vrot.lane.b32.xlu0 %v2640, 127
        %v2683 = vpop.permute.xlu0 %2682
        %2684 = vrot.lane.b32.xlu0 %v2641, 127
        %v2685 = vpop.permute.xlu0 %2684
        %2686 = vrot.lane.b32.xlu0 %v2642, 127
        %v2687 = vpop.permute.xlu0 %2686
        %2688 = vrot.lane.b32.xlu0 %v2643, 127
        %v2689 = vpop.permute.xlu0 %2688
        %2690 = vrot.lane.b32.xlu0 %v2644, 127
        %v2691 = vpop.permute.xlu0 %2690
        %2692 = vrot.lane.b32.xlu0 %v2645, 127
        %v2693 = vpop.permute.xlu0 %2692
        %2694 = vrot.lane.b32.xlu0 %v2646, 127
        %v2695 = vpop.permute.xlu0 %2694
        %2696 = vrot.lane.b32.xlu0 %v2647, 127
        %v2697 = vpop.permute.xlu0 %2696
        %2698 = vrot.lane.b32.xlu0 %v2648, 127
        %v2699 = vpop.permute.xlu0 %2698
        %2700 = vrot.lane.b32.xlu0 %v2649, 127
        %v2701 = vpop.permute.xlu0 %2700
        %2702 = vrot.lane.b32.xlu0 %v2650, 127
        %v2703 = vpop.permute.xlu0 %2702
        %2704 = vrot.lane.b32.xlu0 %v2651, 127
        %v2705 = vpop.permute.xlu0 %2704
        %2706 = vrot.lane.b32.xlu0 %v2652, 127
        %v2707 = vpop.permute.xlu0 %2706
        %2708 = vrot.lane.b32.xlu0 %v2653, 127
        %v2709 = vpop.permute.xlu0 %2708
        %2710 = vrot.lane.b32.xlu0 %v2654, 127
        %v2711 = vpop.permute.xlu0 %2710
        %2712 = vrot.lane.b32.xlu0 %v2655, 127
        %v2713 = vpop.permute.xlu0 %2712
        %2714 = vrot.lane.b32.xlu0 %v2656, 127
        %v2715 = vpop.permute.xlu0 %2714
        %2716 = vrot.lane.b32.xlu0 %v2657, 127
        %v2717 = vpop.permute.xlu0 %2716
        %2718 = vrot.lane.b32.xlu0 %v2658, 127
        %v2719 = vpop.permute.xlu0 %2718
        %2720 = vrot.lane.b32.xlu0 %v2659, 127
        %v2721 = vpop.permute.xlu0 %2720
        %2722 = vrot.lane.b32.xlu0 %v2660, 127
        %v2723 = vpop.permute.xlu0 %2722
        %v2745 = vsel %vm2598, %v1229, %v2683
        %v2746 = vsel %vm2599, %v1230, %v2685
        %v2747 = vsel %vm2600, %v1231, %v2687
        %v2748 = vsel %vm2601, %v1232, %v2689
        %v2749 = vsel %vm2602, %v1233, %v2691
        %v2750 = vsel %vm2603, %v1234, %v2693
        %v2751 = vsel %vm2604, %v1235, %v2695
        %v2752 = vsel %vm2605, %v1236, %v2697
        %v2753 = vsel %vm2606, %v1237, %v2699
        %v2754 = vsel %vm2607, %v1238, %v2701
        %v2755 = vsel %vm2608, %v1239, %v2703
        %v2756 = vsel %vm2609, %v1240, %v2705
        %v2757 = vsel %vm2610, %v1241, %v2707
        %v2758 = vsel %vm2611, %v1242, %v2709
        %v2759 = vsel %vm2612, %v1243, %v2711
        %v2760 = vsel %vm2613, %v1244, %v2713
        %v2761 = vsel %vm2614, %v1245, %v2715
        %v2762 = vsel %vm2615, %v1246, %v2717
        %v2763 = vsel %vm2616, %v1247, %v2719
        %v2764 = vsel %vm2617, %v1248, %v2721
        %v2765 = vsel %vm2618, %v1249, %v2723
        %v2766 = vld [vmem:[%s242] sm:$0xff]
        %v2767 = vld [vmem:[%s242 + $0x8] sm:$0xff]
        %v2768 = vld [vmem:[%s242 + $0x10] sm:$0xff]
        %v2769 = vld [vmem:[%s242 + $0x18] sm:$0xff]
        %v2770 = vld [vmem:[%s242 + $0x20] sm:$0xff]
        %v2771 = vld [vmem:[%s242 + $0x28] sm:$0xff]
        %v2772 = vld [vmem:[%s242 + $0x30] sm:$0xff]
        %v2773 = vld [vmem:[%s242 + $0x38] sm:$0xff]
        %v2774 = vld [vmem:[%s242 + $0x40] sm:$0xff]
        %v2775 = vld [vmem:[%s242 + $0x48] sm:$0xff]
        %v2776 = vld [vmem:[%s242 + $0x50] sm:$0xff]
        %v2777 = vld [vmem:[%s242 + $0x58] sm:$0xff]
        %v2778 = vld [vmem:[%s242 + $0x60] sm:$0xff]
        %v2779 = vld [vmem:[%s242 + $0x68] sm:$0xff]
        %v2780 = vld [vmem:[%s242 + $0x70] sm:$0xff]
        %v2781 = vld [vmem:[%s242 + $0x78] sm:$0xff]
        %v2782 = vld [vmem:[%s242 + $0x80] sm:$0xff]
        %v2783 = vld [vmem:[%s242 + $0x88] sm:$0xff]
        %v2784 = vld [vmem:[%s242 + $0x90] sm:$0xff]
        %v2785 = vld [vmem:[%s242 + $0x98] sm:$0xff]
        %v2786 = vld [vmem:[%s242 + $0xa0] sm:$0xff]
        %v2787 = vsel %vm513, %v2766, 0.0
        %v2788 = vsel %vm514, %v2767, 0.0
        %v2789 = vsel %vm515, %v2768, 0.0
        %v2790 = vsel %vm516, %v2769, 0.0
        %v2791 = vsel %vm517, %v2770, 0.0
        %v2792 = vsel %vm518, %v2771, 0.0
        %v2793 = vsel %vm519, %v2772, 0.0
        %v2794 = vsel %vm520, %v2773, 0.0
        %v2795 = vsel %vm521, %v2774, 0.0
        %v2796 = vsel %vm522, %v2775, 0.0
        %v2797 = vsel %vm523, %v2776, 0.0
        %v2798 = vsel %vm524, %v2777, 0.0
        %v2799 = vsel %vm525, %v2778, 0.0
        %v2800 = vsel %vm526, %v2779, 0.0
        %v2801 = vsel %vm527, %v2780, 0.0
        %v2802 = vsel %vm528, %v2781, 0.0
        %v2803 = vsel %vm529, %v2782, 0.0
        %v2804 = vsel %vm530, %v2783, 0.0
        %v2805 = vsel %vm531, %v2784, 0.0
        %v2806 = vsel %vm532, %v2785, 0.0
        %v2807 = vsel %vm533, %v2786, 0.0
        %2809 = vset.pattern.permute.xlu0 0
        %2810 = vperm.xlu0 %2809, %v2745
        %v2811 = vpop.permute.xlu0 %2810
        %2814 = vset.pattern.permute.xlu0 0
        %2815 = vperm.xlu0 %2814, %v2746
        %v2816 = vpop.permute.xlu0 %2815
        %2819 = vset.pattern.permute.xlu0 0
        %2820 = vperm.xlu0 %2819, %v2747
        %v2821 = vpop.permute.xlu0 %2820
        %2824 = vset.pattern.permute.xlu0 0
        %2825 = vperm.xlu0 %2824, %v2748
        %v2826 = vpop.permute.xlu0 %2825
        %2829 = vset.pattern.permute.xlu0 0
        %2830 = vperm.xlu0 %2829, %v2749
        %v2831 = vpop.permute.xlu0 %2830
        %2834 = vset.pattern.permute.xlu0 0
        %2835 = vperm.xlu0 %2834, %v2750
        %v2836 = vpop.permute.xlu0 %2835
        %2839 = vset.pattern.permute.xlu0 0
        %2840 = vperm.xlu0 %2839, %v2751
        %v2841 = vpop.permute.xlu0 %2840
        %2844 = vset.pattern.permute.xlu0 0
        %2845 = vperm.xlu0 %2844, %v2752
        %v2846 = vpop.permute.xlu0 %2845
        %2849 = vset.pattern.permute.xlu0 0
        %2850 = vperm.xlu0 %2849, %v2753
        %v2851 = vpop.permute.xlu0 %2850
        %2854 = vset.pattern.permute.xlu0 0
        %2855 = vperm.xlu0 %2854, %v2754
        %v2856 = vpop.permute.xlu0 %2855
        %2859 = vset.pattern.permute.xlu0 0
        %2860 = vperm.xlu0 %2859, %v2755
        %v2861 = vpop.permute.xlu0 %2860
        %2864 = vset.pattern.permute.xlu0 0
        %2865 = vperm.xlu0 %2864, %v2756
        %v2866 = vpop.permute.xlu0 %2865
        %2869 = vset.pattern.permute.xlu0 0
        %2870 = vperm.xlu0 %2869, %v2757
        %v2871 = vpop.permute.xlu0 %2870
        %2874 = vset.pattern.permute.xlu0 0
        %2875 = vperm.xlu0 %2874, %v2758
        %v2876 = vpop.permute.xlu0 %2875
        %2879 = vset.pattern.permute.xlu0 0
        %2880 = vperm.xlu0 %2879, %v2759
        %v2881 = vpop.permute.xlu0 %2880
        %2884 = vset.pattern.permute.xlu0 0
        %2885 = vperm.xlu0 %2884, %v2760
        %v2886 = vpop.permute.xlu0 %2885
        %2889 = vset.pattern.permute.xlu0 0
        %2890 = vperm.xlu0 %2889, %v2761
        %v2891 = vpop.permute.xlu0 %2890
        %2894 = vset.pattern.permute.xlu0 0
        %2895 = vperm.xlu0 %2894, %v2762
        %v2896 = vpop.permute.xlu0 %2895
        %2899 = vset.pattern.permute.xlu0 0
        %2900 = vperm.xlu0 %2899, %v2763
        %v2901 = vpop.permute.xlu0 %2900
        %2904 = vset.pattern.permute.xlu0 0
        %2905 = vperm.xlu0 %2904, %v2764
        %v2906 = vpop.permute.xlu0 %2905
        %2909 = vset.pattern.permute.xlu0 0
        %2910 = vperm.xlu0 %2909, %v2765
        %v2911 = vpop.permute.xlu0 %2910
        %v2913 = vmul.f32 %v2811, %v2787
        %v2914 = vmul.f32 %v2816, %v2788
        %v2915 = vmul.f32 %v2821, %v2789
        %v2916 = vmul.f32 %v2826, %v2790
        %v2917 = vmul.f32 %v2831, %v2791
        %v2918 = vmul.f32 %v2836, %v2792
        %v2919 = vmul.f32 %v2841, %v2793
        %v2920 = vmul.f32 %v2846, %v2794
        %v2921 = vmul.f32 %v2851, %v2795
        %v2922 = vmul.f32 %v2856, %v2796
        %v2923 = vmul.f32 %v2861, %v2797
        %v2924 = vmul.f32 %v2866, %v2798
        %v2925 = vmul.f32 %v2871, %v2799
        %v2926 = vmul.f32 %v2876, %v2800
        %v2927 = vmul.f32 %v2881, %v2801
        %v2928 = vmul.f32 %v2886, %v2802
        %v2929 = vmul.f32 %v2891, %v2803
        %v2930 = vmul.f32 %v2896, %v2804
        %v2931 = vmul.f32 %v2901, %v2805
        %v2932 = vmul.f32 %v2906, %v2806
        %v2933 = vmul.f32 %v2911, %v2807
        %v2934 = vrot.slane %v2787, 7
        %v2935 = vrot.slane %v2788, 7
        %v2936 = vrot.slane %v2789, 7
        %v2937 = vrot.slane %v2790, 7
        %v2938 = vrot.slane %v2791, 7
        %v2939 = vrot.slane %v2792, 7
        %v2940 = vrot.slane %v2793, 7
        %v2941 = vrot.slane %v2794, 7
        %v2942 = vrot.slane %v2795, 7
        %v2943 = vrot.slane %v2796, 7
        %v2944 = vrot.slane %v2797, 7
        %v2945 = vrot.slane %v2798, 7
        %v2946 = vrot.slane %v2799, 7
        %v2947 = vrot.slane %v2800, 7
        %v2948 = vrot.slane %v2801, 7
        %v2949 = vrot.slane %v2802, 7
        %v2950 = vrot.slane %v2803, 7
        %v2951 = vrot.slane %v2804, 7
        %v2952 = vrot.slane %v2805, 7
        %v2953 = vrot.slane %v2806, 7
        %v2954 = vrot.slane %v2807, 7
        %v2955 = vsel %vm1292, %v2953, %v2954
        %v2956 = vsel %vm1292, %v2952, %v2953
        %v2957 = vsel %vm1292, %v2951, %v2952
        %v2958 = vsel %vm1292, %v2950, %v2951
        %v2959 = vsel %vm1292, %v2949, %v2950
        %v2960 = vsel %vm1292, %v2948, %v2949
        %v2961 = vsel %vm1292, %v2947, %v2948
        %v2962 = vsel %vm1292, %v2946, %v2947
        %v2963 = vsel %vm1292, %v2945, %v2946
        %v2964 = vsel %vm1292, %v2944, %v2945
        %v2965 = vsel %vm1292, %v2943, %v2944
        %v2966 = vsel %vm1292, %v2942, %v2943
        %v2967 = vsel %vm1292, %v2941, %v2942
        %v2968 = vsel %vm1292, %v2940, %v2941
        %v2969 = vsel %vm1292, %v2939, %v2940
        %v2970 = vsel %vm1292, %v2938, %v2939
        %v2971 = vsel %vm1292, %v2937, %v2938
        %v2972 = vsel %vm1292, %v2936, %v2937
        %v2973 = vsel %vm1292, %v2935, %v2936
        %v2974 = vsel %vm1292, %v2934, %v2935
        %v2975 = vsel %vm1292, %v2954, %v2934
        %2977 = vset.pattern.permute.xlu0 0
        %2978 = vperm.xlu0 %2977, %v1692
        %v2979 = vpop.permute.xlu0 %2978
        %2982 = vset.pattern.permute.xlu0 0
        %2983 = vperm.xlu0 %2982, %v1693
        %v2984 = vpop.permute.xlu0 %2983
        %2987 = vset.pattern.permute.xlu0 0
        %2988 = vperm.xlu0 %2987, %v1694
        %v2989 = vpop.permute.xlu0 %2988
        %2992 = vset.pattern.permute.xlu0 0
        %2993 = vperm.xlu0 %2992, %v1695
        %v2994 = vpop.permute.xlu0 %2993
        %2997 = vset.pattern.permute.xlu0 0
        %2998 = vperm.xlu0 %2997, %v1696
        %v2999 = vpop.permute.xlu0 %2998
        %3002 = vset.pattern.permute.xlu0 0
        %3003 = vperm.xlu0 %3002, %v1697
        %v3004 = vpop.permute.xlu0 %3003
        %3007 = vset.pattern.permute.xlu0 0
        %3008 = vperm.xlu0 %3007, %v1698
        %v3009 = vpop.permute.xlu0 %3008
        %3012 = vset.pattern.permute.xlu0 0
        %3013 = vperm.xlu0 %3012, %v1699
        %v3014 = vpop.permute.xlu0 %3013
        %3017 = vset.pattern.permute.xlu0 0
        %3018 = vperm.xlu0 %3017, %v1700
        %v3019 = vpop.permute.xlu0 %3018
        %3022 = vset.pattern.permute.xlu0 0
        %3023 = vperm.xlu0 %3022, %v1701
        %v3024 = vpop.permute.xlu0 %3023
        %3027 = vset.pattern.permute.xlu0 0
        %3028 = vperm.xlu0 %3027, %v1702
        %v3029 = vpop.permute.xlu0 %3028
        %3032 = vset.pattern.permute.xlu0 0
        %3033 = vperm.xlu0 %3032, %v1703
        %v3034 = vpop.permute.xlu0 %3033
        %3037 = vset.pattern.permute.xlu0 0
        %3038 = vperm.xlu0 %3037, %v1704
        %v3039 = vpop.permute.xlu0 %3038
        %3042 = vset.pattern.permute.xlu0 0
        %3043 = vperm.xlu0 %3042, %v1705
        %v3044 = vpop.permute.xlu0 %3043
        %3047 = vset.pattern.permute.xlu0 0
        %3048 = vperm.xlu0 %3047, %v1706
        %v3049 = vpop.permute.xlu0 %3048
        %3052 = vset.pattern.permute.xlu0 0
        %3053 = vperm.xlu0 %3052, %v1707
        %v3054 = vpop.permute.xlu0 %3053
        %3057 = vset.pattern.permute.xlu0 0
        %3058 = vperm.xlu0 %3057, %v1708
        %v3059 = vpop.permute.xlu0 %3058
        %3062 = vset.pattern.permute.xlu0 0
        %3063 = vperm.xlu0 %3062, %v1709
        %v3064 = vpop.permute.xlu0 %3063
        %3067 = vset.pattern.permute.xlu0 0
        %3068 = vperm.xlu0 %3067, %v1710
        %v3069 = vpop.permute.xlu0 %3068
        %3072 = vset.pattern.permute.xlu0 0
        %3073 = vperm.xlu0 %3072, %v1711
        %v3074 = vpop.permute.xlu0 %3073
        %3077 = vset.pattern.permute.xlu0 0
        %3078 = vperm.xlu0 %3077, %v1712
        %v3079 = vpop.permute.xlu0 %3078
        %v3081 = vmul.f32 %v2979, %v2975
        %v3082 = vmul.f32 %v2984, %v2974
        %v3083 = vmul.f32 %v2989, %v2973
        %v3084 = vmul.f32 %v2994, %v2972
        %v3085 = vmul.f32 %v2999, %v2971
        %v3086 = vmul.f32 %v3004, %v2970
        %v3087 = vmul.f32 %v3009, %v2969
        %v3088 = vmul.f32 %v3014, %v2968
        %v3089 = vmul.f32 %v3019, %v2967
        %v3090 = vmul.f32 %v3024, %v2966
        %v3091 = vmul.f32 %v3029, %v2965
        %v3092 = vmul.f32 %v3034, %v2964
        %v3093 = vmul.f32 %v3039, %v2963
        %v3094 = vmul.f32 %v3044, %v2962
        %v3095 = vmul.f32 %v3049, %v2961
        %v3096 = vmul.f32 %v3054, %v2960
        %v3097 = vmul.f32 %v3059, %v2959
        %v3098 = vmul.f32 %v3064, %v2958
        %v3099 = vmul.f32 %v3069, %v2957
        %v3100 = vmul.f32 %v3074, %v2956
        %v3101 = vmul.f32 %v3079, %v2955
        %v3102 = vadd.f32 %v2913, %v3081
        %v3103 = vadd.f32 %v2914, %v3082
        %v3104 = vadd.f32 %v2915, %v3083
        %v3105 = vadd.f32 %v2916, %v3084
        %v3106 = vadd.f32 %v2917, %v3085
        %v3107 = vadd.f32 %v2918, %v3086
        %v3108 = vadd.f32 %v2919, %v3087
        %v3109 = vadd.f32 %v2920, %v3088
        %v3110 = vadd.f32 %v2921, %v3089
        %v3111 = vadd.f32 %v2922, %v3090
        %v3112 = vadd.f32 %v2923, %v3091
        %v3113 = vadd.f32 %v2924, %v3092
        %v3114 = vadd.f32 %v2925, %v3093
        %v3115 = vadd.f32 %v2926, %v3094
        %v3116 = vadd.f32 %v2927, %v3095
        %v3117 = vadd.f32 %v2928, %v3096
        %v3118 = vadd.f32 %v2929, %v3097
        %v3119 = vadd.f32 %v2930, %v3098
        %v3120 = vadd.f32 %v2931, %v3099
        %v3121 = vadd.f32 %v2932, %v3100
        %v3122 = vadd.f32 %v2933, %v3101
        %v3123 = vrot.slane %v2787, 6
        %v3124 = vrot.slane %v2788, 6
        %v3125 = vrot.slane %v2789, 6
        %v3126 = vrot.slane %v2790, 6
        %v3127 = vrot.slane %v2791, 6
        %v3128 = vrot.slane %v2792, 6
        %v3129 = vrot.slane %v2793, 6
        %v3130 = vrot.slane %v2794, 6
        %v3131 = vrot.slane %v2795, 6
        %v3132 = vrot.slane %v2796, 6
        %v3133 = vrot.slane %v2797, 6
        %v3134 = vrot.slane %v2798, 6
        %v3135 = vrot.slane %v2799, 6
        %v3136 = vrot.slane %v2800, 6
        %v3137 = vrot.slane %v2801, 6
        %v3138 = vrot.slane %v2802, 6
        %v3139 = vrot.slane %v2803, 6
        %v3140 = vrot.slane %v2804, 6
        %v3141 = vrot.slane %v2805, 6
        %v3142 = vrot.slane %v2806, 6
        %v3143 = vrot.slane %v2807, 6
        %v3144 = vsel %vm1734, %v3142, %v3143
        %v3145 = vsel %vm1734, %v3141, %v3142
        %v3146 = vsel %vm1734, %v3140, %v3141
        %v3147 = vsel %vm1734, %v3139, %v3140
        %v3148 = vsel %vm1734, %v3138, %v3139
        %v3149 = vsel %vm1734, %v3137, %v3138
        %v3150 = vsel %vm1734, %v3136, %v3137
        %v3151 = vsel %vm1734, %v3135, %v3136
        %v3152 = vsel %vm1734, %v3134, %v3135
        %v3153 = vsel %vm1734, %v3133, %v3134
        %v3154 = vsel %vm1734, %v3132, %v3133
        %v3155 = vsel %vm1734, %v3131, %v3132
        %v3156 = vsel %vm1734, %v3130, %v3131
        %v3157 = vsel %vm1734, %v3129, %v3130
        %v3158 = vsel %vm1734, %v3128, %v3129
        %v3159 = vsel %vm1734, %v3127, %v3128
        %v3160 = vsel %vm1734, %v3126, %v3127
        %v3161 = vsel %vm1734, %v3125, %v3126
        %v3162 = vsel %vm1734, %v3124, %v3125
        %v3163 = vsel %vm1734, %v3123, %v3124
        %v3164 = vsel %vm1734, %v3143, %v3123
        %3166 = vset.pattern.permute.xlu0 0
        %3167 = vperm.xlu0 %3166, %v1987
        %v3168 = vpop.permute.xlu0 %3167
        %3171 = vset.pattern.permute.xlu0 0
        %3172 = vperm.xlu0 %3171, %v1988
        %v3173 = vpop.permute.xlu0 %3172
        %3176 = vset.pattern.permute.xlu0 0
        %3177 = vperm.xlu0 %3176, %v1989
        %v3178 = vpop.permute.xlu0 %3177
        %3181 = vset.pattern.permute.xlu0 0
        %3182 = vperm.xlu0 %3181, %v1990
        %v3183 = vpop.permute.xlu0 %3182
        %3186 = vset.pattern.permute.xlu0 0
        %3187 = vperm.xlu0 %3186, %v1991
        %v3188 = vpop.permute.xlu0 %3187
        %3191 = vset.pattern.permute.xlu0 0
        %3192 = vperm.xlu0 %3191, %v1992
        %v3193 = vpop.permute.xlu0 %3192
        %3196 = vset.pattern.permute.xlu0 0
        %3197 = vperm.xlu0 %3196, %v1993
        %v3198 = vpop.permute.xlu0 %3197
        %3201 = vset.pattern.permute.xlu0 0
        %3202 = vperm.xlu0 %3201, %v1994
        %v3203 = vpop.permute.xlu0 %3202
        %3206 = vset.pattern.permute.xlu0 0
        %3207 = vperm.xlu0 %3206, %v1995
        %v3208 = vpop.permute.xlu0 %3207
        %3211 = vset.pattern.permute.xlu0 0
        %3212 = vperm.xlu0 %3211, %v1996
        %v3213 = vpop.permute.xlu0 %3212
        %3216 = vset.pattern.permute.xlu0 0
        %3217 = vperm.xlu0 %3216, %v1997
        %v3218 = vpop.permute.xlu0 %3217
        %3221 = vset.pattern.permute.xlu0 0
        %3222 = vperm.xlu0 %3221, %v1998
        %v3223 = vpop.permute.xlu0 %3222
        %3226 = vset.pattern.permute.xlu0 0
        %3227 = vperm.xlu0 %3226, %v1999
        %v3228 = vpop.permute.xlu0 %3227
        %3231 = vset.pattern.permute.xlu0 0
        %3232 = vperm.xlu0 %3231, %v2000
        %v3233 = vpop.permute.xlu0 %3232
        %3236 = vset.pattern.permute.xlu0 0
        %3237 = vperm.xlu0 %3236, %v2001
        %v3238 = vpop.permute.xlu0 %3237
        %3241 = vset.pattern.permute.xlu0 0
        %3242 = vperm.xlu0 %3241, %v2002
        %v3243 = vpop.permute.xlu0 %3242
        %3246 = vset.pattern.permute.xlu0 0
        %3247 = vperm.xlu0 %3246, %v2003
        %v3248 = vpop.permute.xlu0 %3247
        %3251 = vset.pattern.permute.xlu0 0
        %3252 = vperm.xlu0 %3251, %v2004
        %v3253 = vpop.permute.xlu0 %3252
        %3256 = vset.pattern.permute.xlu0 0
        %3257 = vperm.xlu0 %3256, %v2005
        %v3258 = vpop.permute.xlu0 %3257
        %3261 = vset.pattern.permute.xlu0 0
        %3262 = vperm.xlu0 %3261, %v2006
        %v3263 = vpop.permute.xlu0 %3262
        %3266 = vset.pattern.permute.xlu0 0
        %3267 = vperm.xlu0 %3266, %v2007
        %v3268 = vpop.permute.xlu0 %3267
        %v3270 = vmul.f32 %v3168, %v3164
        %v3271 = vmul.f32 %v3173, %v3163
        %v3272 = vmul.f32 %v3178, %v3162
        %v3273 = vmul.f32 %v3183, %v3161
        %v3274 = vmul.f32 %v3188, %v3160
        %v3275 = vmul.f32 %v3193, %v3159
        %v3276 = vmul.f32 %v3198, %v3158
        %v3277 = vmul.f32 %v3203, %v3157
        %v3278 = vmul.f32 %v3208, %v3156
        %v3279 = vmul.f32 %v3213, %v3155
        %v3280 = vmul.f32 %v3218, %v3154
        %v3281 = vmul.f32 %v3223, %v3153
        %v3282 = vmul.f32 %v3228, %v3152
        %v3283 = vmul.f32 %v3233, %v3151
        %v3284 = vmul.f32 %v3238, %v3150
        %v3285 = vmul.f32 %v3243, %v3149
        %v3286 = vmul.f32 %v3248, %v3148
        %v3287 = vmul.f32 %v3253, %v3147
        %v3288 = vmul.f32 %v3258, %v3146
        %v3289 = vmul.f32 %v3263, %v3145
        %v3290 = vmul.f32 %v3268, %v3144
        %v3291 = vadd.f32 %v3102, %v3270
        %v3292 = vadd.f32 %v3103, %v3271
        %v3293 = vadd.f32 %v3104, %v3272
        %v3294 = vadd.f32 %v3105, %v3273
        %v3295 = vadd.f32 %v3106, %v3274
        %v3296 = vadd.f32 %v3107, %v3275
        %v3297 = vadd.f32 %v3108, %v3276
        %v3298 = vadd.f32 %v3109, %v3277
        %v3299 = vadd.f32 %v3110, %v3278
        %v3300 = vadd.f32 %v3111, %v3279
        %v3301 = vadd.f32 %v3112, %v3280
        %v3302 = vadd.f32 %v3113, %v3281
        %v3303 = vadd.f32 %v3114, %v3282
        %v3304 = vadd.f32 %v3115, %v3283
        %v3305 = vadd.f32 %v3116, %v3284
        %v3306 = vadd.f32 %v3117, %v3285
        %v3307 = vadd.f32 %v3118, %v3286
        %v3308 = vadd.f32 %v3119, %v3287
        %v3309 = vadd.f32 %v3120, %v3288
        %v3310 = vadd.f32 %v3121, %v3289
        %v3311 = vadd.f32 %v3122, %v3290
        %v3312 = vrot.slane %v2787, 1
        %v3313 = vrot.slane %v2788, 1
        %v3314 = vrot.slane %v2789, 1
        %v3315 = vrot.slane %v2790, 1
        %v3316 = vrot.slane %v2791, 1
        %v3317 = vrot.slane %v2792, 1
        %v3318 = vrot.slane %v2793, 1
        %v3319 = vrot.slane %v2794, 1
        %v3320 = vrot.slane %v2795, 1
        %v3321 = vrot.slane %v2796, 1
        %v3322 = vrot.slane %v2797, 1
        %v3323 = vrot.slane %v2798, 1
        %v3324 = vrot.slane %v2799, 1
        %v3325 = vrot.slane %v2800, 1
        %v3326 = vrot.slane %v2801, 1
        %v3327 = vrot.slane %v2802, 1
        %v3328 = vrot.slane %v2803, 1
        %v3329 = vrot.slane %v2804, 1
        %v3330 = vrot.slane %v2805, 1
        %v3331 = vrot.slane %v2806, 1
        %v3332 = vrot.slane %v2807, 1
        %v3333 = vsel %vm2029, %v3331, %v3332
        %v3334 = vsel %vm2029, %v3330, %v3331
        %v3335 = vsel %vm2029, %v3329, %v3330
        %v3336 = vsel %vm2029, %v3328, %v3329
        %v3337 = vsel %vm2029, %v3327, %v3328
        %v3338 = vsel %vm2029, %v3326, %v3327
        %v3339 = vsel %vm2029, %v3325, %v3326
        %v3340 = vsel %vm2029, %v3324, %v3325
        %v3341 = vsel %vm2029, %v3323, %v3324
        %v3342 = vsel %vm2029, %v3322, %v3323
        %v3343 = vsel %vm2029, %v3321, %v3322
        %v3344 = vsel %vm2029, %v3320, %v3321
        %v3345 = vsel %vm2029, %v3319, %v3320
        %v3346 = vsel %vm2029, %v3318, %v3319
        %v3347 = vsel %vm2029, %v3317, %v3318
        %v3348 = vsel %vm2029, %v3316, %v3317
        %v3349 = vsel %vm2029, %v3315, %v3316
        %v3350 = vsel %vm2029, %v3314, %v3315
        %v3351 = vsel %vm2029, %v3313, %v3314
        %v3352 = vsel %vm2029, %v3312, %v3313
        %v3353 = vsel %vm2029, %v3332, %v3312
        %3355 = vset.pattern.permute.xlu0 0
        %3356 = vperm.xlu0 %3355, %v2282
        %v3357 = vpop.permute.xlu0 %3356
        %3360 = vset.pattern.permute.xlu0 0
        %3361 = vperm.xlu0 %3360, %v2283
        %v3362 = vpop.permute.xlu0 %3361
        %3365 = vset.pattern.permute.xlu0 0
        %3366 = vperm.xlu0 %3365, %v2284
        %v3367 = vpop.permute.xlu0 %3366
        %3370 = vset.pattern.permute.xlu0 0
        %3371 = vperm.xlu0 %3370, %v2285
        %v3372 = vpop.permute.xlu0 %3371
        %3375 = vset.pattern.permute.xlu0 0
        %3376 = vperm.xlu0 %3375, %v2286
        %v3377 = vpop.permute.xlu0 %3376
        %3380 = vset.pattern.permute.xlu0 0
        %3381 = vperm.xlu0 %3380, %v2287
        %v3382 = vpop.permute.xlu0 %3381
        %3385 = vset.pattern.permute.xlu0 0
        %3386 = vperm.xlu0 %3385, %v2288
        %v3387 = vpop.permute.xlu0 %3386
        %3390 = vset.pattern.permute.xlu0 0
        %3391 = vperm.xlu0 %3390, %v2289
        %v3392 = vpop.permute.xlu0 %3391
        %3395 = vset.pattern.permute.xlu0 0
        %3396 = vperm.xlu0 %3395, %v2290
        %v3397 = vpop.permute.xlu0 %3396
        %3400 = vset.pattern.permute.xlu0 0
        %3401 = vperm.xlu0 %3400, %v2291
        %v3402 = vpop.permute.xlu0 %3401
        %3405 = vset.pattern.permute.xlu0 0
        %3406 = vperm.xlu0 %3405, %v2292
        %v3407 = vpop.permute.xlu0 %3406
        %3410 = vset.pattern.permute.xlu0 0
        %3411 = vperm.xlu0 %3410, %v2293
        %v3412 = vpop.permute.xlu0 %3411
        %3415 = vset.pattern.permute.xlu0 0
        %3416 = vperm.xlu0 %3415, %v2294
        %v3417 = vpop.permute.xlu0 %3416
        %3420 = vset.pattern.permute.xlu0 0
        %3421 = vperm.xlu0 %3420, %v2295
        %v3422 = vpop.permute.xlu0 %3421
        %3425 = vset.pattern.permute.xlu0 0
        %3426 = vperm.xlu0 %3425, %v2296
        %v3427 = vpop.permute.xlu0 %3426
        %3430 = vset.pattern.permute.xlu0 0
        %3431 = vperm.xlu0 %3430, %v2297
        %v3432 = vpop.permute.xlu0 %3431
        %3435 = vset.pattern.permute.xlu0 0
        %3436 = vperm.xlu0 %3435, %v2298
        %v3437 = vpop.permute.xlu0 %3436
        %3440 = vset.pattern.permute.xlu0 0
        %3441 = vperm.xlu0 %3440, %v2299
        %v3442 = vpop.permute.xlu0 %3441
        %3445 = vset.pattern.permute.xlu0 0
        %3446 = vperm.xlu0 %3445, %v2300
        %v3447 = vpop.permute.xlu0 %3446
        %3450 = vset.pattern.permute.xlu0 0
        %3451 = vperm.xlu0 %3450, %v2301
        %v3452 = vpop.permute.xlu0 %3451
        %3455 = vset.pattern.permute.xlu0 0
        %3456 = vperm.xlu0 %3455, %v2302
        %v3457 = vpop.permute.xlu0 %3456
        %v3459 = vmul.f32 %v3357, %v3352
        %v3460 = vmul.f32 %v3362, %v3351
        %v3461 = vmul.f32 %v3367, %v3350
        %v3462 = vmul.f32 %v3372, %v3349
        %v3463 = vmul.f32 %v3377, %v3348
        %v3464 = vmul.f32 %v3382, %v3347
        %v3465 = vmul.f32 %v3387, %v3346
        %v3466 = vmul.f32 %v3392, %v3345
        %v3467 = vmul.f32 %v3397, %v3344
        %v3468 = vmul.f32 %v3402, %v3343
        %v3469 = vmul.f32 %v3407, %v3342
        %v3470 = vmul.f32 %v3412, %v3341
        %v3471 = vmul.f32 %v3417, %v3340
        %v3472 = vmul.f32 %v3422, %v3339
        %v3473 = vmul.f32 %v3427, %v3338
        %v3474 = vmul.f32 %v3432, %v3337
        %v3475 = vmul.f32 %v3437, %v3336
        %v3476 = vmul.f32 %v3442, %v3335
        %v3477 = vmul.f32 %v3447, %v3334
        %v3478 = vmul.f32 %v3452, %v3333
        %v3479 = vmul.f32 %v3457, %v3353
        %v3480 = vadd.f32 %v3291, %v3459
        %v3481 = vadd.f32 %v3292, %v3460
        %v3482 = vadd.f32 %v3293, %v3461
        %v3483 = vadd.f32 %v3294, %v3462
        %v3484 = vadd.f32 %v3295, %v3463
        %v3485 = vadd.f32 %v3296, %v3464
        %v3486 = vadd.f32 %v3297, %v3465
        %v3487 = vadd.f32 %v3298, %v3466
        %v3488 = vadd.f32 %v3299, %v3467
        %v3489 = vadd.f32 %v3300, %v3468
        %v3490 = vadd.f32 %v3301, %v3469
        %v3491 = vadd.f32 %v3302, %v3470
        %v3492 = vadd.f32 %v3303, %v3471
        %v3493 = vadd.f32 %v3304, %v3472
        %v3494 = vadd.f32 %v3305, %v3473
        %v3495 = vadd.f32 %v3306, %v3474
        %v3496 = vadd.f32 %v3307, %v3475
        %v3497 = vadd.f32 %v3308, %v3476
        %v3498 = vadd.f32 %v3309, %v3477
        %v3499 = vadd.f32 %v3310, %v3478
        %v3500 = vadd.f32 %v3311, %v3479
        %v3501 = vrot.slane %v2787, 2
        %v3502 = vrot.slane %v2788, 2
        %v3503 = vrot.slane %v2789, 2
        %v3504 = vrot.slane %v2790, 2
        %v3505 = vrot.slane %v2791, 2
        %v3506 = vrot.slane %v2792, 2
        %v3507 = vrot.slane %v2793, 2
        %v3508 = vrot.slane %v2794, 2
        %v3509 = vrot.slane %v2795, 2
        %v3510 = vrot.slane %v2796, 2
        %v3511 = vrot.slane %v2797, 2
        %v3512 = vrot.slane %v2798, 2
        %v3513 = vrot.slane %v2799, 2
        %v3514 = vrot.slane %v2800, 2
        %v3515 = vrot.slane %v2801, 2
        %v3516 = vrot.slane %v2802, 2
        %v3517 = vrot.slane %v2803, 2
        %v3518 = vrot.slane %v2804, 2
        %v3519 = vrot.slane %v2805, 2
        %v3520 = vrot.slane %v2806, 2
        %v3521 = vrot.slane %v2807, 2
        %v3522 = vsel %vm2324, %v3520, %v3521
        %v3523 = vsel %vm2324, %v3519, %v3520
        %v3524 = vsel %vm2324, %v3518, %v3519
        %v3525 = vsel %vm2324, %v3517, %v3518
        %v3526 = vsel %vm2324, %v3516, %v3517
        %v3527 = vsel %vm2324, %v3515, %v3516
        %v3528 = vsel %vm2324, %v3514, %v3515
        %v3529 = vsel %vm2324, %v3513, %v3514
        %v3530 = vsel %vm2324, %v3512, %v3513
        %v3531 = vsel %vm2324, %v3511, %v3512
        %v3532 = vsel %vm2324, %v3510, %v3511
        %v3533 = vsel %vm2324, %v3509, %v3510
        %v3534 = vsel %vm2324, %v3508, %v3509
        %v3535 = vsel %vm2324, %v3507, %v3508
        %v3536 = vsel %vm2324, %v3506, %v3507
        %v3537 = vsel %vm2324, %v3505, %v3506
        %v3538 = vsel %vm2324, %v3504, %v3505
        %v3539 = vsel %vm2324, %v3503, %v3504
        %v3540 = vsel %vm2324, %v3502, %v3503
        %v3541 = vsel %vm2324, %v3501, %v3502
        %v3542 = vsel %vm2324, %v3521, %v3501
        %3544 = vset.pattern.permute.xlu0 0
        %3545 = vperm.xlu0 %3544, %v2577
        %v3546 = vpop.permute.xlu0 %3545
        %3549 = vset.pattern.permute.xlu0 0
        %3550 = vperm.xlu0 %3549, %v2578
        %v3551 = vpop.permute.xlu0 %3550
        %3554 = vset.pattern.permute.xlu0 0
        %3555 = vperm.xlu0 %3554, %v2579
        %v3556 = vpop.permute.xlu0 %3555
        %3559 = vset.pattern.permute.xlu0 0
        %3560 = vperm.xlu0 %3559, %v2580
        %v3561 = vpop.permute.xlu0 %3560
        %3564 = vset.pattern.permute.xlu0 0
        %3565 = vperm.xlu0 %3564, %v2581
        %v3566 = vpop.permute.xlu0 %3565
        %3569 = vset.pattern.permute.xlu0 0
        %3570 = vperm.xlu0 %3569, %v2582
        %v3571 = vpop.permute.xlu0 %3570
        %3574 = vset.pattern.permute.xlu0 0
        %3575 = vperm.xlu0 %3574, %v2583
        %v3576 = vpop.permute.xlu0 %3575
        %3579 = vset.pattern.permute.xlu0 0
        %3580 = vperm.xlu0 %3579, %v2584
        %v3581 = vpop.permute.xlu0 %3580
        %3584 = vset.pattern.permute.xlu0 0
        %3585 = vperm.xlu0 %3584, %v2585
        %v3586 = vpop.permute.xlu0 %3585
        %3589 = vset.pattern.permute.xlu0 0
        %3590 = vperm.xlu0 %3589, %v2586
        %v3591 = vpop.permute.xlu0 %3590
        %3594 = vset.pattern.permute.xlu0 0
        %3595 = vperm.xlu0 %3594, %v2587
        %v3596 = vpop.permute.xlu0 %3595
        %3599 = vset.pattern.permute.xlu0 0
        %3600 = vperm.xlu0 %3599, %v2588
        %v3601 = vpop.permute.xlu0 %3600
        %3604 = vset.pattern.permute.xlu0 0
        %3605 = vperm.xlu0 %3604, %v2589
        %v3606 = vpop.permute.xlu0 %3605
        %3609 = vset.pattern.permute.xlu0 0
        %3610 = vperm.xlu0 %3609, %v2590
        %v3611 = vpop.permute.xlu0 %3610
        %3614 = vset.pattern.permute.xlu0 0
        %3615 = vperm.xlu0 %3614, %v2591
        %v3616 = vpop.permute.xlu0 %3615
        %3619 = vset.pattern.permute.xlu0 0
        %3620 = vperm.xlu0 %3619, %v2592
        %v3621 = vpop.permute.xlu0 %3620
        %3624 = vset.pattern.permute.xlu0 0
        %3625 = vperm.xlu0 %3624, %v2593
        %v3626 = vpop.permute.xlu0 %3625
        %3629 = vset.pattern.permute.xlu0 0
        %3630 = vperm.xlu0 %3629, %v2594
        %v3631 = vpop.permute.xlu0 %3630
        %3634 = vset.pattern.permute.xlu0 0
        %3635 = vperm.xlu0 %3634, %v2595
        %v3636 = vpop.permute.xlu0 %3635
        %3639 = vset.pattern.permute.xlu0 0
        %3640 = vperm.xlu0 %3639, %v2596
        %v3641 = vpop.permute.xlu0 %3640
        %3644 = vset.pattern.permute.xlu0 0
        %3645 = vperm.xlu0 %3644, %v2597
        %v3646 = vpop.permute.xlu0 %3645
        %v3648 = vmul.f32 %v3546, %v3541
        %v3649 = vmul.f32 %v3551, %v3540
        %v3650 = vmul.f32 %v3556, %v3539
        %v3651 = vmul.f32 %v3561, %v3538
        %v3652 = vmul.f32 %v3566, %v3537
        %v3653 = vmul.f32 %v3571, %v3536
        %v3654 = vmul.f32 %v3576, %v3535
        %v3655 = vmul.f32 %v3581, %v3534
        %v3656 = vmul.f32 %v3586, %v3533
        %v3657 = vmul.f32 %v3591, %v3532
        %v3658 = vmul.f32 %v3596, %v3531
        %v3659 = vmul.f32 %v3601, %v3530
        %v3660 = vmul.f32 %v3606, %v3529
        %v3661 = vmul.f32 %v3611, %v3528
        %v3662 = vmul.f32 %v3616, %v3527
        %v3663 = vmul.f32 %v3621, %v3526
        %v3664 = vmul.f32 %v3626, %v3525
        %v3665 = vmul.f32 %v3631, %v3524
        %v3666 = vmul.f32 %v3636, %v3523
        %v3667 = vmul.f32 %v3641, %v3522
        %v3668 = vmul.f32 %v3646, %v3542
        %v3669 = vadd.f32 %v3480, %v3648
        %v3670 = vadd.f32 %v3481, %v3649
        %v3671 = vadd.f32 %v3482, %v3650
        %v3672 = vadd.f32 %v3483, %v3651
        %v3673 = vadd.f32 %v3484, %v3652
        %v3674 = vadd.f32 %v3485, %v3653
        %v3675 = vadd.f32 %v3486, %v3654
        %v3676 = vadd.f32 %v3487, %v3655
        %v3677 = vadd.f32 %v3488, %v3656
        %v3678 = vadd.f32 %v3489, %v3657
        %v3679 = vadd.f32 %v3490, %v3658
        %v3680 = vadd.f32 %v3491, %v3659
        %v3681 = vadd.f32 %v3492, %v3660
        %v3682 = vadd.f32 %v3493, %v3661
        %v3683 = vadd.f32 %v3494, %v3662
        %v3684 = vadd.f32 %v3495, %v3663
        %v3685 = vadd.f32 %v3496, %v3664
        %v3686 = vadd.f32 %v3497, %v3665
        %v3687 = vadd.f32 %v3498, %v3666
        %v3688 = vadd.f32 %v3499, %v3667
        %v3689 = vadd.f32 %v3500, %v3668
        %3690 = vst [vmem:[%s227] sm:$0xff] %v3669
        %3691 = vst [vmem:[%s227 + $0x8] sm:$0xff] %v3670
        %3692 = vst [vmem:[%s227 + $0x10] sm:$0xff] %v3671
        %3693 = vst [vmem:[%s227 + $0x18] sm:$0xff] %v3672
        %3694 = vst [vmem:[%s227 + $0x20] sm:$0xff] %v3673
        %3695 = vst [vmem:[%s227 + $0x28] sm:$0xff] %v3674
        %3696 = vst [vmem:[%s227 + $0x30] sm:$0xff] %v3675
        %3697 = vst [vmem:[%s227 + $0x38] sm:$0xff] %v3676
        %3698 = vst [vmem:[%s227 + $0x40] sm:$0xff] %v3677
        %3699 = vst [vmem:[%s227 + $0x48] sm:$0xff] %v3678
        %3700 = vst [vmem:[%s227 + $0x50] sm:$0xff] %v3679
        %3701 = vst [vmem:[%s227 + $0x58] sm:$0xff] %v3680
        %3702 = vst [vmem:[%s227 + $0x60] sm:$0xff] %v3681
        %3703 = vst [vmem:[%s227 + $0x68] sm:$0xff] %v3682
        %3704 = vst [vmem:[%s227 + $0x70] sm:$0xff] %v3683
        %3705 = vst [vmem:[%s227 + $0x78] sm:$0xff] %v3684
        %3706 = vst [vmem:[%s227 + $0x80] sm:$0xff] %v3685
        %3707 = vst [vmem:[%s227 + $0x88] sm:$0xff] %v3686
        %3708 = vst [vmem:[%s227 + $0x90] sm:$0xff] %v3687
        %3709 = vst [vmem:[%s227 + $0x98] sm:$0xff] %v3688
        %3710 = vst [vmem:[%s227 + $0xa0] sm:$0xff] %v3689
        %s3711 = sand.u32 %s114, 1
        %s3712 = sand.u32 %s114, 1
        %s3713 = smul.addr %s3712, 168
        %s3714 = scalar_lea.vmem [#allocation2], %s3713
        %s3715 = sand.u32 %s140, 1
        %s3716 = sand.u32 %s140, 1
        %s3717 = smul.addr %s3716, 168
        %s3718 = scalar_lea.vmem [#allocation3], %s3717
        // Predicated region
        $region37: #{att_layer_pallas.1} parent=35 // pred_check
          %p3719 = pneg %p124
        $region38: #{att_layer_pallas.1} parent=35 // pred_check_branch
          %3721 = sbr.rel (%p3719) target = $region40
        $region39: #{att_layer_pallas.1} parent=35 // pred_region
          %s3722 = smul.u32 21, %s17
          %s3723 = ssub.s32 38, %s3722
          %p3724 = scmp.lt.s32.totalorder %s3723, 21
          %s3725 = scalar_select %p3724, %s3723, 21
          %s3726 = smul.u32 128, %s3725
          %p3727 = scmp.ne.s32.totalorder 0, %s3726
          %s3728 = smul.addr %s3722, 8
          %s3729 = scalar_lea.vmem %s4, %s3728
          // Predicated region
          $region41: #{att_layer_pallas.1} parent=39 // pred_check
            %p3730 = pneg %p3727
          $region42: #{att_layer_pallas.1} parent=39 // pred_check_branch
            %3732 = sbr.rel (%p3730) target = $region44
          $region43: #{att_layer_pallas.1} parent=39 // pred_region
            // Predicated region
            $region45: #{att_layer_pallas.1} parent=43 // pred_check
              _
            $region46: #{att_layer_pallas.1} parent=43 // pred_check_branch
              %3734 = sbr.rel (0) target = $region48
            $region47: #{att_layer_pallas.1} parent=43 // pred_region
              // Predicated region
              $region67: #{att_layer_pallas.1} parent=47 // pred_check
                _
              $region68: #{att_layer_pallas.1} parent=47 // pred_check_branch
                %3824 = sbr.rel (0) target = $region70
              $region69: #{att_layer_pallas.1} parent=47 // pred_region
                %s3825 = sdiv.u32.pop %s3725, 21
                %s3826 = srem.u32.pop %s3725, 21
                // While loop
                $region71: #{att_layer_pallas.1} parent=69 // loop_pre_header
                  _
                $region72: #{att_layer_pallas.1} parent=69 // loop_header
                  %s3828 = sphi 0, %s3830
                  %p3829 = scmp.ge.s32.totalorder %s3828, %s3825
                  %s3833 = sphi 0, %s3880
                  %s3834 = sphi %s3714, %s3883
                  %s3835 = sphi %s3729, %s3884
                $region73: #{att_layer_pallas.1} parent=69 // loop_header_branch
                  %3832 = sbr.rel (%p3829) target = $region77
                $region74: #{att_layer_pallas.1} parent=69 // loop_body
                  %v3836 = vld [vmem:[%s3834] sm:$0xff]
                  %3837 = vst [vmem:[%s3835] sm:$0xff] %v3836
                  %v3838 = vld [vmem:[%s3834 + $0x8] sm:$0xff]
                  %3839 = vst [vmem:[%s3835 + $0x8] sm:$0xff] %v3838
                  %v3840 = vld [vmem:[%s3834 + $0x10] sm:$0xff]
                  %3841 = vst [vmem:[%s3835 + $0x10] sm:$0xff] %v3840
                  %v3842 = vld [vmem:[%s3834 + $0x18] sm:$0xff]
                  %3843 = vst [vmem:[%s3835 + $0x18] sm:$0xff] %v3842
                  %v3844 = vld [vmem:[%s3834 + $0x20] sm:$0xff]
                  %3845 = vst [vmem:[%s3835 + $0x20] sm:$0xff] %v3844
                  %v3846 = vld [vmem:[%s3834 + $0x28] sm:$0xff]
                  %3847 = vst [vmem:[%s3835 + $0x28] sm:$0xff] %v3846
                  %v3848 = vld [vmem:[%s3834 + $0x30] sm:$0xff]
                  %3849 = vst [vmem:[%s3835 + $0x30] sm:$0xff] %v3848
                  %v3850 = vld [vmem:[%s3834 + $0x38] sm:$0xff]
                  %3851 = vst [vmem:[%s3835 + $0x38] sm:$0xff] %v3850
                  %v3852 = vld [vmem:[%s3834 + $0x40] sm:$0xff]
                  %3853 = vst [vmem:[%s3835 + $0x40] sm:$0xff] %v3852
                  %v3854 = vld [vmem:[%s3834 + $0x48] sm:$0xff]
                  %3855 = vst [vmem:[%s3835 + $0x48] sm:$0xff] %v3854
                  %v3856 = vld [vmem:[%s3834 + $0x50] sm:$0xff]
                  %3857 = vst [vmem:[%s3835 + $0x50] sm:$0xff] %v3856
                  %v3858 = vld [vmem:[%s3834 + $0x58] sm:$0xff]
                  %3859 = vst [vmem:[%s3835 + $0x58] sm:$0xff] %v3858
                  %v3860 = vld [vmem:[%s3834 + $0x60] sm:$0xff]
                  %3861 = vst [vmem:[%s3835 + $0x60] sm:$0xff] %v3860
                  %v3862 = vld [vmem:[%s3834 + $0x68] sm:$0xff]
                  %3863 = vst [vmem:[%s3835 + $0x68] sm:$0xff] %v3862
                  %v3864 = vld [vmem:[%s3834 + $0x70] sm:$0xff]
                  %3865 = vst [vmem:[%s3835 + $0x70] sm:$0xff] %v3864
                  %v3866 = vld [vmem:[%s3834 + $0x78] sm:$0xff]
                  %3867 = vst [vmem:[%s3835 + $0x78] sm:$0xff] %v3866
                  %v3868 = vld [vmem:[%s3834 + $0x80] sm:$0xff]
                  %3869 = vst [vmem:[%s3835 + $0x80] sm:$0xff] %v3868
                  %v3870 = vld [vmem:[%s3834 + $0x88] sm:$0xff]
                  %3871 = vst [vmem:[%s3835 + $0x88] sm:$0xff] %v3870
                  %v3872 = vld [vmem:[%s3834 + $0x90] sm:$0xff]
                  %3873 = vst [vmem:[%s3835 + $0x90] sm:$0xff] %v3872
                  %v3874 = vld [vmem:[%s3834 + $0x98] sm:$0xff]
                  %3875 = vst [vmem:[%s3835 + $0x98] sm:$0xff] %v3874
                  %v3876 = vld [vmem:[%s3834 + $0xa0] sm:$0xff]
                  %3877 = vst [vmem:[%s3835 + $0xa0] sm:$0xff] %v3876
                  %s3878 = sadd.s32 1, %s3833
                  %p3879 = scmp.ge.s32.totalorder %s3878, %s3825
                  %s3880 = scalar_select %p3879, 0, %s3878
                  %s3881 = smul.u32 %s3880, 168
                  %s3882 = smul.u32 %s3880, 168
                  %s3883 = scalar_lea.vmem %s3714, %s3881 [#allocation2]
                  %s3884 = scalar_lea.vmem %s3729, %s3882
                $region75: #{att_layer_pallas.1} parent=69 // loop_footer
                  %s3830 = sadd.s32 %s3828, 1
                $region76: #{att_layer_pallas.1} parent=69 // loop_footer_branch
                  %3827 = sbr.rel target = $region72
                $region77: #{att_layer_pallas.1} parent=69 // loop_exit
                  _
                %s3885 = sdiv.u32.pop %s3725, 21
                %s3886 = srem.u32.pop %s3725, 21
                %s3887 = smul.u32 %s3885, 21
                %s3888 = smul.u32 8, %s3887
                %s3889 = scalar_lea.vmem %s3714, %s3888 [#allocation2]
                %s3890 = smul.u32 8, %s3887
                %s3891 = scalar_lea.vmem %s3729, %s3890
                // While loop
                $region78: #{att_layer_pallas.1} parent=69 // loop_pre_header
                  _
                $region79: #{att_layer_pallas.1} parent=69 // loop_header
                  %s3893 = sphi 0, %s3895
                  %p3894 = scmp.ge.s32.totalorder %s3893, %s3886
                  %s3898 = sphi 0, %s3905
                  %s3899 = sphi %s3889, %s3908
                  %s3900 = sphi %s3891, %s3909
                $region80: #{att_layer_pallas.1} parent=69 // loop_header_branch
                  %3897 = sbr.rel (%p3894) target = $region84
                $region81: #{att_layer_pallas.1} parent=69 // loop_body
                  %v3901 = vld [vmem:[%s3899] sm:$0xff]
                  %3902 = vst [vmem:[%s3900] sm:$0xff] %v3901
                  %s3903 = sadd.s32 1, %s3898
                  %p3904 = scmp.ge.s32.totalorder %s3903, %s3886
                  %s3905 = scalar_select %p3904, 0, %s3903
                  %s3906 = smul.u32 %s3905, 8
                  %s3907 = smul.u32 %s3905, 8
                  %s3908 = scalar_lea.vmem %s3889, %s3906 [#allocation2]
                  %s3909 = scalar_lea.vmem %s3891, %s3907
                $region82: #{att_layer_pallas.1} parent=69 // loop_footer
                  %s3895 = sadd.s32 %s3893, 1
                $region83: #{att_layer_pallas.1} parent=69 // loop_footer_branch
                  %3892 = sbr.rel target = $region79
                $region84: #{att_layer_pallas.1} parent=69 // loop_exit
                  _
              $region70: #{att_layer_pallas.1} parent=47 // pred_fallthru
                _
              // Predicated region
              $region85: #{att_layer_pallas.1} parent=47 // pred_check
                _
              $region86: #{att_layer_pallas.1} parent=47 // pred_check_branch
                %3911 = sbr.rel target = $region88
              $region87: #{att_layer_pallas.1} parent=47 // pred_region
                _
              $region88: #{att_layer_pallas.1} parent=47 // pred_fallthru
                _
            $region48: #{att_layer_pallas.1} parent=43 // pred_fallthru
              _
            // Predicated region
            $region49: #{att_layer_pallas.1} parent=43 // pred_check
              _
            $region50: #{att_layer_pallas.1} parent=43 // pred_check_branch
              %3736 = sbr.rel target = $region52
            $region51: #{att_layer_pallas.1} parent=43 // pred_region
              %s3738 = sdiv.u32.pop %s3725, 21
              %s3739 = srem.u32.pop %s3725, 21
              // While loop
              $region53: #{att_layer_pallas.1} parent=51 // loop_pre_header
                _
              $region54: #{att_layer_pallas.1} parent=51 // loop_header
                %s3741 = sphi 0, %s3743
                %p3742 = scmp.ge.s32.totalorder %s3741, %s3738
                %s3746 = sphi 0, %s3793
                %s3747 = sphi %s3714, %s3796
                %s3748 = sphi %s3729, %s3797
              $region55: #{att_layer_pallas.1} parent=51 // loop_header_branch
                %3745 = sbr.rel (%p3742) target = $region59
              $region56: #{att_layer_pallas.1} parent=51 // loop_body
                %v3749 = vld [vmem:[%s3747] sm:$0xff]
                %3750 = vst [vmem:[%s3748] sm:$0xff] %v3749
                %v3751 = vld [vmem:[%s3747 + $0x8] sm:$0xff]
                %3752 = vst [vmem:[%s3748 + $0x8] sm:$0xff] %v3751
                %v3753 = vld [vmem:[%s3747 + $0x10] sm:$0xff]
                %3754 = vst [vmem:[%s3748 + $0x10] sm:$0xff] %v3753
                %v3755 = vld [vmem:[%s3747 + $0x18] sm:$0xff]
                %3756 = vst [vmem:[%s3748 + $0x18] sm:$0xff] %v3755
                %v3757 = vld [vmem:[%s3747 + $0x20] sm:$0xff]
                %3758 = vst [vmem:[%s3748 + $0x20] sm:$0xff] %v3757
                %v3759 = vld [vmem:[%s3747 + $0x28] sm:$0xff]
                %3760 = vst [vmem:[%s3748 + $0x28] sm:$0xff] %v3759
                %v3761 = vld [vmem:[%s3747 + $0x30] sm:$0xff]
                %3762 = vst [vmem:[%s3748 + $0x30] sm:$0xff] %v3761
                %v3763 = vld [vmem:[%s3747 + $0x38] sm:$0xff]
                %3764 = vst [vmem:[%s3748 + $0x38] sm:$0xff] %v3763
                %v3765 = vld [vmem:[%s3747 + $0x40] sm:$0xff]
                %3766 = vst [vmem:[%s3748 + $0x40] sm:$0xff] %v3765
                %v3767 = vld [vmem:[%s3747 + $0x48] sm:$0xff]
                %3768 = vst [vmem:[%s3748 + $0x48] sm:$0xff] %v3767
                %v3769 = vld [vmem:[%s3747 + $0x50] sm:$0xff]
                %3770 = vst [vmem:[%s3748 + $0x50] sm:$0xff] %v3769
                %v3771 = vld [vmem:[%s3747 + $0x58] sm:$0xff]
                %3772 = vst [vmem:[%s3748 + $0x58] sm:$0xff] %v3771
                %v3773 = vld [vmem:[%s3747 + $0x60] sm:$0xff]
                %3774 = vst [vmem:[%s3748 + $0x60] sm:$0xff] %v3773
                %v3775 = vld [vmem:[%s3747 + $0x68] sm:$0xff]
                %3776 = vst [vmem:[%s3748 + $0x68] sm:$0xff] %v3775
                %v3777 = vld [vmem:[%s3747 + $0x70] sm:$0xff]
                %3778 = vst [vmem:[%s3748 + $0x70] sm:$0xff] %v3777
                %v3779 = vld [vmem:[%s3747 + $0x78] sm:$0xff]
                %3780 = vst [vmem:[%s3748 + $0x78] sm:$0xff] %v3779
                %v3781 = vld [vmem:[%s3747 + $0x80] sm:$0xff]
                %3782 = vst [vmem:[%s3748 + $0x80] sm:$0xff] %v3781
                %v3783 = vld [vmem:[%s3747 + $0x88] sm:$0xff]
                %3784 = vst [vmem:[%s3748 + $0x88] sm:$0xff] %v3783
                %v3785 = vld [vmem:[%s3747 + $0x90] sm:$0xff]
                %3786 = vst [vmem:[%s3748 + $0x90] sm:$0xff] %v3785
                %v3787 = vld [vmem:[%s3747 + $0x98] sm:$0xff]
                %3788 = vst [vmem:[%s3748 + $0x98] sm:$0xff] %v3787
                %v3789 = vld [vmem:[%s3747 + $0xa0] sm:$0xff]
                %3790 = vst [vmem:[%s3748 + $0xa0] sm:$0xff] %v3789
                %s3791 = sadd.s32 1, %s3746
                %p3792 = scmp.ge.s32.totalorder %s3791, %s3738
                %s3793 = scalar_select %p3792, 0, %s3791
                %s3794 = smul.u32 %s3793, 168
                %s3795 = smul.u32 %s3793, 168
                %s3796 = scalar_lea.vmem %s3714, %s3794 [#allocation2]
                %s3797 = scalar_lea.vmem %s3729, %s3795
              $region57: #{att_layer_pallas.1} parent=51 // loop_footer
                %s3743 = sadd.s32 %s3741, 1
              $region58: #{att_layer_pallas.1} parent=51 // loop_footer_branch
                %3740 = sbr.rel target = $region54
              $region59: #{att_layer_pallas.1} parent=51 // loop_exit
                _
              %s3798 = sdiv.u32.pop %s3725, 21
              %s3799 = srem.u32.pop %s3725, 21
              %s3800 = smul.u32 %s3798, 21
              %s3801 = smul.u32 8, %s3800
              %s3802 = scalar_lea.vmem %s3714, %s3801 [#allocation2]
              %s3803 = smul.u32 8, %s3800
              %s3804 = scalar_lea.vmem %s3729, %s3803
              // While loop
              $region60: #{att_layer_pallas.1} parent=51 // loop_pre_header
                _
              $region61: #{att_layer_pallas.1} parent=51 // loop_header
                %s3806 = sphi 0, %s3808
                %p3807 = scmp.ge.s32.totalorder %s3806, %s3799
                %s3811 = sphi 0, %s3818
                %s3812 = sphi %s3802, %s3821
                %s3813 = sphi %s3804, %s3822
              $region62: #{att_layer_pallas.1} parent=51 // loop_header_branch
                %3810 = sbr.rel (%p3807) target = $region66
              $region63: #{att_layer_pallas.1} parent=51 // loop_body
                %v3814 = vld [vmem:[%s3812] sm:$0xff]
                %3815 = vst [vmem:[%s3813] sm:$0xff] %v3814
                %s3816 = sadd.s32 1, %s3811
                %p3817 = scmp.ge.s32.totalorder %s3816, %s3799
                %s3818 = scalar_select %p3817, 0, %s3816
                %s3819 = smul.u32 %s3818, 8
                %s3820 = smul.u32 %s3818, 8
                %s3821 = scalar_lea.vmem %s3802, %s3819 [#allocation2]
                %s3822 = scalar_lea.vmem %s3804, %s3820
              $region64: #{att_layer_pallas.1} parent=51 // loop_footer
                %s3808 = sadd.s32 %s3806, 1
              $region65: #{att_layer_pallas.1} parent=51 // loop_footer_branch
                %3805 = sbr.rel target = $region61
              $region66: #{att_layer_pallas.1} parent=51 // loop_exit
                _
            $region52: #{att_layer_pallas.1} parent=43 // pred_fallthru
              _
          $region44: #{att_layer_pallas.1} parent=39 // pred_fallthru
            _
          %3912 = vnop
        $region40: #{att_layer_pallas.1} parent=35 // pred_fallthru
          _
        // Predicated region
        $region89: #{att_layer_pallas.1} parent=35 // pred_check
          %p3913 = pneg %p150
        $region90: #{att_layer_pallas.1} parent=35 // pred_check_branch
          %3915 = sbr.rel (%p3913) target = $region92
        $region91: #{att_layer_pallas.1} parent=35 // pred_region
          %s3916 = smul.u32 21, %s17
          %s3917 = ssub.s32 38, %s3916
          %p3918 = scmp.lt.s32.totalorder %s3917, 21
          %s3919 = scalar_select %p3918, %s3917, 21
          %s3920 = smul.u32 128, %s3919
          %p3921 = scmp.ne.s32.totalorder 0, %s3920
          %s3922 = smul.addr %s3916, 8
          %s3923 = scalar_lea.vmem %s5, %s3922
          // Predicated region
          $region93: #{att_layer_pallas.1} parent=91 // pred_check
            %p3924 = pneg %p3921
          $region94: #{att_layer_pallas.1} parent=91 // pred_check_branch
            %3926 = sbr.rel (%p3924) target = $region96
          $region95: #{att_layer_pallas.1} parent=91 // pred_region
            // Predicated region
            $region97: #{att_layer_pallas.1} parent=95 // pred_check
              _
            $region98: #{att_layer_pallas.1} parent=95 // pred_check_branch
              %3928 = sbr.rel (0) target = $region100
            $region99: #{att_layer_pallas.1} parent=95 // pred_region
              // Predicated region
              $region119: #{att_layer_pallas.1} parent=99 // pred_check
                _
              $region120: #{att_layer_pallas.1} parent=99 // pred_check_branch
                %4018 = sbr.rel (0) target = $region122
              $region121: #{att_layer_pallas.1} parent=99 // pred_region
                %s4019 = sdiv.u32.pop %s3919, 21
                %s4020 = srem.u32.pop %s3919, 21
                // While loop
                $region123: #{att_layer_pallas.1} parent=121 // loop_pre_header
                  _
                $region124: #{att_layer_pallas.1} parent=121 // loop_header
                  %s4022 = sphi 0, %s4024
                  %p4023 = scmp.ge.s32.totalorder %s4022, %s4019
                  %s4027 = sphi 0, %s4074
                  %s4028 = sphi %s3718, %s4077
                  %s4029 = sphi %s3923, %s4078
                $region125: #{att_layer_pallas.1} parent=121 // loop_header_branch
                  %4026 = sbr.rel (%p4023) target = $region129
                $region126: #{att_layer_pallas.1} parent=121 // loop_body
                  %v4030 = vld [vmem:[%s4028] sm:$0xff]
                  %4031 = vst [vmem:[%s4029] sm:$0xff] %v4030
                  %v4032 = vld [vmem:[%s4028 + $0x8] sm:$0xff]
                  %4033 = vst [vmem:[%s4029 + $0x8] sm:$0xff] %v4032
                  %v4034 = vld [vmem:[%s4028 + $0x10] sm:$0xff]
                  %4035 = vst [vmem:[%s4029 + $0x10] sm:$0xff] %v4034
                  %v4036 = vld [vmem:[%s4028 + $0x18] sm:$0xff]
                  %4037 = vst [vmem:[%s4029 + $0x18] sm:$0xff] %v4036
                  %v4038 = vld [vmem:[%s4028 + $0x20] sm:$0xff]
                  %4039 = vst [vmem:[%s4029 + $0x20] sm:$0xff] %v4038
                  %v4040 = vld [vmem:[%s4028 + $0x28] sm:$0xff]
                  %4041 = vst [vmem:[%s4029 + $0x28] sm:$0xff] %v4040
                  %v4042 = vld [vmem:[%s4028 + $0x30] sm:$0xff]
                  %4043 = vst [vmem:[%s4029 + $0x30] sm:$0xff] %v4042
                  %v4044 = vld [vmem:[%s4028 + $0x38] sm:$0xff]
                  %4045 = vst [vmem:[%s4029 + $0x38] sm:$0xff] %v4044
                  %v4046 = vld [vmem:[%s4028 + $0x40] sm:$0xff]
                  %4047 = vst [vmem:[%s4029 + $0x40] sm:$0xff] %v4046
                  %v4048 = vld [vmem:[%s4028 + $0x48] sm:$0xff]
                  %4049 = vst [vmem:[%s4029 + $0x48] sm:$0xff] %v4048
                  %v4050 = vld [vmem:[%s4028 + $0x50] sm:$0xff]
                  %4051 = vst [vmem:[%s4029 + $0x50] sm:$0xff] %v4050
                  %v4052 = vld [vmem:[%s4028 + $0x58] sm:$0xff]
                  %4053 = vst [vmem:[%s4029 + $0x58] sm:$0xff] %v4052
                  %v4054 = vld [vmem:[%s4028 + $0x60] sm:$0xff]
                  %4055 = vst [vmem:[%s4029 + $0x60] sm:$0xff] %v4054
                  %v4056 = vld [vmem:[%s4028 + $0x68] sm:$0xff]
                  %4057 = vst [vmem:[%s4029 + $0x68] sm:$0xff] %v4056
                  %v4058 = vld [vmem:[%s4028 + $0x70] sm:$0xff]
                  %4059 = vst [vmem:[%s4029 + $0x70] sm:$0xff] %v4058
                  %v4060 = vld [vmem:[%s4028 + $0x78] sm:$0xff]
                  %4061 = vst [vmem:[%s4029 + $0x78] sm:$0xff] %v4060
                  %v4062 = vld [vmem:[%s4028 + $0x80] sm:$0xff]
                  %4063 = vst [vmem:[%s4029 + $0x80] sm:$0xff] %v4062
                  %v4064 = vld [vmem:[%s4028 + $0x88] sm:$0xff]
                  %4065 = vst [vmem:[%s4029 + $0x88] sm:$0xff] %v4064
                  %v4066 = vld [vmem:[%s4028 + $0x90] sm:$0xff]
                  %4067 = vst [vmem:[%s4029 + $0x90] sm:$0xff] %v4066
                  %v4068 = vld [vmem:[%s4028 + $0x98] sm:$0xff]
                  %4069 = vst [vmem:[%s4029 + $0x98] sm:$0xff] %v4068
                  %v4070 = vld [vmem:[%s4028 + $0xa0] sm:$0xff]
                  %4071 = vst [vmem:[%s4029 + $0xa0] sm:$0xff] %v4070
                  %s4072 = sadd.s32 1, %s4027
                  %p4073 = scmp.ge.s32.totalorder %s4072, %s4019
                  %s4074 = scalar_select %p4073, 0, %s4072
                  %s4075 = smul.u32 %s4074, 168
                  %s4076 = smul.u32 %s4074, 168
                  %s4077 = scalar_lea.vmem %s3718, %s4075 [#allocation3]
                  %s4078 = scalar_lea.vmem %s3923, %s4076
                $region127: #{att_layer_pallas.1} parent=121 // loop_footer
                  %s4024 = sadd.s32 %s4022, 1
                $region128: #{att_layer_pallas.1} parent=121 // loop_footer_branch
                  %4021 = sbr.rel target = $region124
                $region129: #{att_layer_pallas.1} parent=121 // loop_exit
                  _
                %s4079 = sdiv.u32.pop %s3919, 21
                %s4080 = srem.u32.pop %s3919, 21
                %s4081 = smul.u32 %s4079, 21
                %s4082 = smul.u32 8, %s4081
                %s4083 = scalar_lea.vmem %s3718, %s4082 [#allocation3]
                %s4084 = smul.u32 8, %s4081
                %s4085 = scalar_lea.vmem %s3923, %s4084
                // While loop
                $region130: #{att_layer_pallas.1} parent=121 // loop_pre_header
                  _
                $region131: #{att_layer_pallas.1} parent=121 // loop_header
                  %s4087 = sphi 0, %s4089
                  %p4088 = scmp.ge.s32.totalorder %s4087, %s4080
                  %s4092 = sphi 0, %s4099
                  %s4093 = sphi %s4083, %s4102
                  %s4094 = sphi %s4085, %s4103
                $region132: #{att_layer_pallas.1} parent=121 // loop_header_branch
                  %4091 = sbr.rel (%p4088) target = $region136
                $region133: #{att_layer_pallas.1} parent=121 // loop_body
                  %v4095 = vld [vmem:[%s4093] sm:$0xff]
                  %4096 = vst [vmem:[%s4094] sm:$0xff] %v4095
                  %s4097 = sadd.s32 1, %s4092
                  %p4098 = scmp.ge.s32.totalorder %s4097, %s4080
                  %s4099 = scalar_select %p4098, 0, %s4097
                  %s4100 = smul.u32 %s4099, 8
                  %s4101 = smul.u32 %s4099, 8
                  %s4102 = scalar_lea.vmem %s4083, %s4100 [#allocation3]
                  %s4103 = scalar_lea.vmem %s4085, %s4101
                $region134: #{att_layer_pallas.1} parent=121 // loop_footer
                  %s4089 = sadd.s32 %s4087, 1
                $region135: #{att_layer_pallas.1} parent=121 // loop_footer_branch
                  %4086 = sbr.rel target = $region131
                $region136: #{att_layer_pallas.1} parent=121 // loop_exit
                  _
              $region122: #{att_layer_pallas.1} parent=99 // pred_fallthru
                _
              // Predicated region
              $region137: #{att_layer_pallas.1} parent=99 // pred_check
                _
              $region138: #{att_layer_pallas.1} parent=99 // pred_check_branch
                %4105 = sbr.rel target = $region140
              $region139: #{att_layer_pallas.1} parent=99 // pred_region
                _
              $region140: #{att_layer_pallas.1} parent=99 // pred_fallthru
                _
            $region100: #{att_layer_pallas.1} parent=95 // pred_fallthru
              _
            // Predicated region
            $region101: #{att_layer_pallas.1} parent=95 // pred_check
              _
            $region102: #{att_layer_pallas.1} parent=95 // pred_check_branch
              %3930 = sbr.rel target = $region104
            $region103: #{att_layer_pallas.1} parent=95 // pred_region
              %s3932 = sdiv.u32.pop %s3919, 21
              %s3933 = srem.u32.pop %s3919, 21
              // While loop
              $region105: #{att_layer_pallas.1} parent=103 // loop_pre_header
                _
              $region106: #{att_layer_pallas.1} parent=103 // loop_header
                %s3935 = sphi 0, %s3937
                %p3936 = scmp.ge.s32.totalorder %s3935, %s3932
                %s3940 = sphi 0, %s3987
                %s3941 = sphi %s3718, %s3990
                %s3942 = sphi %s3923, %s3991
              $region107: #{att_layer_pallas.1} parent=103 // loop_header_branch
                %3939 = sbr.rel (%p3936) target = $region111
              $region108: #{att_layer_pallas.1} parent=103 // loop_body
                %v3943 = vld [vmem:[%s3941] sm:$0xff]
                %3944 = vst [vmem:[%s3942] sm:$0xff] %v3943
                %v3945 = vld [vmem:[%s3941 + $0x8] sm:$0xff]
                %3946 = vst [vmem:[%s3942 + $0x8] sm:$0xff] %v3945
                %v3947 = vld [vmem:[%s3941 + $0x10] sm:$0xff]
                %3948 = vst [vmem:[%s3942 + $0x10] sm:$0xff] %v3947
                %v3949 = vld [vmem:[%s3941 + $0x18] sm:$0xff]
                %3950 = vst [vmem:[%s3942 + $0x18] sm:$0xff] %v3949
                %v3951 = vld [vmem:[%s3941 + $0x20] sm:$0xff]
                %3952 = vst [vmem:[%s3942 + $0x20] sm:$0xff] %v3951
                %v3953 = vld [vmem:[%s3941 + $0x28] sm:$0xff]
                %3954 = vst [vmem:[%s3942 + $0x28] sm:$0xff] %v3953
                %v3955 = vld [vmem:[%s3941 + $0x30] sm:$0xff]
                %3956 = vst [vmem:[%s3942 + $0x30] sm:$0xff] %v3955
                %v3957 = vld [vmem:[%s3941 + $0x38] sm:$0xff]
                %3958 = vst [vmem:[%s3942 + $0x38] sm:$0xff] %v3957
                %v3959 = vld [vmem:[%s3941 + $0x40] sm:$0xff]
                %3960 = vst [vmem:[%s3942 + $0x40] sm:$0xff] %v3959
                %v3961 = vld [vmem:[%s3941 + $0x48] sm:$0xff]
                %3962 = vst [vmem:[%s3942 + $0x48] sm:$0xff] %v3961
                %v3963 = vld [vmem:[%s3941 + $0x50] sm:$0xff]
                %3964 = vst [vmem:[%s3942 + $0x50] sm:$0xff] %v3963
                %v3965 = vld [vmem:[%s3941 + $0x58] sm:$0xff]
                %3966 = vst [vmem:[%s3942 + $0x58] sm:$0xff] %v3965
                %v3967 = vld [vmem:[%s3941 + $0x60] sm:$0xff]
                %3968 = vst [vmem:[%s3942 + $0x60] sm:$0xff] %v3967
                %v3969 = vld [vmem:[%s3941 + $0x68] sm:$0xff]
                %3970 = vst [vmem:[%s3942 + $0x68] sm:$0xff] %v3969
                %v3971 = vld [vmem:[%s3941 + $0x70] sm:$0xff]
                %3972 = vst [vmem:[%s3942 + $0x70] sm:$0xff] %v3971
                %v3973 = vld [vmem:[%s3941 + $0x78] sm:$0xff]
                %3974 = vst [vmem:[%s3942 + $0x78] sm:$0xff] %v3973
                %v3975 = vld [vmem:[%s3941 + $0x80] sm:$0xff]
                %3976 = vst [vmem:[%s3942 + $0x80] sm:$0xff] %v3975
                %v3977 = vld [vmem:[%s3941 + $0x88] sm:$0xff]
                %3978 = vst [vmem:[%s3942 + $0x88] sm:$0xff] %v3977
                %v3979 = vld [vmem:[%s3941 + $0x90] sm:$0xff]
                %3980 = vst [vmem:[%s3942 + $0x90] sm:$0xff] %v3979
                %v3981 = vld [vmem:[%s3941 + $0x98] sm:$0xff]
                %3982 = vst [vmem:[%s3942 + $0x98] sm:$0xff] %v3981
                %v3983 = vld [vmem:[%s3941 + $0xa0] sm:$0xff]
                %3984 = vst [vmem:[%s3942 + $0xa0] sm:$0xff] %v3983
                %s3985 = sadd.s32 1, %s3940
                %p3986 = scmp.ge.s32.totalorder %s3985, %s3932
                %s3987 = scalar_select %p3986, 0, %s3985
                %s3988 = smul.u32 %s3987, 168
                %s3989 = smul.u32 %s3987, 168
                %s3990 = scalar_lea.vmem %s3718, %s3988 [#allocation3]
                %s3991 = scalar_lea.vmem %s3923, %s3989
              $region109: #{att_layer_pallas.1} parent=103 // loop_footer
                %s3937 = sadd.s32 %s3935, 1
              $region110: #{att_layer_pallas.1} parent=103 // loop_footer_branch
                %3934 = sbr.rel target = $region106
              $region111: #{att_layer_pallas.1} parent=103 // loop_exit
                _
              %s3992 = sdiv.u32.pop %s3919, 21
              %s3993 = srem.u32.pop %s3919, 21
              %s3994 = smul.u32 %s3992, 21
              %s3995 = smul.u32 8, %s3994
              %s3996 = scalar_lea.vmem %s3718, %s3995 [#allocation3]
              %s3997 = smul.u32 8, %s3994
              %s3998 = scalar_lea.vmem %s3923, %s3997
              // While loop
              $region112: #{att_layer_pallas.1} parent=103 // loop_pre_header
                _
              $region113: #{att_layer_pallas.1} parent=103 // loop_header
                %s4000 = sphi 0, %s4002
                %p4001 = scmp.ge.s32.totalorder %s4000, %s3993
                %s4005 = sphi 0, %s4012
                %s4006 = sphi %s3996, %s4015
                %s4007 = sphi %s3998, %s4016
              $region114: #{att_layer_pallas.1} parent=103 // loop_header_branch
                %4004 = sbr.rel (%p4001) target = $region118
              $region115: #{att_layer_pallas.1} parent=103 // loop_body
                %v4008 = vld [vmem:[%s4006] sm:$0xff]
                %4009 = vst [vmem:[%s4007] sm:$0xff] %v4008
                %s4010 = sadd.s32 1, %s4005
                %p4011 = scmp.ge.s32.totalorder %s4010, %s3993
                %s4012 = scalar_select %p4011, 0, %s4010
                %s4013 = smul.u32 %s4012, 8
                %s4014 = smul.u32 %s4012, 8
                %s4015 = scalar_lea.vmem %s3996, %s4013 [#allocation3]
                %s4016 = scalar_lea.vmem %s3998, %s4014
              $region116: #{att_layer_pallas.1} parent=103 // loop_footer
                %s4002 = sadd.s32 %s4000, 1
              $region117: #{att_layer_pallas.1} parent=103 // loop_footer_branch
                %3999 = sbr.rel target = $region113
              $region118: #{att_layer_pallas.1} parent=103 // loop_exit
                _
            $region104: #{att_layer_pallas.1} parent=95 // pred_fallthru
              _
          $region96: #{att_layer_pallas.1} parent=91 // pred_fallthru
            _
          %4106 = vnop
        $region92: #{att_layer_pallas.1} parent=35 // pred_fallthru
          _
      $region36: #{att_layer_pallas.1} parent=5 // pred_fallthru
        _
      %p4107 = scmp.le.s32.totalorder 2, %s12
      // Predicated region
      $region141: #{att_layer_pallas.1} parent=5 // pred_check
        %p4108 = pneg %p4107
      $region142: #{att_layer_pallas.1} parent=5 // pred_check_branch
        %4110 = sbr.rel (%p4108) target = $region144
      $region143: #{att_layer_pallas.1} parent=5 // pred_region
        %s4111 = ssub.s32 %s12, 2
        // Predicated region
        $region145: #{att_layer_pallas.1} parent=143 // pred_check
          %p4112 = pneg %p130
        $region146: #{att_layer_pallas.1} parent=143 // pred_check_branch
          %4114 = sbr.rel (%p4112) target = $region148
        $region147: #{att_layer_pallas.1} parent=143 // pred_region
          %s4115 = sand.u32 %s115, 1
          %s4116 = sand.u32 %s115, 1
          %s4117 = smul.addr %s4116, 168
          %s4118 = scalar_lea.vmem [#allocation2], %s4117
        $region148: #{att_layer_pallas.1} parent=143 // pred_fallthru
          _
        // Predicated region
        $region149: #{att_layer_pallas.1} parent=143 // pred_check
          %p4119 = pneg %p156
        $region150: #{att_layer_pallas.1} parent=143 // pred_check_branch
          %4121 = sbr.rel (%p4119) target = $region152
        $region151: #{att_layer_pallas.1} parent=143 // pred_region
          %s4122 = sand.u32 %s141, 1
          %s4123 = sand.u32 %s141, 1
          %s4124 = smul.addr %s4123, 168
          %s4125 = scalar_lea.vmem [#allocation3], %s4124
        $region152: #{att_layer_pallas.1} parent=143 // pred_fallthru
          _
      $region144: #{att_layer_pallas.1} parent=5 // pred_fallthru
        _
    $region6: #{att_layer_pallas.1} parent=1 // loop_footer
      %s16 = sadd.s32 1, %s12
    $region7: #{att_layer_pallas.1} parent=1 // loop_footer_branch
      %11 = sbr.rel target = $region3
    $region8: #{att_layer_pallas.1} parent=1 // loop_exit
      _

</llo_original>
